<compile_context>
chip_gen: v5e
topology: v5e:2x2
jax: 0.10.0
libtpu: 0.0.40
codegen_flags: <defaults>
</compile_context>

<pallas_src>
import jax
import jax.numpy as jnp
from jax import lax
from jax.experimental import pallas as pl
from jax.experimental.pallas import tpu as pltpu

EPS = 1e-5
NEG_SLOPE = 0.3


def _leaky(y):
    return jnp.where(y >= 0, y, NEG_SLOPE * y)


def _sigmoid(y):
    # numerically stable, uses the EUP tanh
    return 0.5 * (jnp.tanh(0.5 * y) + 1.0)


# ---------------------------------------------------------------------------
# The single fused kernel
# ---------------------------------------------------------------------------
def _disc_kernel(p1e_ref, w1e_ref, w2_ref, b2_ref, w3s_ref, b3_ref,
                 w4_ref, b4_ref, o_ref, y2_scr):
    S2 = w3s_ref.shape[0]                  # number of conv2 output positions
    N = p1e_ref.shape[0] // S2             # batch

    # layer_d0 (expanded): one GEMM produces conv2's im2col patches directly.
    # Conv1 bias + conv2 zero padding are handled by the homogeneous column.
    p2 = jnp.dot(p1e_ref[...], w1e_ref[...], preferred_element_type=jnp.float32)
    p2 = _leaky(p2)                                             # (S2*N, 512) f32

    # layer_d1: conv2-as-GEMM + bias + BatchNorm2d (single-pass batch stats)
    y2 = jnp.dot(p2.astype(jnp.bfloat16), w2_ref[...],
                 preferred_element_type=jnp.float32)
    y2 = y2 + b2_ref[...]                                       # (S2*N, 128) f32
    m = y2.shape[0]
    s1 = jnp.sum(y2, axis=0, keepdims=True)
    s2 = jnp.sum(y2 * y2, axis=0, keepdims=True)
    mean = s1 * (1.0 / m)
    var = s2 * (1.0 / m) - mean * mean
    y2_scr[...] = _leaky((y2 - mean) * lax.rsqrt(var + EPS))    # stays in VMEM

    # layer_d2: Linear(2048, 512) as a contraction over the S2 spatial blocks
    # (rows ordered (h2, w2, n); W3 pre-split to (S2, 128, 512)) -- no flatten.
    def block(s):
        blk = y2_scr[s * N:(s + 1) * N, :].astype(jnp.bfloat16)
        return jnp.dot(blk, w3s_ref[s], preferred_element_type=jnp.float32)

    h = block(0)
    for s in range(1, S2):
        h = h + block(s)
    h = h + b3_ref[...]                                         # (N, 512) f32

    # BatchNorm1d (single-pass batch stats) + LeakyReLU
    s1 = jnp.sum(h, axis=0, keepdims=True)
    s2 = jnp.sum(h * h, axis=0, keepdims=True)
    mean = s1 * (1.0 / N)
    var = s2 * (1.0 / N) - mean * mean
    h = _leaky((h - mean) * lax.rsqrt(var + EPS))

    # layer_d3: Linear(512, OUT) + Sigmoid.  OUT == 1 -> VPU multiply + lane
    # reduce (keeps the tiny result off the MXU).
    if w4_ref.shape[0] == 1:
        z = jnp.sum(h * w4_ref[...], axis=1, keepdims=True)
    else:  # general output_dim (not exercised here)
        z = lax.dot_general(h.astype(jnp.bfloat16),
                            w4_ref[...].astype(jnp.bfloat16),
                            (((1,), (1,)), ((), ())),
                            preferred_element_type=jnp.float32)
    o_ref[...] = _sigmoid(z + b4_ref[...])


def fused_forward(p1e, w1e, w2t, b2r, w3s, b3r, w4r, b4r, *, batch):
    out_dim = w4r.shape[0]
    c2 = w2t.shape[1]

    def full(shape):
        return pl.BlockSpec(shape, lambda i, _s=len(shape): (0,) * _s)

    return pl.pallas_call(
        _disc_kernel,
        out_shape=jax.ShapeDtypeStruct((batch, out_dim), jnp.float32),
        grid=(1,),
        in_specs=[full(p1e.shape), full(w1e.shape), full(w2t.shape),
                  full(b2r.shape), full(w3s.shape), full(b3r.shape),
                  full(w4r.shape), full(b4r.shape)],
        out_specs=full((batch, out_dim)),
        scratch_shapes=[pltpu.VMEM((p1e.shape[0], c2), jnp.float32)],
    )(p1e, w1e, w2t, b2r, w3s, b3r, w4r, b4r)


# ---------------------------------------------------------------------------
# Wrapper glue: "patches-of-patches" built once from the tiny raw input (XLA)
# ---------------------------------------------------------------------------
def _tap_slabs(xp, ho, wo, k=4, s=2):
    """All k*k strided (kh, kw) slabs of a padded NHWC tensor, new tap axis 3."""
    n, _, _, c = xp.shape
    slabs = []
    for kh in range(k):
        for kw in range(k):
            slabs.append(lax.slice(
                xp,
                (0, kh, kw, 0),
                (n, kh + s * (ho - 1) + 1, kw + s * (wo - 1) + 1, c),
                (1, s, s, 1)))                       # (n, ho, wo, c)
    return jnp.stack(slabs, axis=3)                  # (n, ho, wo, k*k, c)


def build_p1e(x_nchw):
    """Rows (h2, w2, n); cols (kh, kw, [conv1 4x4*C0 patch, valid/bias flag])."""
    n, c0, h, w = x_nchw.shape
    x = jnp.transpose(x_nchw, (0, 2, 3, 1)).astype(jnp.float32)   # NHWC
    ho1, wo1 = h // 2, w // 2
    ho2, wo2 = ho1 // 2, wo1 // 2

    xp = jnp.pad(x, ((0, 0), (1, 1), (1, 1), (0, 0)))
    q = _tap_slabs(xp, ho1, wo1).reshape(n, ho1, wo1, 16 * c0)    # conv1 patches
    ones = jnp.ones((n, ho1, wo1, 1), q.dtype)
    qe = jnp.concatenate([q, ones], axis=-1)                      # homogeneous col
    qep = jnp.pad(qe, ((0, 0), (1, 1), (1, 1), (0, 0)))           # conv2 padding

    p = _tap_slabs(qep, ho2, wo2)                                 # (n,ho2,wo2,16,17C0-ish)
    p = jnp.transpose(p, (1, 2, 0, 3, 4)).reshape(
        ho2 * wo2 * n, 16 * (16 * c0 + 1))
    return p.astype(jnp.bfloat16)


# ---------------------------------------------------------------------------
# One-time parameter prep
# ---------------------------------------------------------------------------
def prepare_params(params, out_h, out_w):
    W1, b1, W2, b2, W3, b3, W4, b4 = params
    c0 = W1.shape[1]
    k1 = 4 * 4 * c0

    # conv1 weight as (k1, 32), rows (kh, kw, cin); append bias row -> (k1+1, 32)
    W1t = jnp.transpose(W1, (2, 3, 1, 0)).reshape(k1, 32)
    B1 = jnp.concatenate([W1t, b1.reshape(1, 32)], axis=0)
    # block-diagonal expansion over the 16 conv2 taps: (16*(k1+1), 512)
    W1e = jnp.kron(jnp.eye(16, dtype=B1.dtype), B1).astype(jnp.bfloat16)

    # conv2 weight as (512, 128), rows (kh, kw, cin)
    W2t = jnp.transpose(W2, (2, 3, 1, 0)).reshape(4 * 4 * 32, 128).astype(jnp.bfloat16)
    b2r = b2.reshape(1, -1).astype(jnp.float32)

    # layer_d2 weight split per spatial block: PyTorch flatten is (c, h, w),
    # so column c*S2 + s -> W3s[s, c, :]
    s2 = out_h * out_w
    W3s = jnp.transpose(W3.reshape(512, 128, s2), (2, 1, 0)).astype(jnp.bfloat16)
    b3r = b3.reshape(1, -1).astype(jnp.float32)

    W4r = W4.astype(jnp.float32)                     # (OUT, 512), used row-wise
    b4r = b4.reshape(1, -1).astype(jnp.float32)
    return W1e, W2t, b2r, W3s, b3r, W4r, b4r


# ---------------------------------------------------------------------------
# Discriminator forward (single Pallas dispatch)
# ---------------------------------------------------------------------------
def discriminator_forward(x_nchw, prep):
    W1e, W2t, b2r, W3s, b3r, W4r, b4r = prep
    p1e = build_p1e(x_nchw)
    return fused_forward(p1e, W1e, W2t, b2r, W3s, b3r, W4r, b4r,
                         batch=x_nchw.shape[0])


# ---------------------------------------------------------------------------
# Pure-JAX reference (PyTorch NCHW semantics; mirrors the bf16-operand /
# f32-accumulate precision choices of the Pallas path)
# ---------------------------------------------------------------------------
def reference_forward(x, params):
    W1, b1, W2, b2, W3, b3, W4, b4 = params
    dn = ("NCHW", "OIHW", "NCHW")
    n = x.shape[0]
    bf = jnp.bfloat16

    y = lax.conv_general_dilated(x.astype(bf), W1.astype(bf), (2, 2),
                                 ((1, 1), (1, 1)), dimension_numbers=dn,
                                 preferred_element_type=jnp.float32)
    y = y + b1.reshape(1, -1, 1, 1)
    y = _leaky(y).astype(bf)

    y = lax.conv_general_dilated(y, W2.astype(bf), (2, 2),
                                 ((1, 1), (1, 1)), dimension_numbers=dn,
                                 preferred_element_type=jnp.float32)
    y = y + b2.reshape(1, -1, 1, 1)
    m = y.mean(axis=(0, 2, 3), keepdims=True)
    v = ((y - m) ** 2).mean(axis=(0, 2, 3), keepdims=True)
    y = (y - m) * lax.rsqrt(v + EPS)
    y = _leaky(y).astype(bf)

    z = jnp.dot(y.reshape(n, -1), W3.T.astype(bf),
                preferred_element_type=jnp.float32) + b3
    m = z.mean(axis=0, keepdims=True)
    v = ((z - m) ** 2).mean(axis=0, keepdims=True)
    z = (z - m) * lax.rsqrt(v + EPS)
    z = _leaky(z)

    o = jnp.dot(z, W4.T, preferred_element_type=jnp.float32) + b4
    return _sigmoid(o)


# ---------------------------------------------------------------------------
if __name__ == "__main__":
    # Small config consistent with the module: input_dim=1, output_dim=1,
    # input_ImageSize=16, batch=2.
    INPUT_DIM, OUTPUT_DIM, IMG, BATCH = 1, 1, 16, 2
    FLAT = 128 * (IMG // 4) * (IMG // 4)   # 2048

    key = jax.random.PRNGKey(0)
    kx, k1, k2, k3, k4 = jax.random.split(key, 5)

    # PyTorch init: conv/linear weights ~ N(0, 0.02), biases = 0.
    W1 = 0.02 * jax.random.normal(k1, (32, INPUT_DIM, 4, 4), jnp.float32)
    b1 = jnp.zeros((32,), jnp.float32)
    W2 = 0.02 * jax.random.normal(k2, (128, 32, 4, 4), jnp.float32)
    b2 = jnp.zeros((128,), jnp.float32)
    W3 = 0.02 * jax.random.normal(k3, (512, FLAT), jnp.float32)
    b3 = jnp.zeros((512,), jnp.float32)
    W4 = 0.02 * jax.random.normal(k4, (OUTPUT_DIM, 512), jnp.float32)
    b4 = jnp.zeros((OUTPUT_DIM,), jnp.float32)
    params = (W1, b1, W2, b2, W3, b3, W4, b4)

    x = jax.random.normal(kx, (BATCH, INPUT_DIM, IMG, IMG), jnp.float32)

    prep = prepare_params(params, IMG // 4, IMG // 4)

    fwd = jax.jit(discriminator_forward)
    out = jax.block_until_ready(fwd(x, prep))
    ref = jax.block_until_ready(jax.jit(reference_forward)(x, params))

    assert out.shape == (BATCH, OUTPUT_DIM), out.shape
    assert jnp.allclose(out, ref, rtol=1e-2, atol=2e-3), (out, ref)
    print("KERNEL_OK")
</pallas_src>

<mosaic_0001>
module attributes {stable_mosaic.version = 11 : i64} {
  func.func @_disc_kernel(%arg0: i32, %arg1: memref<32x272xbf16, #tpu.memory_space<vmem>>, %arg2: memref<272x512xbf16, #tpu.memory_space<vmem>>, %arg3: memref<512x128xbf16, #tpu.memory_space<vmem>>, %arg4: memref<1x128xf32, #tpu.memory_space<vmem>>, %arg5: memref<16x128x512xbf16, #tpu.memory_space<vmem>>, %arg6: memref<1x512xf32, #tpu.memory_space<vmem>>, %arg7: memref<1x512xf32, #tpu.memory_space<vmem>>, %arg8: memref<1x1xf32, #tpu.memory_space<vmem>>, %arg9: memref<2x1xf32, #tpu.memory_space<vmem>>, %arg10: memref<32x128xf32, #tpu.memory_space<vmem>>) attributes {dimension_semantics = [#tpu.dimension_semantics<arbitrary>], iteration_bounds = array<i64: 1>, scalar_prefetch = 0 : i64, scratch_operands = 1 : i64, tpu.core_type = #tpu.core_type<tc>, window_params = [{pipeline_mode = #tpu.pipeline_mode<synchronous>, transform_indices = @transform_0, window_bounds = array<i64: 32, 272>}, {pipeline_mode = #tpu.pipeline_mode<synchronous>, transform_indices = @transform_1, window_bounds = array<i64: 272, 512>}, {pipeline_mode = #tpu.pipeline_mode<synchronous>, transform_indices = @transform_2, window_bounds = array<i64: 512, 128>}, {pipeline_mode = #tpu.pipeline_mode<synchronous>, transform_indices = @transform_3, window_bounds = array<i64: 1, 128>}, {pipeline_mode = #tpu.pipeline_mode<synchronous>, transform_indices = @transform_4, window_bounds = array<i64: 16, 128, 512>}, {pipeline_mode = #tpu.pipeline_mode<synchronous>, transform_indices = @transform_5, window_bounds = array<i64: 1, 512>}, {pipeline_mode = #tpu.pipeline_mode<synchronous>, transform_indices = @transform_6, window_bounds = array<i64: 1, 512>}, {pipeline_mode = #tpu.pipeline_mode<synchronous>, transform_indices = @transform_7, window_bounds = array<i64: 1, 1>}, {pipeline_mode = #tpu.pipeline_mode<synchronous>, transform_indices = @transform_8, window_bounds = array<i64: 2, 1>}]} {
    %c0 = arith.constant 0 : index
    %c0_0 = arith.constant 0 : index
    %0 = vector.load %arg1[%c0, %c0_0] : memref<32x272xbf16, #tpu.memory_space<vmem>>, vector<32x272xbf16>
    %c0_1 = arith.constant 0 : index
    %c0_2 = arith.constant 0 : index
    %1 = vector.load %arg2[%c0_1, %c0_2] : memref<272x512xbf16, #tpu.memory_space<vmem>>, vector<272x512xbf16>
    %cst = arith.constant dense<0.000000e+00> : vector<32x512xf32>
    %2 = tpu.matmul %0, %1, %cst {dimension_numbers = #tpu.dot_dimension_numbers<[1], [0], [0], [1], [0, 0, 1, 1], [], []>} : vector<32x272xbf16>, vector<272x512xbf16>, vector<32x512xf32> -> vector<32x512xf32>
    %cst_3 = arith.constant 0.000000e+00 : f32
    %3 = vector.broadcast %cst_3 : f32 to vector<32x512xf32>
    %4 = arith.cmpf oge, %2, %3 : vector<32x512xf32>
    %cst_4 = arith.constant 3.000000e-01 : f32
    %5 = vector.broadcast %cst_4 : f32 to vector<32x512xf32>
    %6 = arith.mulf %5, %2 : vector<32x512xf32>
    %7 = arith.select %4, %2, %6 : vector<32x512xi1>, vector<32x512xf32>
    %8 = arith.truncf %7 : vector<32x512xf32> to vector<32x512xbf16>
    %c0_5 = arith.constant 0 : index
    %c0_6 = arith.constant 0 : index
    %9 = vector.load %arg3[%c0_5, %c0_6] : memref<512x128xbf16, #tpu.memory_space<vmem>>, vector<512x128xbf16>
    %cst_7 = arith.constant dense<0.000000e+00> : vector<32x128xf32>
    %10 = tpu.matmul %8, %9, %cst_7 {dimension_numbers = #tpu.dot_dimension_numbers<[1], [0], [0], [1], [0, 0, 1, 1], [], []>} : vector<32x512xbf16>, vector<512x128xbf16>, vector<32x128xf32> -> vector<32x128xf32>
    %c0_8 = arith.constant 0 : index
    %c0_9 = arith.constant 0 : index
    %11 = vector.load %arg4[%c0_8, %c0_9] : memref<1x128xf32, #tpu.memory_space<vmem>>, vector<1x128xf32>
    %12 = vector.broadcast %11 : vector<1x128xf32> to vector<32x128xf32>
    %13 = arith.addf %10, %12 : vector<32x128xf32>
    %cst_10 = arith.constant dense<0.000000e+00> : vector<128xf32>
    %14 = vector.multi_reduction <add>, %13, %cst_10 [0] : vector<32x128xf32> to vector<128xf32>
    %15 = vector.shape_cast %14 : vector<128xf32> to vector<1x128xf32>
    %16 = arith.mulf %13, %13 : vector<32x128xf32>
    %cst_11 = arith.constant dense<0.000000e+00> : vector<128xf32>
    %17 = vector.multi_reduction <add>, %16, %cst_11 [0] : vector<32x128xf32> to vector<128xf32>
    %18 = vector.shape_cast %17 : vector<128xf32> to vector<1x128xf32>
    %cst_12 = arith.constant 3.125000e-02 : f32
    %19 = vector.broadcast %cst_12 : f32 to vector<1x128xf32>
    %20 = arith.mulf %15, %19 : vector<1x128xf32>
    %cst_13 = arith.constant 3.125000e-02 : f32
    %21 = vector.broadcast %cst_13 : f32 to vector<1x128xf32>
    %22 = arith.mulf %18, %21 : vector<1x128xf32>
    %23 = arith.mulf %20, %20 : vector<1x128xf32>
    %24 = arith.subf %22, %23 : vector<1x128xf32>
    %25 = vector.broadcast %20 : vector<1x128xf32> to vector<32x128xf32>
    %26 = arith.subf %13, %25 : vector<32x128xf32>
    %cst_14 = arith.constant 9.99999974E-6 : f32
    %27 = vector.broadcast %cst_14 : f32 to vector<1x128xf32>
    %28 = arith.addf %24, %27 : vector<1x128xf32>
    %29 = math.rsqrt %28 : vector<1x128xf32>
    %30 = vector.broadcast %29 : vector<1x128xf32> to vector<32x128xf32>
    %31 = arith.mulf %26, %30 : vector<32x128xf32>
    %cst_15 = arith.constant 0.000000e+00 : f32
    %32 = vector.broadcast %cst_15 : f32 to vector<32x128xf32>
    %33 = arith.cmpf oge, %31, %32 : vector<32x128xf32>
    %cst_16 = arith.constant 3.000000e-01 : f32
    %34 = vector.broadcast %cst_16 : f32 to vector<32x128xf32>
    %35 = arith.mulf %34, %31 : vector<32x128xf32>
    %36 = arith.select %33, %31, %35 : vector<32x128xi1>, vector<32x128xf32>
    %c0_17 = arith.constant 0 : index
    %c0_18 = arith.constant 0 : index
    %37 = vector.load %arg10[%c0_17, %c0_18] : memref<32x128xf32, #tpu.memory_space<vmem>>, vector<32x128xf32>
    tpu.vector_store %arg10[%c0_17, %c0_18], %36 {strides = array<i32>} : memref<32x128xf32, #tpu.memory_space<vmem>>, vector<32x128xf32>,
    %c0_19 = arith.constant 0 : index
    %c0_20 = arith.constant 0 : index
    %38 = vector.load %arg10[%c0_19, %c0_20] : memref<32x128xf32, #tpu.memory_space<vmem>>, vector<2x128xf32>
    %39 = arith.truncf %38 : vector<2x128xf32> to vector<2x128xbf16>
    %c0_21 = arith.constant 0 : index
    %c0_22 = arith.constant 0 : index
    %c0_23 = arith.constant 0 : index
    %40 = vector.load %arg5[%c0_21, %c0_22, %c0_23] : memref<16x128x512xbf16, #tpu.memory_space<vmem>>, vector<1x128x512xbf16>
    %41 = vector.shape_cast %40 : vector<1x128x512xbf16> to vector<128x512xbf16>
    %cst_24 = arith.constant dense<0.000000e+00> : vector<2x512xf32>
    %42 = tpu.matmul %39, %41, %cst_24 {dimension_numbers = #tpu.dot_dimension_numbers<[1], [0], [0], [1], [0, 0, 1, 1], [], []>} : vector<2x128xbf16>, vector<128x512xbf16>, vector<2x512xf32> -> vector<2x512xf32>
    %c2 = arith.constant 2 : index
    %c0_25 = arith.constant 0 : index
    %43 = vector.load %arg10[%c2, %c0_25] : memref<32x128xf32, #tpu.memory_space<vmem>>, vector<2x128xf32>
    %44 = arith.truncf %43 : vector<2x128xf32> to vector<2x128xbf16>
    %c1 = arith.constant 1 : index
    %c0_26 = arith.constant 0 : index
    %c0_27 = arith.constant 0 : index
    %45 = vector.load %arg5[%c1, %c0_26, %c0_27] : memref<16x128x512xbf16, #tpu.memory_space<vmem>>, vector<1x128x512xbf16>
    %46 = vector.shape_cast %45 : vector<1x128x512xbf16> to vector<128x512xbf16>
    %cst_28 = arith.constant dense<0.000000e+00> : vector<2x512xf32>
    %47 = tpu.matmul %44, %46, %cst_28 {dimension_numbers = #tpu.dot_dimension_numbers<[1], [0], [0], [1], [0, 0, 1, 1], [], []>} : vector<2x128xbf16>, vector<128x512xbf16>, vector<2x512xf32> -> vector<2x512xf32>
    %48 = arith.addf %42, %47 : vector<2x512xf32>
    %c4 = arith.constant 4 : index
    %c0_29 = arith.constant 0 : index
    %49 = vector.load %arg10[%c4, %c0_29] : memref<32x128xf32, #tpu.memory_space<vmem>>, vector<2x128xf32>
    %50 = arith.truncf %49 : vector<2x128xf32> to vector<2x128xbf16>
    %c2_30 = arith.constant 2 : index
    %c0_31 = arith.constant 0 : index
    %c0_32 = arith.constant 0 : index
    %51 = vector.load %arg5[%c2_30, %c0_31, %c0_32] : memref<16x128x512xbf16, #tpu.memory_space<vmem>>, vector<1x128x512xbf16>
    %52 = vector.shape_cast %51 : vector<1x128x512xbf16> to vector<128x512xbf16>
    %cst_33 = arith.constant dense<0.000000e+00> : vector<2x512xf32>
    %53 = tpu.matmul %50, %52, %cst_33 {dimension_numbers = #tpu.dot_dimension_numbers<[1], [0], [0], [1], [0, 0, 1, 1], [], []>} : vector<2x128xbf16>, vector<128x512xbf16>, vector<2x512xf32> -> vector<2x512xf32>
    %54 = arith.addf %48, %53 : vector<2x512xf32>
    %c6 = arith.constant 6 : index
    %c0_34 = arith.constant 0 : index
    %55 = vector.load %arg10[%c6, %c0_34] : memref<32x128xf32, #tpu.memory_space<vmem>>, vector<2x128xf32>
    %56 = arith.truncf %55 : vector<2x128xf32> to vector<2x128xbf16>
    %c3 = arith.constant 3 : index
    %c0_35 = arith.constant 0 : index
    %c0_36 = arith.constant 0 : index
    %57 = vector.load %arg5[%c3, %c0_35, %c0_36] : memref<16x128x512xbf16, #tpu.memory_space<vmem>>, vector<1x128x512xbf16>
    %58 = vector.shape_cast %57 : vector<1x128x512xbf16> to vector<128x512xbf16>
    %cst_37 = arith.constant dense<0.000000e+00> : vector<2x512xf32>
    %59 = tpu.matmul %56, %58, %cst_37 {dimension_numbers = #tpu.dot_dimension_numbers<[1], [0], [0], [1], [0, 0, 1, 1], [], []>} : vector<2x128xbf16>, vector<128x512xbf16>, vector<2x512xf32> -> vector<2x512xf32>
    %60 = arith.addf %54, %59 : vector<2x512xf32>
    %c8 = arith.constant 8 : index
    %c0_38 = arith.constant 0 : index
    %61 = vector.load %arg10[%c8, %c0_38] : memref<32x128xf32, #tpu.memory_space<vmem>>, vector<2x128xf32>
    %62 = arith.truncf %61 : vector<2x128xf32> to vector<2x128xbf16>
    %c4_39 = arith.constant 4 : index
    %c0_40 = arith.constant 0 : index
    %c0_41 = arith.constant 0 : index
    %63 = vector.load %arg5[%c4_39, %c0_40, %c0_41] : memref<16x128x512xbf16, #tpu.memory_space<vmem>>, vector<1x128x512xbf16>
    %64 = vector.shape_cast %63 : vector<1x128x512xbf16> to vector<128x512xbf16>
    %cst_42 = arith.constant dense<0.000000e+00> : vector<2x512xf32>
    %65 = tpu.matmul %62, %64, %cst_42 {dimension_numbers = #tpu.dot_dimension_numbers<[1], [0], [0], [1], [0, 0, 1, 1], [], []>} : vector<2x128xbf16>, vector<128x512xbf16>, vector<2x512xf32> -> vector<2x512xf32>
    %66 = arith.addf %60, %65 : vector<2x512xf32>
    %c10 = arith.constant 10 : index
    %c0_43 = arith.constant 0 : index
    %67 = vector.load %arg10[%c10, %c0_43] : memref<32x128xf32, #tpu.memory_space<vmem>>, vector<2x128xf32>
    %68 = arith.truncf %67 : vector<2x128xf32> to vector<2x128xbf16>
    %c5 = arith.constant 5 : index
    %c0_44 = arith.constant 0 : index
    %c0_45 = arith.constant 0 : index
    %69 = vector.load %arg5[%c5, %c0_44, %c0_45] : memref<16x128x512xbf16, #tpu.memory_space<vmem>>, vector<1x128x512xbf16>
    %70 = vector.shape_cast %69 : vector<1x128x512xbf16> to vector<128x512xbf16>
    %cst_46 = arith.constant dense<0.000000e+00> : vector<2x512xf32>
    %71 = tpu.matmul %68, %70, %cst_46 {dimension_numbers = #tpu.dot_dimension_numbers<[1], [0], [0], [1], [0, 0, 1, 1], [], []>} : vector<2x128xbf16>, vector<128x512xbf16>, vector<2x512xf32> -> vector<2x512xf32>
    %72 = arith.addf %66, %71 : vector<2x512xf32>
    %c12 = arith.constant 12 : index
    %c0_47 = arith.constant 0 : index
    %73 = vector.load %arg10[%c12, %c0_47] : memref<32x128xf32, #tpu.memory_space<vmem>>, vector<2x128xf32>
    %74 = arith.truncf %73 : vector<2x128xf32> to vector<2x128xbf16>
    %c6_48 = arith.constant 6 : index
    %c0_49 = arith.constant 0 : index
    %c0_50 = arith.constant 0 : index
    %75 = vector.load %arg5[%c6_48, %c0_49, %c0_50] : memref<16x128x512xbf16, #tpu.memory_space<vmem>>, vector<1x128x512xbf16>
    %76 = vector.shape_cast %75 : vector<1x128x512xbf16> to vector<128x512xbf16>
    %cst_51 = arith.constant dense<0.000000e+00> : vector<2x512xf32>
    %77 = tpu.matmul %74, %76, %cst_51 {dimension_numbers = #tpu.dot_dimension_numbers<[1], [0], [0], [1], [0, 0, 1, 1], [], []>} : vector<2x128xbf16>, vector<128x512xbf16>, vector<2x512xf32> -> vector<2x512xf32>
    %78 = arith.addf %72, %77 : vector<2x512xf32>
    %c14 = arith.constant 14 : index
    %c0_52 = arith.constant 0 : index
    %79 = vector.load %arg10[%c14, %c0_52] : memref<32x128xf32, #tpu.memory_space<vmem>>, vector<2x128xf32>
    %80 = arith.truncf %79 : vector<2x128xf32> to vector<2x128xbf16>
    %c7 = arith.constant 7 : index
    %c0_53 = arith.constant 0 : index
    %c0_54 = arith.constant 0 : index
    %81 = vector.load %arg5[%c7, %c0_53, %c0_54] : memref<16x128x512xbf16, #tpu.memory_space<vmem>>, vector<1x128x512xbf16>
    %82 = vector.shape_cast %81 : vector<1x128x512xbf16> to vector<128x512xbf16>
    %cst_55 = arith.constant dense<0.000000e+00> : vector<2x512xf32>
    %83 = tpu.matmul %80, %82, %cst_55 {dimension_numbers = #tpu.dot_dimension_numbers<[1], [0], [0], [1], [0, 0, 1, 1], [], []>} : vector<2x128xbf16>, vector<128x512xbf16>, vector<2x512xf32> -> vector<2x512xf32>
    %84 = arith.addf %78, %83 : vector<2x512xf32>
    %c16 = arith.constant 16 : index
    %c0_56 = arith.constant 0 : index
    %85 = vector.load %arg10[%c16, %c0_56] : memref<32x128xf32, #tpu.memory_space<vmem>>, vector<2x128xf32>
    %86 = arith.truncf %85 : vector<2x128xf32> to vector<2x128xbf16>
    %c8_57 = arith.constant 8 : index
    %c0_58 = arith.constant 0 : index
    %c0_59 = arith.constant 0 : index
    %87 = vector.load %arg5[%c8_57, %c0_58, %c0_59] : memref<16x128x512xbf16, #tpu.memory_space<vmem>>, vector<1x128x512xbf16>
    %88 = vector.shape_cast %87 : vector<1x128x512xbf16> to vector<128x512xbf16>
    %cst_60 = arith.constant dense<0.000000e+00> : vector<2x512xf32>
    %89 = tpu.matmul %86, %88, %cst_60 {dimension_numbers = #tpu.dot_dimension_numbers<[1], [0], [0], [1], [0, 0, 1, 1], [], []>} : vector<2x128xbf16>, vector<128x512xbf16>, vector<2x512xf32> -> vector<2x512xf32>
    %90 = arith.addf %84, %89 : vector<2x512xf32>
    %c18 = arith.constant 18 : index
    %c0_61 = arith.constant 0 : index
    %91 = vector.load %arg10[%c18, %c0_61] : memref<32x128xf32, #tpu.memory_space<vmem>>, vector<2x128xf32>
    %92 = arith.truncf %91 : vector<2x128xf32> to vector<2x128xbf16>
    %c9 = arith.constant 9 : index
    %c0_62 = arith.constant 0 : index
    %c0_63 = arith.constant 0 : index
    %93 = vector.load %arg5[%c9, %c0_62, %c0_63] : memref<16x128x512xbf16, #tpu.memory_space<vmem>>, vector<1x128x512xbf16>
    %94 = vector.shape_cast %93 : vector<1x128x512xbf16> to vector<128x512xbf16>
    %cst_64 = arith.constant dense<0.000000e+00> : vector<2x512xf32>
    %95 = tpu.matmul %92, %94, %cst_64 {dimension_numbers = #tpu.dot_dimension_numbers<[1], [0], [0], [1], [0, 0, 1, 1], [], []>} : vector<2x128xbf16>, vector<128x512xbf16>, vector<2x512xf32> -> vector<2x512xf32>
    %96 = arith.addf %90, %95 : vector<2x512xf32>
    %c20 = arith.constant 20 : index
    %c0_65 = arith.constant 0 : index
    %97 = vector.load %arg10[%c20, %c0_65] : memref<32x128xf32, #tpu.memory_space<vmem>>, vector<2x128xf32>
    %98 = arith.truncf %97 : vector<2x128xf32> to vector<2x128xbf16>
    %c10_66 = arith.constant 10 : index
    %c0_67 = arith.constant 0 : index
    %c0_68 = arith.constant 0 : index
    %99 = vector.load %arg5[%c10_66, %c0_67, %c0_68] : memref<16x128x512xbf16, #tpu.memory_space<vmem>>, vector<1x128x512xbf16>
    %100 = vector.shape_cast %99 : vector<1x128x512xbf16> to vector<128x512xbf16>
    %cst_69 = arith.constant dense<0.000000e+00> : vector<2x512xf32>
    %101 = tpu.matmul %98, %100, %cst_69 {dimension_numbers = #tpu.dot_dimension_numbers<[1], [0], [0], [1], [0, 0, 1, 1], [], []>} : vector<2x128xbf16>, vector<128x512xbf16>, vector<2x512xf32> -> vector<2x512xf32>
    %102 = arith.addf %96, %101 : vector<2x512xf32>
    %c22 = arith.constant 22 : index
    %c0_70 = arith.constant 0 : index
    %103 = vector.load %arg10[%c22, %c0_70] : memref<32x128xf32, #tpu.memory_space<vmem>>, vector<2x128xf32>
    %104 = arith.truncf %103 : vector<2x128xf32> to vector<2x128xbf16>
    %c11 = arith.constant 11 : index
    %c0_71 = arith.constant 0 : index
    %c0_72 = arith.constant 0 : index
    %105 = vector.load %arg5[%c11, %c0_71, %c0_72] : memref<16x128x512xbf16, #tpu.memory_space<vmem>>, vector<1x128x512xbf16>
    %106 = vector.shape_cast %105 : vector<1x128x512xbf16> to vector<128x512xbf16>
    %cst_73 = arith.constant dense<0.000000e+00> : vector<2x512xf32>
    %107 = tpu.matmul %104, %106, %cst_73 {dimension_numbers = #tpu.dot_dimension_numbers<[1], [0], [0], [1], [0, 0, 1, 1], [], []>} : vector<2x128xbf16>, vector<128x512xbf16>, vector<2x512xf32> -> vector<2x512xf32>
    %108 = arith.addf %102, %107 : vector<2x512xf32>
    %c24 = arith.constant 24 : index
    %c0_74 = arith.constant 0 : index
    %109 = vector.load %arg10[%c24, %c0_74] : memref<32x128xf32, #tpu.memory_space<vmem>>, vector<2x128xf32>
    %110 = arith.truncf %109 : vector<2x128xf32> to vector<2x128xbf16>
    %c12_75 = arith.constant 12 : index
    %c0_76 = arith.constant 0 : index
    %c0_77 = arith.constant 0 : index
    %111 = vector.load %arg5[%c12_75, %c0_76, %c0_77] : memref<16x128x512xbf16, #tpu.memory_space<vmem>>, vector<1x128x512xbf16>
    %112 = vector.shape_cast %111 : vector<1x128x512xbf16> to vector<128x512xbf16>
    %cst_78 = arith.constant dense<0.000000e+00> : vector<2x512xf32>
    %113 = tpu.matmul %110, %112, %cst_78 {dimension_numbers = #tpu.dot_dimension_numbers<[1], [0], [0], [1], [0, 0, 1, 1], [], []>} : vector<2x128xbf16>, vector<128x512xbf16>, vector<2x512xf32> -> vector<2x512xf32>
    %114 = arith.addf %108, %113 : vector<2x512xf32>
    %c26 = arith.constant 26 : index
    %c0_79 = arith.constant 0 : index
    %115 = vector.load %arg10[%c26, %c0_79] : memref<32x128xf32, #tpu.memory_space<vmem>>, vector<2x128xf32>
    %116 = arith.truncf %115 : vector<2x128xf32> to vector<2x128xbf16>
    %c13 = arith.constant 13 : index
    %c0_80 = arith.constant 0 : index
    %c0_81 = arith.constant 0 : index
    %117 = vector.load %arg5[%c13, %c0_80, %c0_81] : memref<16x128x512xbf16, #tpu.memory_space<vmem>>, vector<1x128x512xbf16>
    %118 = vector.shape_cast %117 : vector<1x128x512xbf16> to vector<128x512xbf16>
    %cst_82 = arith.constant dense<0.000000e+00> : vector<2x512xf32>
    %119 = tpu.matmul %116, %118, %cst_82 {dimension_numbers = #tpu.dot_dimension_numbers<[1], [0], [0], [1], [0, 0, 1, 1], [], []>} : vector<2x128xbf16>, vector<128x512xbf16>, vector<2x512xf32> -> vector<2x512xf32>
    %120 = arith.addf %114, %119 : vector<2x512xf32>
    %c28 = arith.constant 28 : index
    %c0_83 = arith.constant 0 : index
    %121 = vector.load %arg10[%c28, %c0_83] : memref<32x128xf32, #tpu.memory_space<vmem>>, vector<2x128xf32>
    %122 = arith.truncf %121 : vector<2x128xf32> to vector<2x128xbf16>
    %c14_84 = arith.constant 14 : index
    %c0_85 = arith.constant 0 : index
    %c0_86 = arith.constant 0 : index
    %123 = vector.load %arg5[%c14_84, %c0_85, %c0_86] : memref<16x128x512xbf16, #tpu.memory_space<vmem>>, vector<1x128x512xbf16>
    %124 = vector.shape_cast %123 : vector<1x128x512xbf16> to vector<128x512xbf16>
    %cst_87 = arith.constant dense<0.000000e+00> : vector<2x512xf32>
    %125 = tpu.matmul %122, %124, %cst_87 {dimension_numbers = #tpu.dot_dimension_numbers<[1], [0], [0], [1], [0, 0, 1, 1], [], []>} : vector<2x128xbf16>, vector<128x512xbf16>, vector<2x512xf32> -> vector<2x512xf32>
    %126 = arith.addf %120, %125 : vector<2x512xf32>
    %c30 = arith.constant 30 : index
    %c0_88 = arith.constant 0 : index
    %127 = vector.load %arg10[%c30, %c0_88] : memref<32x128xf32, #tpu.memory_space<vmem>>, vector<2x128xf32>
    %128 = arith.truncf %127 : vector<2x128xf32> to vector<2x128xbf16>
    %c15 = arith.constant 15 : index
    %c0_89 = arith.constant 0 : index
    %c0_90 = arith.constant 0 : index
    %129 = vector.load %arg5[%c15, %c0_89, %c0_90] : memref<16x128x512xbf16, #tpu.memory_space<vmem>>, vector<1x128x512xbf16>
    %130 = vector.shape_cast %129 : vector<1x128x512xbf16> to vector<128x512xbf16>
    %cst_91 = arith.constant dense<0.000000e+00> : vector<2x512xf32>
    %131 = tpu.matmul %128, %130, %cst_91 {dimension_numbers = #tpu.dot_dimension_numbers<[1], [0], [0], [1], [0, 0, 1, 1], [], []>} : vector<2x128xbf16>, vector<128x512xbf16>, vector<2x512xf32> -> vector<2x512xf32>
    %132 = arith.addf %126, %131 : vector<2x512xf32>
    %c0_92 = arith.constant 0 : index
    %c0_93 = arith.constant 0 : index
    %133 = vector.load %arg6[%c0_92, %c0_93] : memref<1x512xf32, #tpu.memory_space<vmem>>, vector<1x512xf32>
    %134 = vector.broadcast %133 : vector<1x512xf32> to vector<2x512xf32>
    %135 = arith.addf %132, %134 : vector<2x512xf32>
    %cst_94 = arith.constant dense<0.000000e+00> : vector<512xf32>
    %136 = vector.multi_reduction <add>, %135, %cst_94 [0] : vector<2x512xf32> to vector<512xf32>
    %137 = vector.shape_cast %136 : vector<512xf32> to vector<1x512xf32>
    %138 = arith.mulf %135, %135 : vector<2x512xf32>
    %cst_95 = arith.constant dense<0.000000e+00> : vector<512xf32>
    %139 = vector.multi_reduction <add>, %138, %cst_95 [0] : vector<2x512xf32> to vector<512xf32>
    %140 = vector.shape_cast %139 : vector<512xf32> to vector<1x512xf32>
    %cst_96 = arith.constant 5.000000e-01 : f32
    %141 = vector.broadcast %cst_96 : f32 to vector<1x512xf32>
    %142 = arith.mulf %137, %141 : vector<1x512xf32>
    %cst_97 = arith.constant 5.000000e-01 : f32
    %143 = vector.broadcast %cst_97 : f32 to vector<1x512xf32>
    %144 = arith.mulf %140, %143 : vector<1x512xf32>
    %145 = arith.mulf %142, %142 : vector<1x512xf32>
    %146 = arith.subf %144, %145 : vector<1x512xf32>
    %147 = vector.broadcast %142 : vector<1x512xf32> to vector<2x512xf32>
    %148 = arith.subf %135, %147 : vector<2x512xf32>
    %cst_98 = arith.constant 9.99999974E-6 : f32
    %149 = vector.broadcast %cst_98 : f32 to vector<1x512xf32>
    %150 = arith.addf %146, %149 : vector<1x512xf32>
    %151 = math.rsqrt %150 : vector<1x512xf32>
    %152 = vector.broadcast %151 : vector<1x512xf32> to vector<2x512xf32>
    %153 = arith.mulf %148, %152 : vector<2x512xf32>
    %cst_99 = arith.constant 0.000000e+00 : f32
    %154 = vector.broadcast %cst_99 : f32 to vector<2x512xf32>
    %155 = arith.cmpf oge, %153, %154 : vector<2x512xf32>
    %cst_100 = arith.constant 3.000000e-01 : f32
    %156 = vector.broadcast %cst_100 : f32 to vector<2x512xf32>
    %157 = arith.mulf %156, %153 : vector<2x512xf32>
    %158 = arith.select %155, %153, %157 : vector<2x512xi1>, vector<2x512xf32>
    %c0_101 = arith.constant 0 : index
    %c0_102 = arith.constant 0 : index
    %159 = vector.load %arg7[%c0_101, %c0_102] : memref<1x512xf32, #tpu.memory_space<vmem>>, vector<1x512xf32>
    %160 = vector.broadcast %159 : vector<1x512xf32> to vector<2x512xf32>
    %161 = arith.mulf %158, %160 : vector<2x512xf32>
    %cst_103 = arith.constant dense<0.000000e+00> : vector<2xf32>
    %162 = vector.multi_reduction <add>, %161, %cst_103 [1] : vector<2x512xf32> to vector<2xf32>
    %163 = vector.shape_cast %162 : vector<2xf32> to vector<2x1xf32>
    %c0_104 = arith.constant 0 : index
    %c0_105 = arith.constant 0 : index
    %164 = vector.load %arg8[%c0_104, %c0_105] : memref<1x1xf32, #tpu.memory_space<vmem>>, vector<1x1xf32>
    %165 = vector.broadcast %164 : vector<1x1xf32> to vector<2x1xf32>
    %166 = arith.addf %163, %165 : vector<2x1xf32>
    %cst_106 = arith.constant 5.000000e-01 : f32
    %167 = vector.broadcast %cst_106 : f32 to vector<2x1xf32>
    %168 = arith.mulf %167, %166 : vector<2x1xf32>
    %169 = math.tanh %168 : vector<2x1xf32>
    %cst_107 = arith.constant 1.000000e+00 : f32
    %170 = vector.broadcast %cst_107 : f32 to vector<2x1xf32>
    %171 = arith.addf %169, %170 : vector<2x1xf32>
    %cst_108 = arith.constant 5.000000e-01 : f32
    %172 = vector.broadcast %cst_108 : f32 to vector<2x1xf32>
    %173 = arith.mulf %172, %171 : vector<2x1xf32>
    %c0_109 = arith.constant 0 : index
    %c0_110 = arith.constant 0 : index
    %174 = vector.load %arg9[%c0_109, %c0_110] : memref<2x1xf32, #tpu.memory_space<vmem>>, vector<2x1xf32>
    tpu.vector_store %arg9[%c0_109, %c0_110], %173 {strides = array<i32>} : memref<2x1xf32, #tpu.memory_space<vmem>>, vector<2x1xf32>,
    return
  }
  func.func @transform_0(%arg0: i32) -> (i32, i32) {
    %c0_i32 = arith.constant 0 : i32
    %c0_i32_0 = arith.constant 0 : i32
    %c0_i32_1 = arith.constant 0 : i32
    return %c0_i32, %c0_i32_0 : i32, i32
  }
  func.func @transform_1(%arg0: i32) -> (i32, i32) {
    %c0_i32 = arith.constant 0 : i32
    %c0_i32_0 = arith.constant 0 : i32
    %c0_i32_1 = arith.constant 0 : i32
    return %c0_i32, %c0_i32_0 : i32, i32
  }
  func.func @transform_2(%arg0: i32) -> (i32, i32) {
    %c0_i32 = arith.constant 0 : i32
    %c0_i32_0 = arith.constant 0 : i32
    %c0_i32_1 = arith.constant 0 : i32
    return %c0_i32, %c0_i32_0 : i32, i32
  }
  func.func @transform_3(%arg0: i32) -> (i32, i32) {
    %c0_i32 = arith.constant 0 : i32
    %c0_i32_0 = arith.constant 0 : i32
    %c0_i32_1 = arith.constant 0 : i32
    return %c0_i32, %c0_i32_0 : i32, i32
  }
  func.func @transform_4(%arg0: i32) -> (i32, i32, i32) {
    %c0_i32 = arith.constant 0 : i32
    %c0_i32_0 = arith.constant 0 : i32
    %c0_i32_1 = arith.constant 0 : i32
    %c0_i32_2 = arith.constant 0 : i32
    return %c0_i32, %c0_i32_0, %c0_i32_1 : i32, i32, i32
  }
  func.func @transform_5(%arg0: i32) -> (i32, i32) {
    %c0_i32 = arith.constant 0 : i32
    %c0_i32_0 = arith.constant 0 : i32
    %c0_i32_1 = arith.constant 0 : i32
    return %c0_i32, %c0_i32_0 : i32, i32
  }
  func.func @transform_6(%arg0: i32) -> (i32, i32) {
    %c0_i32 = arith.constant 0 : i32
    %c0_i32_0 = arith.constant 0 : i32
    %c0_i32_1 = arith.constant 0 : i32
    return %c0_i32, %c0_i32_0 : i32, i32
  }
  func.func @transform_7(%arg0: i32) -> (i32, i32) {
    %c0_i32 = arith.constant 0 : i32
    %c0_i32_0 = arith.constant 0 : i32
    %c0_i32_1 = arith.constant 0 : i32
    return %c0_i32, %c0_i32_0 : i32, i32
  }
  func.func @transform_8(%arg0: i32) -> (i32, i32) {
    %c0_i32 = arith.constant 0 : i32
    %c0_i32_0 = arith.constant 0 : i32
    %c0_i32_1 = arith.constant 0 : i32
    return %c0_i32, %c0_i32_0 : i32, i32
  }
}

</mosaic_0001>

<llo_original>
// kernel: discriminator_forward.1
$region0: #{discriminator_forward.1}
  #allocation0 [shape = 'u32[]', space=smem, size = 0x4, offset = 0x4, fixed_abs, tag = 'smem constant byte address 0x4 - core index']
  #allocation1 [shape = 'u32[72,128]{1,0:T(1,128)}', space=vmem, size = 0x9000, scoped, tag = 'internal scratch']
  #allocation2 [shape = 'f32[32,128]{1,0:T(8,128)}', space=vmem, size = 0x4000, scoped, tag = 'scratch operand']
  #allocation3 [shape = 'f32[1,1]{1,0:T(1,128)S(1)}', space=vmem, size = 0x200, scoped, tag = 'scoped memory for discriminator_forward.1']
  %s0 = inlined_call_operand.vmem [shape: bf16[32,272], index: 0, kind: input, shape index: {}]
  %s1 = inlined_call_operand.vmem [shape: bf16[272,512], index: 1, kind: input, shape index: {}]
  %s2 = inlined_call_operand.vmem [shape: bf16[512,128], index: 2, kind: input, shape index: {}]
  %s3 = inlined_call_operand.vmem [shape: f32[1,128], index: 3, kind: input, shape index: {}]
  %s4 = inlined_call_operand.vmem [shape: bf16[16,128,512], index: 4, kind: input, shape index: {}]
  %s5 = inlined_call_operand.vmem [shape: f32[1,512], index: 5, kind: input, shape index: {}]
  %s6 = inlined_call_operand.vmem [shape: f32[1,512], index: 6, kind: input, shape index: {}]
  %s7 = inlined_call_operand.<no memory space> [shape: f32[1,1], index: 7, kind: input, shape index: {}]
  %s8 = inlined_call_operand.vmem [shape: f32[2,1], index: 8, kind: output, shape index: {}]
  %s9 = sld [smem:[#allocation0]]
  $region42: #{discriminator_forward.1} parent=0
    _
  %s11 = ssub.s32 1, %s9
  %s12 = scalar_select 0, %s11, %s9
  %v13 = vstv %s7
  %14 = vst [vmem:[#allocation3] sm:$0x1] %v13
  // Predicated region
  $region2: #{discriminator_forward.1} parent=0 // pred_check
    _
  $region3: #{discriminator_forward.1} parent=0 // pred_check_branch
    %16 = sbr.rel (0) target = $region5
  $region4: #{discriminator_forward.1} parent=0 // pred_region
    _
  $region5: #{discriminator_forward.1} parent=0 // pred_fallthru
    _
  // Predicated region
  $region6: #{discriminator_forward.1} parent=0 // pred_check
    _
  $region7: #{discriminator_forward.1} parent=0 // pred_check_branch
    %18 = sbr.rel (0) target = $region9
  $region8: #{discriminator_forward.1} parent=0 // pred_region
    _
  $region9: #{discriminator_forward.1} parent=0 // pred_fallthru
    _
  // Predicated region
  $region10: #{discriminator_forward.1} parent=0 // pred_check
    _
  $region11: #{discriminator_forward.1} parent=0 // pred_check_branch
    %20 = sbr.rel (0) target = $region13
  $region12: #{discriminator_forward.1} parent=0 // pred_region
    _
  $region13: #{discriminator_forward.1} parent=0 // pred_fallthru
    _
  // Predicated region
  $region14: #{discriminator_forward.1} parent=0 // pred_check
    _
  $region15: #{discriminator_forward.1} parent=0 // pred_check_branch
    %22 = sbr.rel (0) target = $region17
  $region16: #{discriminator_forward.1} parent=0 // pred_region
    _
  $region17: #{discriminator_forward.1} parent=0 // pred_fallthru
    _
  // Predicated region
  $region18: #{discriminator_forward.1} parent=0 // pred_check
    _
  $region19: #{discriminator_forward.1} parent=0 // pred_check_branch
    %24 = sbr.rel (0) target = $region21
  $region20: #{discriminator_forward.1} parent=0 // pred_region
    _
  $region21: #{discriminator_forward.1} parent=0 // pred_fallthru
    _
  // Predicated region
  $region22: #{discriminator_forward.1} parent=0 // pred_check
    _
  $region23: #{discriminator_forward.1} parent=0 // pred_check_branch
    %26 = sbr.rel (0) target = $region25
  $region24: #{discriminator_forward.1} parent=0 // pred_region
    _
  $region25: #{discriminator_forward.1} parent=0 // pred_fallthru
    _
  // Predicated region
  $region26: #{discriminator_forward.1} parent=0 // pred_check
    _
  $region27: #{discriminator_forward.1} parent=0 // pred_check_branch
    %28 = sbr.rel (0) target = $region29
  $region28: #{discriminator_forward.1} parent=0 // pred_region
    _
  $region29: #{discriminator_forward.1} parent=0 // pred_fallthru
    _
  // Predicated region
  $region30: #{discriminator_forward.1} parent=0 // pred_check
    _
  $region31: #{discriminator_forward.1} parent=0 // pred_check_branch
    %30 = sbr.rel (0) target = $region33
  $region32: #{discriminator_forward.1} parent=0 // pred_region
    _
  $region33: #{discriminator_forward.1} parent=0 // pred_fallthru
    _
  %v32 = vld [vmem:[%s0] sm:$0xff]
  %v33 = vld [vmem:[%s0 + $0x8] sm:$0xf]
  %v34 = vld [vmem:[%s0 + $0xc] sm:$0xff]
  %v35 = vld [vmem:[%s0 + $0x14] sm:$0xf]
  %v36 = vld [vmem:[%s0 + $0x18] sm:$0xff]
  %v37 = vld [vmem:[%s0 + $0x20] sm:$0xf]
  %v38 = vld [vmem:[%s0 + $0x24] sm:$0xff]
  %v39 = vld [vmem:[%s0 + $0x2c] sm:$0xf]
  %v40 = vld [vmem:[%s1] sm:$0xff]
  %v41 = vld [vmem:[%s1 + $0x8] sm:$0xff]
  %v42 = vld [vmem:[%s1 + $0x10] sm:$0xff]
  %v43 = vld [vmem:[%s1 + $0x18] sm:$0xff]
  %v44 = vld [vmem:[%s1 + $0x20] sm:$0xff]
  %v45 = vld [vmem:[%s1 + $0x28] sm:$0xff]
  %v46 = vld [vmem:[%s1 + $0x30] sm:$0xff]
  %v47 = vld [vmem:[%s1 + $0x38] sm:$0xff]
  %v48 = vld [vmem:[%s1 + $0x40] sm:$0xff]
  %v49 = vld [vmem:[%s1 + $0x48] sm:$0xff]
  %v50 = vld [vmem:[%s1 + $0x50] sm:$0xff]
  %v51 = vld [vmem:[%s1 + $0x58] sm:$0xff]
  %v52 = vld [vmem:[%s1 + $0x60] sm:$0xff]
  %v53 = vld [vmem:[%s1 + $0x68] sm:$0xff]
  %v54 = vld [vmem:[%s1 + $0x70] sm:$0xff]
  %v55 = vld [vmem:[%s1 + $0x78] sm:$0xff]
  %v56 = vld [vmem:[%s1 + $0x80] sm:$0xff]
  %v57 = vld [vmem:[%s1 + $0x88] sm:$0xff]
  %v58 = vld [vmem:[%s1 + $0x90] sm:$0xff]
  %v59 = vld [vmem:[%s1 + $0x98] sm:$0xff]
  %v60 = vld [vmem:[%s1 + $0xa0] sm:$0xff]
  %v61 = vld [vmem:[%s1 + $0xa8] sm:$0xff]
  %v62 = vld [vmem:[%s1 + $0xb0] sm:$0xff]
  %v63 = vld [vmem:[%s1 + $0xb8] sm:$0xff]
  %v64 = vld [vmem:[%s1 + $0xc0] sm:$0xff]
  %v65 = vld [vmem:[%s1 + $0xc8] sm:$0xff]
  %v66 = vld [vmem:[%s1 + $0xd0] sm:$0xff]
  %v67 = vld [vmem:[%s1 + $0xd8] sm:$0xff]
  %v68 = vld [vmem:[%s1 + $0xe0] sm:$0xff]
  %v69 = vld [vmem:[%s1 + $0xe8] sm:$0xff]
  %v70 = vld [vmem:[%s1 + $0xf0] sm:$0xff]
  %v71 = vld [vmem:[%s1 + $0xf8] sm:$0xff]
  %v72 = vld [vmem:[%s1 + $0x100] sm:$0xff]
  %v73 = vld [vmem:[%s1 + $0x108] sm:$0xff]
  %v74 = vld [vmem:[%s1 + $0x110] sm:$0xff]
  %v75 = vld [vmem:[%s1 + $0x118] sm:$0xff]
  %v76 = vld [vmem:[%s1 + $0x120] sm:$0xff]
  %v77 = vld [vmem:[%s1 + $0x128] sm:$0xff]
  %v78 = vld [vmem:[%s1 + $0x130] sm:$0xff]
  %v79 = vld [vmem:[%s1 + $0x138] sm:$0xff]
  %v80 = vld [vmem:[%s1 + $0x140] sm:$0xff]
  %v81 = vld [vmem:[%s1 + $0x148] sm:$0xff]
  %v82 = vld [vmem:[%s1 + $0x150] sm:$0xff]
  %v83 = vld [vmem:[%s1 + $0x158] sm:$0xff]
  %v84 = vld [vmem:[%s1 + $0x160] sm:$0xff]
  %v85 = vld [vmem:[%s1 + $0x168] sm:$0xff]
  %v86 = vld [vmem:[%s1 + $0x170] sm:$0xff]
  %v87 = vld [vmem:[%s1 + $0x178] sm:$0xff]
  %v88 = vld [vmem:[%s1 + $0x180] sm:$0xff]
  %v89 = vld [vmem:[%s1 + $0x188] sm:$0xff]
  %v90 = vld [vmem:[%s1 + $0x190] sm:$0xff]
  %v91 = vld [vmem:[%s1 + $0x198] sm:$0xff]
  %v92 = vld [vmem:[%s1 + $0x1a0] sm:$0xff]
  %v93 = vld [vmem:[%s1 + $0x1a8] sm:$0xff]
  %v94 = vld [vmem:[%s1 + $0x1b0] sm:$0xff]
  %v95 = vld [vmem:[%s1 + $0x1b8] sm:$0xff]
  %v96 = vld [vmem:[%s1 + $0x1c0] sm:$0xff]
  %v97 = vld [vmem:[%s1 + $0x1c8] sm:$0xff]
  %v98 = vld [vmem:[%s1 + $0x1d0] sm:$0xff]
  %v99 = vld [vmem:[%s1 + $0x1d8] sm:$0xff]
  %v100 = vld [vmem:[%s1 + $0x1e0] sm:$0xff]
  %v101 = vld [vmem:[%s1 + $0x1e8] sm:$0xff]
  %v102 = vld [vmem:[%s1 + $0x1f0] sm:$0xff]
  %v103 = vld [vmem:[%s1 + $0x1f8] sm:$0xff]
  %v104 = vld [vmem:[%s1 + $0x200] sm:$0xff]
  %v105 = vld [vmem:[%s1 + $0x208] sm:$0xff]
  %v106 = vld [vmem:[%s1 + $0x210] sm:$0xff]
  %v107 = vld [vmem:[%s1 + $0x218] sm:$0xff]
  %v116 = vunpack.c.l.b16 %v32
  %v117 = vunpack.c.h.b16 %v32
  %v118 = vunpack.c.l.b16 %v33
  %v119 = vunpack.c.l.b16 %v34
  %v120 = vunpack.c.h.b16 %v34
  %v121 = vunpack.c.l.b16 %v35
  %v122 = vunpack.c.l.b16 %v36
  %v123 = vunpack.c.h.b16 %v36
  %v124 = vunpack.c.l.b16 %v37
  %v125 = vunpack.c.l.b16 %v38
  %v126 = vunpack.c.h.b16 %v38
  %v127 = vunpack.c.l.b16 %v39
  %v128 = vpack.c.b16 %v119, %v116
  %v129 = vpack.c.b16 %v120, %v117
  %v130 = vpack.c.b16 %v121, %v118
  %v131 = vpack.c.b16 %v125, %v122
  %v132 = vpack.c.b16 %v126, %v123
  %v133 = vpack.c.b16 %v127, %v124
  %v206 = vunpack.c.l.b16 %v40
  %v207 = vunpack.c.h.b16 %v40
  %v208 = vunpack.c.l.b16 %v41
  %v209 = vunpack.c.h.b16 %v41
  %v210 = vunpack.c.l.b16 %v42
  %v211 = vunpack.c.h.b16 %v42
  %v212 = vunpack.c.l.b16 %v43
  %v213 = vunpack.c.h.b16 %v43
  %v214 = vunpack.c.l.b16 %v44
  %v215 = vunpack.c.h.b16 %v44
  %v216 = vunpack.c.l.b16 %v45
  %v217 = vunpack.c.h.b16 %v45
  %v218 = vunpack.c.l.b16 %v46
  %v219 = vunpack.c.h.b16 %v46
  %v220 = vunpack.c.l.b16 %v47
  %v221 = vunpack.c.h.b16 %v47
  %v222 = vunpack.c.l.b16 %v48
  %v223 = vunpack.c.h.b16 %v48
  %v224 = vunpack.c.l.b16 %v49
  %v225 = vunpack.c.h.b16 %v49
  %v226 = vunpack.c.l.b16 %v50
  %v227 = vunpack.c.h.b16 %v50
  %v228 = vunpack.c.l.b16 %v51
  %v229 = vunpack.c.h.b16 %v51
  %v230 = vunpack.c.l.b16 %v52
  %v231 = vunpack.c.h.b16 %v52
  %v232 = vunpack.c.l.b16 %v53
  %v233 = vunpack.c.h.b16 %v53
  %v234 = vunpack.c.l.b16 %v54
  %v235 = vunpack.c.h.b16 %v54
  %v236 = vunpack.c.l.b16 %v55
  %v237 = vunpack.c.h.b16 %v55
  %v238 = vunpack.c.l.b16 %v56
  %v239 = vunpack.c.h.b16 %v56
  %v240 = vunpack.c.l.b16 %v57
  %v241 = vunpack.c.h.b16 %v57
  %v242 = vunpack.c.l.b16 %v58
  %v243 = vunpack.c.h.b16 %v58
  %v244 = vunpack.c.l.b16 %v59
  %v245 = vunpack.c.h.b16 %v59
  %v246 = vunpack.c.l.b16 %v60
  %v247 = vunpack.c.h.b16 %v60
  %v248 = vunpack.c.l.b16 %v61
  %v249 = vunpack.c.h.b16 %v61
  %v250 = vunpack.c.l.b16 %v62
  %v251 = vunpack.c.h.b16 %v62
  %v252 = vunpack.c.l.b16 %v63
  %v253 = vunpack.c.h.b16 %v63
  %v254 = vunpack.c.l.b16 %v64
  %v255 = vunpack.c.h.b16 %v64
  %v256 = vunpack.c.l.b16 %v65
  %v257 = vunpack.c.h.b16 %v65
  %v258 = vunpack.c.l.b16 %v66
  %v259 = vunpack.c.h.b16 %v66
  %v260 = vunpack.c.l.b16 %v67
  %v261 = vunpack.c.h.b16 %v67
  %v262 = vunpack.c.l.b16 %v68
  %v263 = vunpack.c.h.b16 %v68
  %v264 = vunpack.c.l.b16 %v69
  %v265 = vunpack.c.h.b16 %v69
  %v266 = vunpack.c.l.b16 %v70
  %v267 = vunpack.c.h.b16 %v70
  %v268 = vunpack.c.l.b16 %v71
  %v269 = vunpack.c.h.b16 %v71
  %v270 = vunpack.c.l.b16 %v72
  %v271 = vunpack.c.h.b16 %v72
  %v272 = vunpack.c.l.b16 %v73
  %v273 = vunpack.c.h.b16 %v73
  %v274 = vunpack.c.l.b16 %v74
  %v275 = vunpack.c.h.b16 %v74
  %v276 = vunpack.c.l.b16 %v75
  %v277 = vunpack.c.h.b16 %v75
  %v278 = vunpack.c.l.b16 %v76
  %v279 = vunpack.c.h.b16 %v76
  %v280 = vunpack.c.l.b16 %v77
  %v281 = vunpack.c.h.b16 %v77
  %v282 = vunpack.c.l.b16 %v78
  %v283 = vunpack.c.h.b16 %v78
  %v284 = vunpack.c.l.b16 %v79
  %v285 = vunpack.c.h.b16 %v79
  %v286 = vunpack.c.l.b16 %v80
  %v287 = vunpack.c.h.b16 %v80
  %v288 = vunpack.c.l.b16 %v81
  %v289 = vunpack.c.h.b16 %v81
  %v290 = vunpack.c.l.b16 %v82
  %v291 = vunpack.c.h.b16 %v82
  %v292 = vunpack.c.l.b16 %v83
  %v293 = vunpack.c.h.b16 %v83
  %v294 = vunpack.c.l.b16 %v84
  %v295 = vunpack.c.h.b16 %v84
  %v296 = vunpack.c.l.b16 %v85
  %v297 = vunpack.c.h.b16 %v85
  %v298 = vunpack.c.l.b16 %v86
  %v299 = vunpack.c.h.b16 %v86
  %v300 = vunpack.c.l.b16 %v87
  %v301 = vunpack.c.h.b16 %v87
  %v302 = vunpack.c.l.b16 %v88
  %v303 = vunpack.c.h.b16 %v88
  %v304 = vunpack.c.l.b16 %v89
  %v305 = vunpack.c.h.b16 %v89
  %v306 = vunpack.c.l.b16 %v90
  %v307 = vunpack.c.h.b16 %v90
  %v308 = vunpack.c.l.b16 %v91
  %v309 = vunpack.c.h.b16 %v91
  %v310 = vunpack.c.l.b16 %v92
  %v311 = vunpack.c.h.b16 %v92
  %v312 = vunpack.c.l.b16 %v93
  %v313 = vunpack.c.h.b16 %v93
  %v314 = vunpack.c.l.b16 %v94
  %v315 = vunpack.c.h.b16 %v94
  %v316 = vunpack.c.l.b16 %v95
  %v317 = vunpack.c.h.b16 %v95
  %v318 = vunpack.c.l.b16 %v96
  %v319 = vunpack.c.h.b16 %v96
  %v320 = vunpack.c.l.b16 %v97
  %v321 = vunpack.c.h.b16 %v97
  %v322 = vunpack.c.l.b16 %v98
  %v323 = vunpack.c.h.b16 %v98
  %v324 = vunpack.c.l.b16 %v99
  %v325 = vunpack.c.h.b16 %v99
  %v326 = vunpack.c.l.b16 %v100
  %v327 = vunpack.c.h.b16 %v100
  %v328 = vunpack.c.l.b16 %v101
  %v329 = vunpack.c.h.b16 %v101
  %v330 = vunpack.c.l.b16 %v102
  %v331 = vunpack.c.h.b16 %v102
  %v332 = vunpack.c.l.b16 %v103
  %v333 = vunpack.c.h.b16 %v103
  %v334 = vunpack.c.l.b16 %v104
  %v335 = vunpack.c.h.b16 %v104
  %v336 = vunpack.c.l.b16 %v105
  %v337 = vunpack.c.h.b16 %v105
  %v338 = vunpack.c.l.b16 %v106
  %v339 = vunpack.c.h.b16 %v106
  %v340 = vunpack.c.l.b16 %v107
  %v341 = vunpack.c.h.b16 %v107
  %v342 = vpack.c.b16 %v210, %v206
  %v343 = vpack.c.b16 %v211, %v207
  %v344 = vpack.c.b16 %v212, %v208
  %v345 = vpack.c.b16 %v213, %v209
  %v346 = vpack.c.b16 %v218, %v214
  %v347 = vpack.c.b16 %v219, %v215
  %v348 = vpack.c.b16 %v220, %v216
  %v349 = vpack.c.b16 %v221, %v217
  %v350 = vpack.c.b16 %v226, %v222
  %v351 = vpack.c.b16 %v227, %v223
  %v352 = vpack.c.b16 %v228, %v224
  %v353 = vpack.c.b16 %v229, %v225
  %v354 = vpack.c.b16 %v234, %v230
  %v355 = vpack.c.b16 %v235, %v231
  %v356 = vpack.c.b16 %v236, %v232
  %v357 = vpack.c.b16 %v237, %v233
  %v358 = vpack.c.b16 %v242, %v238
  %v359 = vpack.c.b16 %v243, %v239
  %v360 = vpack.c.b16 %v244, %v240
  %v361 = vpack.c.b16 %v245, %v241
  %v362 = vpack.c.b16 %v250, %v246
  %v363 = vpack.c.b16 %v251, %v247
  %v364 = vpack.c.b16 %v252, %v248
  %v365 = vpack.c.b16 %v253, %v249
  %v366 = vpack.c.b16 %v258, %v254
  %v367 = vpack.c.b16 %v259, %v255
  %v368 = vpack.c.b16 %v260, %v256
  %v369 = vpack.c.b16 %v261, %v257
  %v370 = vpack.c.b16 %v266, %v262
  %v371 = vpack.c.b16 %v267, %v263
  %v372 = vpack.c.b16 %v268, %v264
  %v373 = vpack.c.b16 %v269, %v265
  %v374 = vpack.c.b16 %v274, %v270
  %v375 = vpack.c.b16 %v275, %v271
  %v376 = vpack.c.b16 %v276, %v272
  %v377 = vpack.c.b16 %v277, %v273
  %v378 = vpack.c.b16 %v282, %v278
  %v379 = vpack.c.b16 %v283, %v279
  %v380 = vpack.c.b16 %v284, %v280
  %v381 = vpack.c.b16 %v285, %v281
  %v382 = vpack.c.b16 %v290, %v286
  %v383 = vpack.c.b16 %v291, %v287
  %v384 = vpack.c.b16 %v292, %v288
  %v385 = vpack.c.b16 %v293, %v289
  %v386 = vpack.c.b16 %v298, %v294
  %v387 = vpack.c.b16 %v299, %v295
  %v388 = vpack.c.b16 %v300, %v296
  %v389 = vpack.c.b16 %v301, %v297
  %v390 = vpack.c.b16 %v306, %v302
  %v391 = vpack.c.b16 %v307, %v303
  %v392 = vpack.c.b16 %v308, %v304
  %v393 = vpack.c.b16 %v309, %v305
  %v394 = vpack.c.b16 %v314, %v310
  %v395 = vpack.c.b16 %v315, %v311
  %v396 = vpack.c.b16 %v316, %v312
  %v397 = vpack.c.b16 %v317, %v313
  %v398 = vpack.c.b16 %v322, %v318
  %v399 = vpack.c.b16 %v323, %v319
  %v400 = vpack.c.b16 %v324, %v320
  %v401 = vpack.c.b16 %v325, %v321
  %v402 = vpack.c.b16 %v330, %v326
  %v403 = vpack.c.b16 %v331, %v327
  %v404 = vpack.c.b16 %v332, %v328
  %v405 = vpack.c.b16 %v333, %v329
  %v406 = vpack.c.b16 %v338, %v334
  %v407 = vpack.c.b16 %v339, %v335
  %v408 = vpack.c.b16 %v340, %v336
  %v409 = vpack.c.b16 %v341, %v337
  %vm478 = vcmask 130048
  %v480 = vsel %vm478, %v130, 0
  %v483 = vsel %vm478, %v133, 0
  %485 = vmatpush.bf16.msra.mxu0 %v370
  %486 = vmatpush.bf16.msra.mxu0 %v366
  %487 = vmatpush.bf16.msra.mxu0 %v362
  %488 = vmatpush.bf16.msra.mxu0 %v358
  %489 = vmatpush.bf16.msra.mxu0 %v354
  %490 = vmatpush.bf16.msra.mxu0 %v350
  %491 = vmatpush.bf16.msra.mxu0 %v346
  %492 = vmatpush.bf16.msra.mxu0 %v342
  %493 = vmatmul.bf16.gmra.mxu0 %v128
  %v494 = vpop.f32.mrf.mxu0
  %v495 = vadd.f32 0.0, %v494
  %v496 = vpop.f32.mrf.mxu0
  %v497 = vadd.f32 0.0, %v496
  %498 = vmatmul.bf16.gmra.mxu0 %v131
  %v499 = vpop.f32.mrf.mxu0
  %v500 = vadd.f32 0.0, %v499
  %v501 = vpop.f32.mrf.mxu0
  %v502 = vadd.f32 0.0, %v501
  %503 = vdwg.mxu0
  %504 = vmatpush.bf16.msra.mxu0 %v402
  %505 = vmatpush.bf16.msra.mxu0 %v398
  %506 = vmatpush.bf16.msra.mxu0 %v394
  %507 = vmatpush.bf16.msra.mxu0 %v390
  %508 = vmatpush.bf16.msra.mxu0 %v386
  %509 = vmatpush.bf16.msra.mxu0 %v382
  %510 = vmatpush.bf16.msra.mxu0 %v378
  %511 = vmatpush.bf16.msra.mxu0 %v374
  %512 = vmatmul.bf16.gmra.mxu0 %v129
  %v513 = vpop.f32.mrf.mxu0
  %v514 = vadd.f32 %v495, %v513
  %v515 = vpop.f32.mrf.mxu0
  %v516 = vadd.f32 %v497, %v515
  %517 = vmatmul.bf16.gmra.mxu0 %v132
  %v518 = vpop.f32.mrf.mxu0
  %v519 = vadd.f32 %v500, %v518
  %v520 = vpop.f32.mrf.mxu0
  %v521 = vadd.f32 %v502, %v520
  %522 = vdwg.mxu0
  %523 = vmatpush.bf16.msra.mxu0 0
  %524 = vmatpush.bf16.msra.mxu0 0
  %525 = vmatpush.bf16.msra.mxu0 0
  %526 = vmatpush.bf16.msra.mxu0 0
  %527 = vmatpush.bf16.msra.mxu0 0
  %528 = vmatpush.bf16.msra.mxu0 0
  %529 = vmatpush.bf16.msra.mxu0 0
  %530 = vmatpush.bf16.msra.mxu0 %v406
  %531 = vmatmul.bf16.gmra.mxu0 %v480
  %v532 = vpop.f32.mrf.mxu0
  %v533 = vadd.f32 %v514, %v532
  %v534 = vpop.f32.mrf.mxu0
  %v535 = vadd.f32 %v516, %v534
  %536 = vmatmul.bf16.gmra.mxu0 %v483
  %v537 = vpop.f32.mrf.mxu0
  %v538 = vadd.f32 %v519, %v537
  %v539 = vpop.f32.mrf.mxu0
  %v540 = vadd.f32 %v521, %v539
  %541 = vdwg.mxu0
  %542 = vmatpush.bf16.msra.mxu0 %v371
  %543 = vmatpush.bf16.msra.mxu0 %v367
  %544 = vmatpush.bf16.msra.mxu0 %v363
  %545 = vmatpush.bf16.msra.mxu0 %v359
  %546 = vmatpush.bf16.msra.mxu0 %v355
  %547 = vmatpush.bf16.msra.mxu0 %v351
  %548 = vmatpush.bf16.msra.mxu0 %v347
  %549 = vmatpush.bf16.msra.mxu0 %v343
  %550 = vmatmul.bf16.gmra.mxu0 %v128
  %v551 = vpop.f32.mrf.mxu0
  %v552 = vadd.f32 0.0, %v551
  %v553 = vpop.f32.mrf.mxu0
  %v554 = vadd.f32 0.0, %v553
  %555 = vmatmul.bf16.gmra.mxu0 %v131
  %v556 = vpop.f32.mrf.mxu0
  %v557 = vadd.f32 0.0, %v556
  %v558 = vpop.f32.mrf.mxu0
  %v559 = vadd.f32 0.0, %v558
  %560 = vdwg.mxu0
  %561 = vmatpush.bf16.msra.mxu0 %v403
  %562 = vmatpush.bf16.msra.mxu0 %v399
  %563 = vmatpush.bf16.msra.mxu0 %v395
  %564 = vmatpush.bf16.msra.mxu0 %v391
  %565 = vmatpush.bf16.msra.mxu0 %v387
  %566 = vmatpush.bf16.msra.mxu0 %v383
  %567 = vmatpush.bf16.msra.mxu0 %v379
  %568 = vmatpush.bf16.msra.mxu0 %v375
  %569 = vmatmul.bf16.gmra.mxu0 %v129
  %v570 = vpop.f32.mrf.mxu0
  %v571 = vadd.f32 %v552, %v570
  %v572 = vpop.f32.mrf.mxu0
  %v573 = vadd.f32 %v554, %v572
  %574 = vmatmul.bf16.gmra.mxu0 %v132
  %v575 = vpop.f32.mrf.mxu0
  %v576 = vadd.f32 %v557, %v575
  %v577 = vpop.f32.mrf.mxu0
  %v578 = vadd.f32 %v559, %v577
  %579 = vdwg.mxu0
  %580 = vmatpush.bf16.msra.mxu0 0
  %581 = vmatpush.bf16.msra.mxu0 0
  %582 = vmatpush.bf16.msra.mxu0 0
  %583 = vmatpush.bf16.msra.mxu0 0
  %584 = vmatpush.bf16.msra.mxu0 0
  %585 = vmatpush.bf16.msra.mxu0 0
  %586 = vmatpush.bf16.msra.mxu0 0
  %587 = vmatpush.bf16.msra.mxu0 %v407
  %588 = vmatmul.bf16.gmra.mxu0 %v480
  %v589 = vpop.f32.mrf.mxu0
  %v590 = vadd.f32 %v571, %v589
  %v591 = vpop.f32.mrf.mxu0
  %v592 = vadd.f32 %v573, %v591
  %593 = vmatmul.bf16.gmra.mxu0 %v483
  %v594 = vpop.f32.mrf.mxu0
  %v595 = vadd.f32 %v576, %v594
  %v596 = vpop.f32.mrf.mxu0
  %v597 = vadd.f32 %v578, %v596
  %598 = vdwg.mxu0
  %599 = vmatpush.bf16.msra.mxu0 %v372
  %600 = vmatpush.bf16.msra.mxu0 %v368
  %601 = vmatpush.bf16.msra.mxu0 %v364
  %602 = vmatpush.bf16.msra.mxu0 %v360
  %603 = vmatpush.bf16.msra.mxu0 %v356
  %604 = vmatpush.bf16.msra.mxu0 %v352
  %605 = vmatpush.bf16.msra.mxu0 %v348
  %606 = vmatpush.bf16.msra.mxu0 %v344
  %607 = vmatmul.bf16.gmra.mxu0 %v128
  %v608 = vpop.f32.mrf.mxu0
  %v609 = vadd.f32 0.0, %v608
  %v610 = vpop.f32.mrf.mxu0
  %v611 = vadd.f32 0.0, %v610
  %612 = vmatmul.bf16.gmra.mxu0 %v131
  %v613 = vpop.f32.mrf.mxu0
  %v614 = vadd.f32 0.0, %v613
  %v615 = vpop.f32.mrf.mxu0
  %v616 = vadd.f32 0.0, %v615
  %617 = vdwg.mxu0
  %618 = vmatpush.bf16.msra.mxu0 %v404
  %619 = vmatpush.bf16.msra.mxu0 %v400
  %620 = vmatpush.bf16.msra.mxu0 %v396
  %621 = vmatpush.bf16.msra.mxu0 %v392
  %622 = vmatpush.bf16.msra.mxu0 %v388
  %623 = vmatpush.bf16.msra.mxu0 %v384
  %624 = vmatpush.bf16.msra.mxu0 %v380
  %625 = vmatpush.bf16.msra.mxu0 %v376
  %626 = vmatmul.bf16.gmra.mxu0 %v129
  %v627 = vpop.f32.mrf.mxu0
  %v628 = vadd.f32 %v609, %v627
  %v629 = vpop.f32.mrf.mxu0
  %v630 = vadd.f32 %v611, %v629
  %631 = vmatmul.bf16.gmra.mxu0 %v132
  %v632 = vpop.f32.mrf.mxu0
  %v633 = vadd.f32 %v614, %v632
  %v634 = vpop.f32.mrf.mxu0
  %v635 = vadd.f32 %v616, %v634
  %636 = vdwg.mxu0
  %637 = vmatpush.bf16.msra.mxu0 0
  %638 = vmatpush.bf16.msra.mxu0 0
  %639 = vmatpush.bf16.msra.mxu0 0
  %640 = vmatpush.bf16.msra.mxu0 0
  %641 = vmatpush.bf16.msra.mxu0 0
  %642 = vmatpush.bf16.msra.mxu0 0
  %643 = vmatpush.bf16.msra.mxu0 0
  %644 = vmatpush.bf16.msra.mxu0 %v408
  %645 = vmatmul.bf16.gmra.mxu0 %v480
  %v646 = vpop.f32.mrf.mxu0
  %v647 = vadd.f32 %v628, %v646
  %v648 = vpop.f32.mrf.mxu0
  %v649 = vadd.f32 %v630, %v648
  %650 = vmatmul.bf16.gmra.mxu0 %v483
  %v651 = vpop.f32.mrf.mxu0
  %v652 = vadd.f32 %v633, %v651
  %v653 = vpop.f32.mrf.mxu0
  %v654 = vadd.f32 %v635, %v653
  %655 = vdwg.mxu0
  %656 = vmatpush.bf16.msra.mxu0 %v373
  %657 = vmatpush.bf16.msra.mxu0 %v369
  %658 = vmatpush.bf16.msra.mxu0 %v365
  %659 = vmatpush.bf16.msra.mxu0 %v361
  %660 = vmatpush.bf16.msra.mxu0 %v357
  %661 = vmatpush.bf16.msra.mxu0 %v353
  %662 = vmatpush.bf16.msra.mxu0 %v349
  %663 = vmatpush.bf16.msra.mxu0 %v345
  %664 = vmatmul.bf16.gmra.mxu0 %v128
  %v665 = vpop.f32.mrf.mxu0
  %v666 = vadd.f32 0.0, %v665
  %v667 = vpop.f32.mrf.mxu0
  %v668 = vadd.f32 0.0, %v667
  %669 = vmatmul.bf16.gmra.mxu0 %v131
  %v670 = vpop.f32.mrf.mxu0
  %v671 = vadd.f32 0.0, %v670
  %v672 = vpop.f32.mrf.mxu0
  %v673 = vadd.f32 0.0, %v672
  %674 = vdwg.mxu0
  %675 = vmatpush.bf16.msra.mxu0 %v405
  %676 = vmatpush.bf16.msra.mxu0 %v401
  %677 = vmatpush.bf16.msra.mxu0 %v397
  %678 = vmatpush.bf16.msra.mxu0 %v393
  %679 = vmatpush.bf16.msra.mxu0 %v389
  %680 = vmatpush.bf16.msra.mxu0 %v385
  %681 = vmatpush.bf16.msra.mxu0 %v381
  %682 = vmatpush.bf16.msra.mxu0 %v377
  %683 = vmatmul.bf16.gmra.mxu0 %v129
  %v684 = vpop.f32.mrf.mxu0
  %v685 = vadd.f32 %v666, %v684
  %v686 = vpop.f32.mrf.mxu0
  %v687 = vadd.f32 %v668, %v686
  %688 = vmatmul.bf16.gmra.mxu0 %v132
  %v689 = vpop.f32.mrf.mxu0
  %v690 = vadd.f32 %v671, %v689
  %v691 = vpop.f32.mrf.mxu0
  %v692 = vadd.f32 %v673, %v691
  %693 = vdwg.mxu0
  %694 = vmatpush.bf16.msra.mxu0 0
  %695 = vmatpush.bf16.msra.mxu0 0
  %696 = vmatpush.bf16.msra.mxu0 0
  %697 = vmatpush.bf16.msra.mxu0 0
  %698 = vmatpush.bf16.msra.mxu0 0
  %699 = vmatpush.bf16.msra.mxu0 0
  %700 = vmatpush.bf16.msra.mxu0 0
  %701 = vmatpush.bf16.msra.mxu0 %v409
  %702 = vmatmul.bf16.gmra.mxu0 %v480
  %v703 = vpop.f32.mrf.mxu0
  %v704 = vadd.f32 %v685, %v703
  %v705 = vpop.f32.mrf.mxu0
  %v706 = vadd.f32 %v687, %v705
  %707 = vmatmul.bf16.gmra.mxu0 %v483
  %v708 = vpop.f32.mrf.mxu0
  %v709 = vadd.f32 %v690, %v708
  %v710 = vpop.f32.mrf.mxu0
  %v711 = vadd.f32 %v692, %v710
  %712 = vdwg.mxu0
  %vm713 = vcmp.ge.f32.partialorder %v533, 0.0
  %vm714 = vcmp.ge.f32.partialorder %v590, 0.0
  %vm715 = vcmp.ge.f32.partialorder %v647, 0.0
  %vm716 = vcmp.ge.f32.partialorder %v704, 0.0
  %vm717 = vcmp.ge.f32.partialorder %v535, 0.0
  %vm718 = vcmp.ge.f32.partialorder %v592, 0.0
  %vm719 = vcmp.ge.f32.partialorder %v649, 0.0
  %vm720 = vcmp.ge.f32.partialorder %v706, 0.0
  %vm721 = vcmp.ge.f32.partialorder %v538, 0.0
  %vm722 = vcmp.ge.f32.partialorder %v595, 0.0
  %vm723 = vcmp.ge.f32.partialorder %v652, 0.0
  %vm724 = vcmp.ge.f32.partialorder %v709, 0.0
  %vm725 = vcmp.ge.f32.partialorder %v540, 0.0
  %vm726 = vcmp.ge.f32.partialorder %v597, 0.0
  %vm727 = vcmp.ge.f32.partialorder %v654, 0.0
  %vm728 = vcmp.ge.f32.partialorder %v711, 0.0
  %v729 = vmul.f32 %v533, 0.3
  %v730 = vmul.f32 %v590, 0.3
  %v731 = vmul.f32 %v647, 0.3
  %v732 = vmul.f32 %v704, 0.3
  %v733 = vmul.f32 %v535, 0.3
  %v734 = vmul.f32 %v592, 0.3
  %v735 = vmul.f32 %v649, 0.3
  %v736 = vmul.f32 %v706, 0.3
  %v737 = vmul.f32 %v538, 0.3
  %v738 = vmul.f32 %v595, 0.3
  %v739 = vmul.f32 %v652, 0.3
  %v740 = vmul.f32 %v709, 0.3
  %v741 = vmul.f32 %v540, 0.3
  %v742 = vmul.f32 %v597, 0.3
  %v743 = vmul.f32 %v654, 0.3
  %v744 = vmul.f32 %v711, 0.3
  %v745 = vsel %vm713, %v533, %v729
  %v746 = vsel %vm714, %v590, %v730
  %v747 = vsel %vm715, %v647, %v731
  %v748 = vsel %vm716, %v704, %v732
  %v749 = vsel %vm717, %v535, %v733
  %v750 = vsel %vm718, %v592, %v734
  %v751 = vsel %vm719, %v649, %v735
  %v752 = vsel %vm720, %v706, %v736
  %v753 = vsel %vm721, %v538, %v737
  %v754 = vsel %vm722, %v595, %v738
  %v755 = vsel %vm723, %v652, %v739
  %v756 = vsel %vm724, %v709, %v740
  %v757 = vsel %vm725, %v540, %v741
  %v758 = vsel %vm726, %v597, %v742
  %v759 = vsel %vm727, %v654, %v743
  %v760 = vsel %vm728, %v711, %v744
  %v761 = vpack.c.bf16 %v749, %v745
  %v762 = vpack.c.bf16 %v750, %v746
  %v763 = vpack.c.bf16 %v751, %v747
  %v764 = vpack.c.bf16 %v752, %v748
  %v765 = vpack.c.bf16 %v757, %v753
  %v766 = vpack.c.bf16 %v758, %v754
  %v767 = vpack.c.bf16 %v759, %v755
  %v768 = vpack.c.bf16 %v760, %v756
  %v769 = vld [vmem:[%s2] sm:$0xf]
  %v770 = vld [vmem:[%s2 + $0x4] sm:$0xf]
  %v771 = vld [vmem:[%s2 + $0x8] sm:$0xf]
  %v772 = vld [vmem:[%s2 + $0xc] sm:$0xf]
  %v773 = vld [vmem:[%s2 + $0x10] sm:$0xf]
  %v774 = vld [vmem:[%s2 + $0x14] sm:$0xf]
  %v775 = vld [vmem:[%s2 + $0x18] sm:$0xf]
  %v776 = vld [vmem:[%s2 + $0x1c] sm:$0xf]
  %v777 = vld [vmem:[%s2 + $0x20] sm:$0xf]
  %v778 = vld [vmem:[%s2 + $0x24] sm:$0xf]
  %v779 = vld [vmem:[%s2 + $0x28] sm:$0xf]
  %v780 = vld [vmem:[%s2 + $0x2c] sm:$0xf]
  %v781 = vld [vmem:[%s2 + $0x30] sm:$0xf]
  %v782 = vld [vmem:[%s2 + $0x34] sm:$0xf]
  %v783 = vld [vmem:[%s2 + $0x38] sm:$0xf]
  %v784 = vld [vmem:[%s2 + $0x3c] sm:$0xf]
  %v785 = vld [vmem:[%s2 + $0x40] sm:$0xf]
  %v786 = vld [vmem:[%s2 + $0x44] sm:$0xf]
  %v787 = vld [vmem:[%s2 + $0x48] sm:$0xf]
  %v788 = vld [vmem:[%s2 + $0x4c] sm:$0xf]
  %v789 = vld [vmem:[%s2 + $0x50] sm:$0xf]
  %v790 = vld [vmem:[%s2 + $0x54] sm:$0xf]
  %v791 = vld [vmem:[%s2 + $0x58] sm:$0xf]
  %v792 = vld [vmem:[%s2 + $0x5c] sm:$0xf]
  %v793 = vld [vmem:[%s2 + $0x60] sm:$0xf]
  %v794 = vld [vmem:[%s2 + $0x64] sm:$0xf]
  %v795 = vld [vmem:[%s2 + $0x68] sm:$0xf]
  %v796 = vld [vmem:[%s2 + $0x6c] sm:$0xf]
  %v797 = vld [vmem:[%s2 + $0x70] sm:$0xf]
  %v798 = vld [vmem:[%s2 + $0x74] sm:$0xf]
  %v799 = vld [vmem:[%s2 + $0x78] sm:$0xf]
  %v800 = vld [vmem:[%s2 + $0x7c] sm:$0xf]
  %v801 = vld [vmem:[%s2 + $0x80] sm:$0xf]
  %v802 = vld [vmem:[%s2 + $0x84] sm:$0xf]
  %v803 = vld [vmem:[%s2 + $0x88] sm:$0xf]
  %v804 = vld [vmem:[%s2 + $0x8c] sm:$0xf]
  %v805 = vld [vmem:[%s2 + $0x90] sm:$0xf]
  %v806 = vld [vmem:[%s2 + $0x94] sm:$0xf]
  %v807 = vld [vmem:[%s2 + $0x98] sm:$0xf]
  %v808 = vld [vmem:[%s2 + $0x9c] sm:$0xf]
  %v809 = vld [vmem:[%s2 + $0xa0] sm:$0xf]
  %v810 = vld [vmem:[%s2 + $0xa4] sm:$0xf]
  %v811 = vld [vmem:[%s2 + $0xa8] sm:$0xf]
  %v812 = vld [vmem:[%s2 + $0xac] sm:$0xf]
  %v813 = vld [vmem:[%s2 + $0xb0] sm:$0xf]
  %v814 = vld [vmem:[%s2 + $0xb4] sm:$0xf]
  %v815 = vld [vmem:[%s2 + $0xb8] sm:$0xf]
  %v816 = vld [vmem:[%s2 + $0xbc] sm:$0xf]
  %v817 = vld [vmem:[%s2 + $0xc0] sm:$0xf]
  %v818 = vld [vmem:[%s2 + $0xc4] sm:$0xf]
  %v819 = vld [vmem:[%s2 + $0xc8] sm:$0xf]
  %v820 = vld [vmem:[%s2 + $0xcc] sm:$0xf]
  %v821 = vld [vmem:[%s2 + $0xd0] sm:$0xf]
  %v822 = vld [vmem:[%s2 + $0xd4] sm:$0xf]
  %v823 = vld [vmem:[%s2 + $0xd8] sm:$0xf]
  %v824 = vld [vmem:[%s2 + $0xdc] sm:$0xf]
  %v825 = vld [vmem:[%s2 + $0xe0] sm:$0xf]
  %v826 = vld [vmem:[%s2 + $0xe4] sm:$0xf]
  %v827 = vld [vmem:[%s2 + $0xe8] sm:$0xf]
  %v828 = vld [vmem:[%s2 + $0xec] sm:$0xf]
  %v829 = vld [vmem:[%s2 + $0xf0] sm:$0xf]
  %v830 = vld [vmem:[%s2 + $0xf4] sm:$0xf]
  %v831 = vld [vmem:[%s2 + $0xf8] sm:$0xf]
  %v832 = vld [vmem:[%s2 + $0xfc] sm:$0xf]
  %v833 = vld [vmem:[%s3] sm:$0x1]
  %v835 = vperm.slane %v833, 0
  %v901 = vunpack.c.l.b16 %v769
  %v902 = vunpack.c.l.b16 %v770
  %v903 = vunpack.c.l.b16 %v771
  %v904 = vunpack.c.l.b16 %v772
  %v905 = vunpack.c.l.b16 %v773
  %v906 = vunpack.c.l.b16 %v774
  %v907 = vunpack.c.l.b16 %v775
  %v908 = vunpack.c.l.b16 %v776
  %v909 = vunpack.c.l.b16 %v777
  %v910 = vunpack.c.l.b16 %v778
  %v911 = vunpack.c.l.b16 %v779
  %v912 = vunpack.c.l.b16 %v780
  %v913 = vunpack.c.l.b16 %v781
  %v914 = vunpack.c.l.b16 %v782
  %v915 = vunpack.c.l.b16 %v783
  %v916 = vunpack.c.l.b16 %v784
  %v917 = vunpack.c.l.b16 %v785
  %v918 = vunpack.c.l.b16 %v786
  %v919 = vunpack.c.l.b16 %v787
  %v920 = vunpack.c.l.b16 %v788
  %v921 = vunpack.c.l.b16 %v789
  %v922 = vunpack.c.l.b16 %v790
  %v923 = vunpack.c.l.b16 %v791
  %v924 = vunpack.c.l.b16 %v792
  %v925 = vunpack.c.l.b16 %v793
  %v926 = vunpack.c.l.b16 %v794
  %v927 = vunpack.c.l.b16 %v795
  %v928 = vunpack.c.l.b16 %v796
  %v929 = vunpack.c.l.b16 %v797
  %v930 = vunpack.c.l.b16 %v798
  %v931 = vunpack.c.l.b16 %v799
  %v932 = vunpack.c.l.b16 %v800
  %v933 = vunpack.c.l.b16 %v801
  %v934 = vunpack.c.l.b16 %v802
  %v935 = vunpack.c.l.b16 %v803
  %v936 = vunpack.c.l.b16 %v804
  %v937 = vunpack.c.l.b16 %v805
  %v938 = vunpack.c.l.b16 %v806
  %v939 = vunpack.c.l.b16 %v807
  %v940 = vunpack.c.l.b16 %v808
  %v941 = vunpack.c.l.b16 %v809
  %v942 = vunpack.c.l.b16 %v810
  %v943 = vunpack.c.l.b16 %v811
  %v944 = vunpack.c.l.b16 %v812
  %v945 = vunpack.c.l.b16 %v813
  %v946 = vunpack.c.l.b16 %v814
  %v947 = vunpack.c.l.b16 %v815
  %v948 = vunpack.c.l.b16 %v816
  %v949 = vunpack.c.l.b16 %v817
  %v950 = vunpack.c.l.b16 %v818
  %v951 = vunpack.c.l.b16 %v819
  %v952 = vunpack.c.l.b16 %v820
  %v953 = vunpack.c.l.b16 %v821
  %v954 = vunpack.c.l.b16 %v822
  %v955 = vunpack.c.l.b16 %v823
  %v956 = vunpack.c.l.b16 %v824
  %v957 = vunpack.c.l.b16 %v825
  %v958 = vunpack.c.l.b16 %v826
  %v959 = vunpack.c.l.b16 %v827
  %v960 = vunpack.c.l.b16 %v828
  %v961 = vunpack.c.l.b16 %v829
  %v962 = vunpack.c.l.b16 %v830
  %v963 = vunpack.c.l.b16 %v831
  %v964 = vunpack.c.l.b16 %v832
  %v965 = vpack.c.b16 %v902, %v901
  %v966 = vpack.c.b16 %v904, %v903
  %v967 = vpack.c.b16 %v906, %v905
  %v968 = vpack.c.b16 %v908, %v907
  %v969 = vpack.c.b16 %v910, %v909
  %v970 = vpack.c.b16 %v912, %v911
  %v971 = vpack.c.b16 %v914, %v913
  %v972 = vpack.c.b16 %v916, %v915
  %v973 = vpack.c.b16 %v918, %v917
  %v974 = vpack.c.b16 %v920, %v919
  %v975 = vpack.c.b16 %v922, %v921
  %v976 = vpack.c.b16 %v924, %v923
  %v977 = vpack.c.b16 %v926, %v925
  %v978 = vpack.c.b16 %v928, %v927
  %v979 = vpack.c.b16 %v930, %v929
  %v980 = vpack.c.b16 %v932, %v931
  %v981 = vpack.c.b16 %v934, %v933
  %v982 = vpack.c.b16 %v936, %v935
  %v983 = vpack.c.b16 %v938, %v937
  %v984 = vpack.c.b16 %v940, %v939
  %v985 = vpack.c.b16 %v942, %v941
  %v986 = vpack.c.b16 %v944, %v943
  %v987 = vpack.c.b16 %v946, %v945
  %v988 = vpack.c.b16 %v948, %v947
  %v989 = vpack.c.b16 %v950, %v949
  %v990 = vpack.c.b16 %v952, %v951
  %v991 = vpack.c.b16 %v954, %v953
  %v992 = vpack.c.b16 %v956, %v955
  %v993 = vpack.c.b16 %v958, %v957
  %v994 = vpack.c.b16 %v960, %v959
  %v995 = vpack.c.b16 %v962, %v961
  %v996 = vpack.c.b16 %v964, %v963
  %1029 = vmatpush.bf16.msra.mxu0 %v972
  %1030 = vmatpush.bf16.msra.mxu0 %v971
  %1031 = vmatpush.bf16.msra.mxu0 %v970
  %1032 = vmatpush.bf16.msra.mxu0 %v969
  %1033 = vmatpush.bf16.msra.mxu0 %v968
  %1034 = vmatpush.bf16.msra.mxu0 %v967
  %1035 = vmatpush.bf16.msra.mxu0 %v966
  %1036 = vmatpush.bf16.msra.mxu0 %v965
  %1037 = vmatmul.bf16.gmra.mxu0 %v761
  %v1038 = vpop.f32.mrf.mxu0
  %v1039 = vadd.f32 %v835, %v1038
  %v1040 = vpop.f32.mrf.mxu0
  %v1041 = vadd.f32 %v835, %v1040
  %1042 = vmatmul.bf16.gmra.mxu0 %v765
  %v1043 = vpop.f32.mrf.mxu0
  %v1044 = vadd.f32 %v835, %v1043
  %v1045 = vpop.f32.mrf.mxu0
  %v1046 = vadd.f32 %v835, %v1045
  %1047 = vdwg.mxu0
  %1048 = vmatpush.bf16.msra.mxu0 %v980
  %1049 = vmatpush.bf16.msra.mxu0 %v979
  %1050 = vmatpush.bf16.msra.mxu0 %v978
  %1051 = vmatpush.bf16.msra.mxu0 %v977
  %1052 = vmatpush.bf16.msra.mxu0 %v976
  %1053 = vmatpush.bf16.msra.mxu0 %v975
  %1054 = vmatpush.bf16.msra.mxu0 %v974
  %1055 = vmatpush.bf16.msra.mxu0 %v973
  %1056 = vmatmul.bf16.gmra.mxu0 %v762
  %v1057 = vpop.f32.mrf.mxu0
  %v1058 = vadd.f32 %v1039, %v1057
  %v1059 = vpop.f32.mrf.mxu0
  %v1060 = vadd.f32 %v1041, %v1059
  %1061 = vmatmul.bf16.gmra.mxu0 %v766
  %v1062 = vpop.f32.mrf.mxu0
  %v1063 = vadd.f32 %v1044, %v1062
  %v1064 = vpop.f32.mrf.mxu0
  %v1065 = vadd.f32 %v1046, %v1064
  %1066 = vdwg.mxu0
  %1067 = vmatpush.bf16.msra.mxu0 %v988
  %1068 = vmatpush.bf16.msra.mxu0 %v987
  %1069 = vmatpush.bf16.msra.mxu0 %v986
  %1070 = vmatpush.bf16.msra.mxu0 %v985
  %1071 = vmatpush.bf16.msra.mxu0 %v984
  %1072 = vmatpush.bf16.msra.mxu0 %v983
  %1073 = vmatpush.bf16.msra.mxu0 %v982
  %1074 = vmatpush.bf16.msra.mxu0 %v981
  %1075 = vmatmul.bf16.gmra.mxu0 %v763
  %v1076 = vpop.f32.mrf.mxu0
  %v1077 = vadd.f32 %v1058, %v1076
  %v1078 = vpop.f32.mrf.mxu0
  %v1079 = vadd.f32 %v1060, %v1078
  %1080 = vmatmul.bf16.gmra.mxu0 %v767
  %v1081 = vpop.f32.mrf.mxu0
  %v1082 = vadd.f32 %v1063, %v1081
  %v1083 = vpop.f32.mrf.mxu0
  %v1084 = vadd.f32 %v1065, %v1083
  %1085 = vdwg.mxu0
  %1086 = vmatpush.bf16.msra.mxu0 %v996
  %1087 = vmatpush.bf16.msra.mxu0 %v995
  %1088 = vmatpush.bf16.msra.mxu0 %v994
  %1089 = vmatpush.bf16.msra.mxu0 %v993
  %1090 = vmatpush.bf16.msra.mxu0 %v992
  %1091 = vmatpush.bf16.msra.mxu0 %v991
  %1092 = vmatpush.bf16.msra.mxu0 %v990
  %1093 = vmatpush.bf16.msra.mxu0 %v989
  %1094 = vmatmul.bf16.gmra.mxu0 %v764
  %v1095 = vpop.f32.mrf.mxu0
  %v1096 = vadd.f32 %v1077, %v1095
  %v1097 = vpop.f32.mrf.mxu0
  %v1098 = vadd.f32 %v1079, %v1097
  %1099 = vmatmul.bf16.gmra.mxu0 %v768
  %v1100 = vpop.f32.mrf.mxu0
  %v1101 = vadd.f32 %v1082, %v1100
  %v1102 = vpop.f32.mrf.mxu0
  %v1103 = vadd.f32 %v1084, %v1102
  %1104 = vdwg.mxu0
  %v1105 = vadd.f32 %v1096, %v1098
  %v1106 = vadd.f32 %v1105, %v1101
  %v1107 = vadd.f32 %v1106, %v1103
  %v1108 = vrot.slane %v1107, 4
  %v1109 = vadd.f32 %v1107, %v1108
  %v1110 = vrot.slane %v1109, 2
  %v1111 = vadd.f32 %v1109, %v1110
  %v1112 = vrot.slane %v1111, 1
  %v1113 = vadd.f32 %v1111, %v1112
  %v1114 = vmul.f32 %v1096, %v1096
  %v1115 = vmul.f32 %v1098, %v1098
  %v1116 = vmul.f32 %v1101, %v1101
  %v1117 = vmul.f32 %v1103, %v1103
  %v1118 = vadd.f32 %v1114, %v1115
  %v1119 = vadd.f32 %v1118, %v1116
  %v1120 = vadd.f32 %v1119, %v1117
  %v1121 = vrot.slane %v1120, 4
  %v1122 = vadd.f32 %v1120, %v1121
  %v1123 = vrot.slane %v1122, 2
  %v1124 = vadd.f32 %v1122, %v1123
  %v1125 = vrot.slane %v1124, 1
  %v1126 = vadd.f32 %v1124, %v1125
  %v1127 = vmul.f32 %v1113, 0.03125
  %v1128 = vmul.f32 %v1126, 0.03125
  %v1129 = vmul.f32 %v1127, %v1127
  %v1130 = vsub.f32 %v1128, %v1129
  %v1131 = vsub.f32 %v1096, %v1127
  %v1132 = vsub.f32 %v1098, %v1127
  %v1133 = vsub.f32 %v1101, %v1127
  %v1134 = vsub.f32 %v1103, %v1127
  %v1135 = vadd.f32 %v1130, 1e-05
  %v1136 = vrsqrt.pop %v1135
  %v1137 = vmul.f32 %v1136, %v1135
  %v1138 = vmul.f32 %v1137, %v1136
  %v1139 = vmul.f32 0.5, %v1138
  %v1140 = vsub.f32 1.5, %v1139
  %v1141 = vmul.f32 %v1136, %v1140
  %vm1142 = vweird.f32 %v1135
  %vm1143 = vweird.f32 %v1136
  %vm1144 = vmor %vm1142, %vm1143
  %v1145 = vsel %vm1144, %v1136, %v1141
  %v1146 = vmul.f32 %v1131, %v1145
  %v1147 = vmul.f32 %v1132, %v1145
  %v1148 = vmul.f32 %v1133, %v1145
  %v1149 = vmul.f32 %v1134, %v1145
  %vm1150 = vcmp.ge.f32.partialorder %v1146, 0.0
  %vm1151 = vcmp.ge.f32.partialorder %v1147, 0.0
  %vm1152 = vcmp.ge.f32.partialorder %v1148, 0.0
  %vm1153 = vcmp.ge.f32.partialorder %v1149, 0.0
  %v1154 = vmul.f32 %v1146, 0.3
  %v1155 = vmul.f32 %v1147, 0.3
  %v1156 = vmul.f32 %v1148, 0.3
  %v1157 = vmul.f32 %v1149, 0.3
  %v1158 = vsel %vm1150, %v1146, %v1154
  %v1159 = vsel %vm1151, %v1147, %v1155
  %v1160 = vsel %vm1152, %v1148, %v1156
  %v1161 = vsel %vm1153, %v1149, %v1157
  %1162 = vst [vmem:[#allocation2] sm:$0xff] %v1158
  %1163 = vst [vmem:[#allocation2 + $0x8] sm:$0xff] %v1159
  %1164 = vst [vmem:[#allocation2 + $0x10] sm:$0xff] %v1160
  %1165 = vst [vmem:[#allocation2 + $0x18] sm:$0xff] %v1161
  %v1166 = vld [vmem:[#allocation2] sm:$0x3]
  %v1167 = vpack.c.bf16 %v1166, %v1166
  %v1168 = vld [vmem:[%s4] sm:$0xff]
  %v1169 = vld [vmem:[%s4 + $0x8] sm:$0xff]
  %v1170 = vld [vmem:[%s4 + $0x10] sm:$0xff]
  %v1171 = vld [vmem:[%s4 + $0x18] sm:$0xff]
  %v1172 = vld [vmem:[%s4 + $0x20] sm:$0xff]
  %v1173 = vld [vmem:[%s4 + $0x28] sm:$0xff]
  %v1174 = vld [vmem:[%s4 + $0x30] sm:$0xff]
  %v1175 = vld [vmem:[%s4 + $0x38] sm:$0xff]
  %v1176 = vld [vmem:[%s4 + $0x40] sm:$0xff]
  %v1177 = vld [vmem:[%s4 + $0x48] sm:$0xff]
  %v1178 = vld [vmem:[%s4 + $0x50] sm:$0xff]
  %v1179 = vld [vmem:[%s4 + $0x58] sm:$0xff]
  %v1180 = vld [vmem:[%s4 + $0x60] sm:$0xff]
  %v1181 = vld [vmem:[%s4 + $0x68] sm:$0xff]
  %v1182 = vld [vmem:[%s4 + $0x70] sm:$0xff]
  %v1183 = vld [vmem:[%s4 + $0x78] sm:$0xff]
  %v1184 = vld [vmem:[%s4 + $0x80] sm:$0xff]
  %v1185 = vld [vmem:[%s4 + $0x88] sm:$0xff]
  %v1186 = vld [vmem:[%s4 + $0x90] sm:$0xff]
  %v1187 = vld [vmem:[%s4 + $0x98] sm:$0xff]
  %v1188 = vld [vmem:[%s4 + $0xa0] sm:$0xff]
  %v1189 = vld [vmem:[%s4 + $0xa8] sm:$0xff]
  %v1190 = vld [vmem:[%s4 + $0xb0] sm:$0xff]
  %v1191 = vld [vmem:[%s4 + $0xb8] sm:$0xff]
  %v1192 = vld [vmem:[%s4 + $0xc0] sm:$0xff]
  %v1193 = vld [vmem:[%s4 + $0xc8] sm:$0xff]
  %v1194 = vld [vmem:[%s4 + $0xd0] sm:$0xff]
  %v1195 = vld [vmem:[%s4 + $0xd8] sm:$0xff]
  %v1196 = vld [vmem:[%s4 + $0xe0] sm:$0xff]
  %v1197 = vld [vmem:[%s4 + $0xe8] sm:$0xff]
  %v1198 = vld [vmem:[%s4 + $0xf0] sm:$0xff]
  %v1199 = vld [vmem:[%s4 + $0xf8] sm:$0xff]
  %v1200 = vld [vmem:[#allocation2 + $0x2] sm:$0x3]
  %v1201 = vpack.c.bf16 %v1200, %v1200
  %s1202 = scalar_lea.vmem %s4, 256
  %v1203 = vld [vmem:[%s1202] sm:$0xff]
  %v1204 = vld [vmem:[%s1202 + $0x8] sm:$0xff]
  %v1205 = vld [vmem:[%s1202 + $0x10] sm:$0xff]
  %v1206 = vld [vmem:[%s1202 + $0x18] sm:$0xff]
  %v1207 = vld [vmem:[%s1202 + $0x20] sm:$0xff]
  %v1208 = vld [vmem:[%s1202 + $0x28] sm:$0xff]
  %v1209 = vld [vmem:[%s1202 + $0x30] sm:$0xff]
  %v1210 = vld [vmem:[%s1202 + $0x38] sm:$0xff]
  %v1211 = vld [vmem:[%s1202 + $0x40] sm:$0xff]
  %v1212 = vld [vmem:[%s1202 + $0x48] sm:$0xff]
  %v1213 = vld [vmem:[%s1202 + $0x50] sm:$0xff]
  %v1214 = vld [vmem:[%s1202 + $0x58] sm:$0xff]
  %v1215 = vld [vmem:[%s1202 + $0x60] sm:$0xff]
  %v1216 = vld [vmem:[%s1202 + $0x68] sm:$0xff]
  %v1217 = vld [vmem:[%s1202 + $0x70] sm:$0xff]
  %v1218 = vld [vmem:[%s1202 + $0x78] sm:$0xff]
  %v1219 = vld [vmem:[%s1202 + $0x80] sm:$0xff]
  %v1220 = vld [vmem:[%s1202 + $0x88] sm:$0xff]
  %v1221 = vld [vmem:[%s1202 + $0x90] sm:$0xff]
  %v1222 = vld [vmem:[%s1202 + $0x98] sm:$0xff]
  %v1223 = vld [vmem:[%s1202 + $0xa0] sm:$0xff]
  %v1224 = vld [vmem:[%s1202 + $0xa8] sm:$0xff]
  %v1225 = vld [vmem:[%s1202 + $0xb0] sm:$0xff]
  %v1226 = vld [vmem:[%s1202 + $0xb8] sm:$0xff]
  %v1227 = vld [vmem:[%s1202 + $0xc0] sm:$0xff]
  %v1228 = vld [vmem:[%s1202 + $0xc8] sm:$0xff]
  %v1229 = vld [vmem:[%s1202 + $0xd0] sm:$0xff]
  %v1230 = vld [vmem:[%s1202 + $0xd8] sm:$0xff]
  %v1231 = vld [vmem:[%s1202 + $0xe0] sm:$0xff]
  %v1232 = vld [vmem:[%s1202 + $0xe8] sm:$0xff]
  %v1233 = vld [vmem:[%s1202 + $0xf0] sm:$0xff]
  %v1234 = vld [vmem:[%s1202 + $0xf8] sm:$0xff]
  %v1267 = vunpack.c.l.b16 %v1203
  %v1268 = vunpack.c.h.b16 %v1203
  %v1269 = vunpack.c.l.b16 %v1204
  %v1270 = vunpack.c.h.b16 %v1204
  %v1271 = vunpack.c.l.b16 %v1205
  %v1272 = vunpack.c.h.b16 %v1205
  %v1273 = vunpack.c.l.b16 %v1206
  %v1274 = vunpack.c.h.b16 %v1206
  %v1275 = vunpack.c.l.b16 %v1207
  %v1276 = vunpack.c.h.b16 %v1207
  %v1277 = vunpack.c.l.b16 %v1208
  %v1278 = vunpack.c.h.b16 %v1208
  %v1279 = vunpack.c.l.b16 %v1209
  %v1280 = vunpack.c.h.b16 %v1209
  %v1281 = vunpack.c.l.b16 %v1210
  %v1282 = vunpack.c.h.b16 %v1210
  %v1283 = vunpack.c.l.b16 %v1211
  %v1284 = vunpack.c.h.b16 %v1211
  %v1285 = vunpack.c.l.b16 %v1212
  %v1286 = vunpack.c.h.b16 %v1212
  %v1287 = vunpack.c.l.b16 %v1213
  %v1288 = vunpack.c.h.b16 %v1213
  %v1289 = vunpack.c.l.b16 %v1214
  %v1290 = vunpack.c.h.b16 %v1214
  %v1291 = vunpack.c.l.b16 %v1215
  %v1292 = vunpack.c.h.b16 %v1215
  %v1293 = vunpack.c.l.b16 %v1216
  %v1294 = vunpack.c.h.b16 %v1216
  %v1295 = vunpack.c.l.b16 %v1217
  %v1296 = vunpack.c.h.b16 %v1217
  %v1297 = vunpack.c.l.b16 %v1218
  %v1298 = vunpack.c.h.b16 %v1218
  %v1299 = vunpack.c.l.b16 %v1219
  %v1300 = vunpack.c.h.b16 %v1219
  %v1301 = vunpack.c.l.b16 %v1220
  %v1302 = vunpack.c.h.b16 %v1220
  %v1303 = vunpack.c.l.b16 %v1221
  %v1304 = vunpack.c.h.b16 %v1221
  %v1305 = vunpack.c.l.b16 %v1222
  %v1306 = vunpack.c.h.b16 %v1222
  %v1307 = vunpack.c.l.b16 %v1223
  %v1308 = vunpack.c.h.b16 %v1223
  %v1309 = vunpack.c.l.b16 %v1224
  %v1310 = vunpack.c.h.b16 %v1224
  %v1311 = vunpack.c.l.b16 %v1225
  %v1312 = vunpack.c.h.b16 %v1225
  %v1313 = vunpack.c.l.b16 %v1226
  %v1314 = vunpack.c.h.b16 %v1226
  %v1315 = vunpack.c.l.b16 %v1227
  %v1316 = vunpack.c.h.b16 %v1227
  %v1317 = vunpack.c.l.b16 %v1228
  %v1318 = vunpack.c.h.b16 %v1228
  %v1319 = vunpack.c.l.b16 %v1229
  %v1320 = vunpack.c.h.b16 %v1229
  %v1321 = vunpack.c.l.b16 %v1230
  %v1322 = vunpack.c.h.b16 %v1230
  %v1323 = vunpack.c.l.b16 %v1231
  %v1324 = vunpack.c.h.b16 %v1231
  %v1325 = vunpack.c.l.b16 %v1232
  %v1326 = vunpack.c.h.b16 %v1232
  %v1327 = vunpack.c.l.b16 %v1233
  %v1328 = vunpack.c.h.b16 %v1233
  %v1329 = vunpack.c.l.b16 %v1234
  %v1330 = vunpack.c.h.b16 %v1234
  %v1331 = vpack.c.b16 %v1271, %v1267
  %v1332 = vpack.c.b16 %v1272, %v1268
  %v1333 = vpack.c.b16 %v1273, %v1269
  %v1334 = vpack.c.b16 %v1274, %v1270
  %v1335 = vpack.c.b16 %v1279, %v1275
  %v1336 = vpack.c.b16 %v1280, %v1276
  %v1337 = vpack.c.b16 %v1281, %v1277
  %v1338 = vpack.c.b16 %v1282, %v1278
  %v1339 = vpack.c.b16 %v1287, %v1283
  %v1340 = vpack.c.b16 %v1288, %v1284
  %v1341 = vpack.c.b16 %v1289, %v1285
  %v1342 = vpack.c.b16 %v1290, %v1286
  %v1343 = vpack.c.b16 %v1295, %v1291
  %v1344 = vpack.c.b16 %v1296, %v1292
  %v1345 = vpack.c.b16 %v1297, %v1293
  %v1346 = vpack.c.b16 %v1298, %v1294
  %v1347 = vpack.c.b16 %v1303, %v1299
  %v1348 = vpack.c.b16 %v1304, %v1300
  %v1349 = vpack.c.b16 %v1305, %v1301
  %v1350 = vpack.c.b16 %v1306, %v1302
  %v1351 = vpack.c.b16 %v1311, %v1307
  %v1352 = vpack.c.b16 %v1312, %v1308
  %v1353 = vpack.c.b16 %v1313, %v1309
  %v1354 = vpack.c.b16 %v1314, %v1310
  %v1355 = vpack.c.b16 %v1319, %v1315
  %v1356 = vpack.c.b16 %v1320, %v1316
  %v1357 = vpack.c.b16 %v1321, %v1317
  %v1358 = vpack.c.b16 %v1322, %v1318
  %v1359 = vpack.c.b16 %v1327, %v1323
  %v1360 = vpack.c.b16 %v1328, %v1324
  %v1361 = vpack.c.b16 %v1329, %v1325
  %v1362 = vpack.c.b16 %v1330, %v1326
  %1395 = vmatpush.bf16.msra.mxu0 %v1359
  %1396 = vmatpush.bf16.msra.mxu0 %v1355
  %1397 = vmatpush.bf16.msra.mxu0 %v1351
  %1398 = vmatpush.bf16.msra.mxu0 %v1347
  %1399 = vmatpush.bf16.msra.mxu0 %v1343
  %1400 = vmatpush.bf16.msra.mxu0 %v1339
  %1401 = vmatpush.bf16.msra.mxu0 %v1335
  %1402 = vmatpush.bf16.msra.mxu0 %v1331
  %1403 = vmatmul.bf16.gmra.mxu0 %v1201
  %v1404 = vpop.f32.mrf.mxu0
  %v1405 = vadd.f32 0.0, %v1404
  %v1406 = vpop.f32.mrf.mxu0
  %1407 = vdwg.mxu0
  %1408 = vmatpush.bf16.msra.mxu0 %v1360
  %1409 = vmatpush.bf16.msra.mxu0 %v1356
  %1410 = vmatpush.bf16.msra.mxu0 %v1352
  %1411 = vmatpush.bf16.msra.mxu0 %v1348
  %1412 = vmatpush.bf16.msra.mxu0 %v1344
  %1413 = vmatpush.bf16.msra.mxu0 %v1340
  %1414 = vmatpush.bf16.msra.mxu0 %v1336
  %1415 = vmatpush.bf16.msra.mxu0 %v1332
  %1416 = vmatmul.bf16.gmra.mxu0 %v1201
  %v1417 = vpop.f32.mrf.mxu0
  %v1418 = vadd.f32 0.0, %v1417
  %v1419 = vpop.f32.mrf.mxu0
  %1420 = vdwg.mxu0
  %1421 = vmatpush.bf16.msra.mxu0 %v1361
  %1422 = vmatpush.bf16.msra.mxu0 %v1357
  %1423 = vmatpush.bf16.msra.mxu0 %v1353
  %1424 = vmatpush.bf16.msra.mxu0 %v1349
  %1425 = vmatpush.bf16.msra.mxu0 %v1345
  %1426 = vmatpush.bf16.msra.mxu0 %v1341
  %1427 = vmatpush.bf16.msra.mxu0 %v1337
  %1428 = vmatpush.bf16.msra.mxu0 %v1333
  %1429 = vmatmul.bf16.gmra.mxu0 %v1201
  %v1430 = vpop.f32.mrf.mxu0
  %v1431 = vadd.f32 0.0, %v1430
  %v1432 = vpop.f32.mrf.mxu0
  %1433 = vdwg.mxu0
  %1434 = vmatpush.bf16.msra.mxu0 %v1362
  %1435 = vmatpush.bf16.msra.mxu0 %v1358
  %1436 = vmatpush.bf16.msra.mxu0 %v1354
  %1437 = vmatpush.bf16.msra.mxu0 %v1350
  %1438 = vmatpush.bf16.msra.mxu0 %v1346
  %1439 = vmatpush.bf16.msra.mxu0 %v1342
  %1440 = vmatpush.bf16.msra.mxu0 %v1338
  %1441 = vmatpush.bf16.msra.mxu0 %v1334
  %1442 = vmatmul.bf16.gmra.mxu0 %v1201
  %v1443 = vpop.f32.mrf.mxu0
  %v1444 = vadd.f32 0.0, %v1443
  %v1445 = vpop.f32.mrf.mxu0
  %1446 = vdwg.mxu0
  %v1479 = vunpack.c.l.b16 %v1168
  %v1480 = vunpack.c.h.b16 %v1168
  %v1481 = vunpack.c.l.b16 %v1169
  %v1482 = vunpack.c.h.b16 %v1169
  %v1483 = vunpack.c.l.b16 %v1170
  %v1484 = vunpack.c.h.b16 %v1170
  %v1485 = vunpack.c.l.b16 %v1171
  %v1486 = vunpack.c.h.b16 %v1171
  %v1487 = vunpack.c.l.b16 %v1172
  %v1488 = vunpack.c.h.b16 %v1172
  %v1489 = vunpack.c.l.b16 %v1173
  %v1490 = vunpack.c.h.b16 %v1173
  %v1491 = vunpack.c.l.b16 %v1174
  %v1492 = vunpack.c.h.b16 %v1174
  %v1493 = vunpack.c.l.b16 %v1175
  %v1494 = vunpack.c.h.b16 %v1175
  %v1495 = vunpack.c.l.b16 %v1176
  %v1496 = vunpack.c.h.b16 %v1176
  %v1497 = vunpack.c.l.b16 %v1177
  %v1498 = vunpack.c.h.b16 %v1177
  %v1499 = vunpack.c.l.b16 %v1178
  %v1500 = vunpack.c.h.b16 %v1178
  %v1501 = vunpack.c.l.b16 %v1179
  %v1502 = vunpack.c.h.b16 %v1179
  %v1503 = vunpack.c.l.b16 %v1180
  %v1504 = vunpack.c.h.b16 %v1180
  %v1505 = vunpack.c.l.b16 %v1181
  %v1506 = vunpack.c.h.b16 %v1181
  %v1507 = vunpack.c.l.b16 %v1182
  %v1508 = vunpack.c.h.b16 %v1182
  %v1509 = vunpack.c.l.b16 %v1183
  %v1510 = vunpack.c.h.b16 %v1183
  %v1511 = vunpack.c.l.b16 %v1184
  %v1512 = vunpack.c.h.b16 %v1184
  %v1513 = vunpack.c.l.b16 %v1185
  %v1514 = vunpack.c.h.b16 %v1185
  %v1515 = vunpack.c.l.b16 %v1186
  %v1516 = vunpack.c.h.b16 %v1186
  %v1517 = vunpack.c.l.b16 %v1187
  %v1518 = vunpack.c.h.b16 %v1187
  %v1519 = vunpack.c.l.b16 %v1188
  %v1520 = vunpack.c.h.b16 %v1188
  %v1521 = vunpack.c.l.b16 %v1189
  %v1522 = vunpack.c.h.b16 %v1189
  %v1523 = vunpack.c.l.b16 %v1190
  %v1524 = vunpack.c.h.b16 %v1190
  %v1525 = vunpack.c.l.b16 %v1191
  %v1526 = vunpack.c.h.b16 %v1191
  %v1527 = vunpack.c.l.b16 %v1192
  %v1528 = vunpack.c.h.b16 %v1192
  %v1529 = vunpack.c.l.b16 %v1193
  %v1530 = vunpack.c.h.b16 %v1193
  %v1531 = vunpack.c.l.b16 %v1194
  %v1532 = vunpack.c.h.b16 %v1194
  %v1533 = vunpack.c.l.b16 %v1195
  %v1534 = vunpack.c.h.b16 %v1195
  %v1535 = vunpack.c.l.b16 %v1196
  %v1536 = vunpack.c.h.b16 %v1196
  %v1537 = vunpack.c.l.b16 %v1197
  %v1538 = vunpack.c.h.b16 %v1197
  %v1539 = vunpack.c.l.b16 %v1198
  %v1540 = vunpack.c.h.b16 %v1198
  %v1541 = vunpack.c.l.b16 %v1199
  %v1542 = vunpack.c.h.b16 %v1199
  %v1543 = vpack.c.b16 %v1483, %v1479
  %v1544 = vpack.c.b16 %v1484, %v1480
  %v1545 = vpack.c.b16 %v1485, %v1481
  %v1546 = vpack.c.b16 %v1486, %v1482
  %v1547 = vpack.c.b16 %v1491, %v1487
  %v1548 = vpack.c.b16 %v1492, %v1488
  %v1549 = vpack.c.b16 %v1493, %v1489
  %v1550 = vpack.c.b16 %v1494, %v1490
  %v1551 = vpack.c.b16 %v1499, %v1495
  %v1552 = vpack.c.b16 %v1500, %v1496
  %v1553 = vpack.c.b16 %v1501, %v1497
  %v1554 = vpack.c.b16 %v1502, %v1498
  %v1555 = vpack.c.b16 %v1507, %v1503
  %v1556 = vpack.c.b16 %v1508, %v1504
  %v1557 = vpack.c.b16 %v1509, %v1505
  %v1558 = vpack.c.b16 %v1510, %v1506
  %v1559 = vpack.c.b16 %v1515, %v1511
  %v1560 = vpack.c.b16 %v1516, %v1512
  %v1561 = vpack.c.b16 %v1517, %v1513
  %v1562 = vpack.c.b16 %v1518, %v1514
  %v1563 = vpack.c.b16 %v1523, %v1519
  %v1564 = vpack.c.b16 %v1524, %v1520
  %v1565 = vpack.c.b16 %v1525, %v1521
  %v1566 = vpack.c.b16 %v1526, %v1522
  %v1567 = vpack.c.b16 %v1531, %v1527
  %v1568 = vpack.c.b16 %v1532, %v1528
  %v1569 = vpack.c.b16 %v1533, %v1529
  %v1570 = vpack.c.b16 %v1534, %v1530
  %v1571 = vpack.c.b16 %v1539, %v1535
  %v1572 = vpack.c.b16 %v1540, %v1536
  %v1573 = vpack.c.b16 %v1541, %v1537
  %v1574 = vpack.c.b16 %v1542, %v1538
  %1607 = vmatpush.bf16.msra.mxu0 %v1571
  %1608 = vmatpush.bf16.msra.mxu0 %v1567
  %1609 = vmatpush.bf16.msra.mxu0 %v1563
  %1610 = vmatpush.bf16.msra.mxu0 %v1559
  %1611 = vmatpush.bf16.msra.mxu0 %v1555
  %1612 = vmatpush.bf16.msra.mxu0 %v1551
  %1613 = vmatpush.bf16.msra.mxu0 %v1547
  %1614 = vmatpush.bf16.msra.mxu0 %v1543
  %1615 = vmatmul.bf16.gmra.mxu0 %v1167
  %v1616 = vpop.f32.mrf.mxu0
  %v1617 = vadd.f32 %v1405, %v1616
  %v1618 = vpop.f32.mrf.mxu0
  %1619 = vdwg.mxu0
  %1620 = vmatpush.bf16.msra.mxu0 %v1572
  %1621 = vmatpush.bf16.msra.mxu0 %v1568
  %1622 = vmatpush.bf16.msra.mxu0 %v1564
  %1623 = vmatpush.bf16.msra.mxu0 %v1560
  %1624 = vmatpush.bf16.msra.mxu0 %v1556
  %1625 = vmatpush.bf16.msra.mxu0 %v1552
  %1626 = vmatpush.bf16.msra.mxu0 %v1548
  %1627 = vmatpush.bf16.msra.mxu0 %v1544
  %1628 = vmatmul.bf16.gmra.mxu0 %v1167
  %v1629 = vpop.f32.mrf.mxu0
  %v1630 = vadd.f32 %v1418, %v1629
  %v1631 = vpop.f32.mrf.mxu0
  %1632 = vdwg.mxu0
  %1633 = vmatpush.bf16.msra.mxu0 %v1573
  %1634 = vmatpush.bf16.msra.mxu0 %v1569
  %1635 = vmatpush.bf16.msra.mxu0 %v1565
  %1636 = vmatpush.bf16.msra.mxu0 %v1561
  %1637 = vmatpush.bf16.msra.mxu0 %v1557
  %1638 = vmatpush.bf16.msra.mxu0 %v1553
  %1639 = vmatpush.bf16.msra.mxu0 %v1549
  %1640 = vmatpush.bf16.msra.mxu0 %v1545
  %1641 = vmatmul.bf16.gmra.mxu0 %v1167
  %v1642 = vpop.f32.mrf.mxu0
  %v1643 = vadd.f32 %v1431, %v1642
  %v1644 = vpop.f32.mrf.mxu0
  %1645 = vdwg.mxu0
  %1646 = vmatpush.bf16.msra.mxu0 %v1574
  %1647 = vmatpush.bf16.msra.mxu0 %v1570
  %1648 = vmatpush.bf16.msra.mxu0 %v1566
  %1649 = vmatpush.bf16.msra.mxu0 %v1562
  %1650 = vmatpush.bf16.msra.mxu0 %v1558
  %1651 = vmatpush.bf16.msra.mxu0 %v1554
  %1652 = vmatpush.bf16.msra.mxu0 %v1550
  %1653 = vmatpush.bf16.msra.mxu0 %v1546
  %1654 = vmatmul.bf16.gmra.mxu0 %v1167
  %v1655 = vpop.f32.mrf.mxu0
  %v1656 = vadd.f32 %v1444, %v1655
  %v1657 = vpop.f32.mrf.mxu0
  %1658 = vdwg.mxu0
  %v1659 = vld [vmem:[#allocation2 + $0x4] sm:$0x3]
  %v1660 = vpack.c.bf16 %v1659, %v1659
  %s1661 = scalar_lea.vmem %s4, 512
  %v1662 = vld [vmem:[%s1661] sm:$0xff]
  %v1663 = vld [vmem:[%s1661 + $0x8] sm:$0xff]
  %v1664 = vld [vmem:[%s1661 + $0x10] sm:$0xff]
  %v1665 = vld [vmem:[%s1661 + $0x18] sm:$0xff]
  %v1666 = vld [vmem:[%s1661 + $0x20] sm:$0xff]
  %v1667 = vld [vmem:[%s1661 + $0x28] sm:$0xff]
  %v1668 = vld [vmem:[%s1661 + $0x30] sm:$0xff]
  %v1669 = vld [vmem:[%s1661 + $0x38] sm:$0xff]
  %v1670 = vld [vmem:[%s1661 + $0x40] sm:$0xff]
  %v1671 = vld [vmem:[%s1661 + $0x48] sm:$0xff]
  %v1672 = vld [vmem:[%s1661 + $0x50] sm:$0xff]
  %v1673 = vld [vmem:[%s1661 + $0x58] sm:$0xff]
  %v1674 = vld [vmem:[%s1661 + $0x60] sm:$0xff]
  %v1675 = vld [vmem:[%s1661 + $0x68] sm:$0xff]
  %v1676 = vld [vmem:[%s1661 + $0x70] sm:$0xff]
  %v1677 = vld [vmem:[%s1661 + $0x78] sm:$0xff]
  %v1678 = vld [vmem:[%s1661 + $0x80] sm:$0xff]
  %v1679 = vld [vmem:[%s1661 + $0x88] sm:$0xff]
  %v1680 = vld [vmem:[%s1661 + $0x90] sm:$0xff]
  %v1681 = vld [vmem:[%s1661 + $0x98] sm:$0xff]
  %v1682 = vld [vmem:[%s1661 + $0xa0] sm:$0xff]
  %v1683 = vld [vmem:[%s1661 + $0xa8] sm:$0xff]
  %v1684 = vld [vmem:[%s1661 + $0xb0] sm:$0xff]
  %v1685 = vld [vmem:[%s1661 + $0xb8] sm:$0xff]
  %v1686 = vld [vmem:[%s1661 + $0xc0] sm:$0xff]
  %v1687 = vld [vmem:[%s1661 + $0xc8] sm:$0xff]
  %v1688 = vld [vmem:[%s1661 + $0xd0] sm:$0xff]
  %v1689 = vld [vmem:[%s1661 + $0xd8] sm:$0xff]
  %v1690 = vld [vmem:[%s1661 + $0xe0] sm:$0xff]
  %v1691 = vld [vmem:[%s1661 + $0xe8] sm:$0xff]
  %v1692 = vld [vmem:[%s1661 + $0xf0] sm:$0xff]
  %v1693 = vld [vmem:[%s1661 + $0xf8] sm:$0xff]
  %v1726 = vunpack.c.l.b16 %v1662
  %v1727 = vunpack.c.h.b16 %v1662
  %v1728 = vunpack.c.l.b16 %v1663
  %v1729 = vunpack.c.h.b16 %v1663
  %v1730 = vunpack.c.l.b16 %v1664
  %v1731 = vunpack.c.h.b16 %v1664
  %v1732 = vunpack.c.l.b16 %v1665
  %v1733 = vunpack.c.h.b16 %v1665
  %v1734 = vunpack.c.l.b16 %v1666
  %v1735 = vunpack.c.h.b16 %v1666
  %v1736 = vunpack.c.l.b16 %v1667
  %v1737 = vunpack.c.h.b16 %v1667
  %v1738 = vunpack.c.l.b16 %v1668
  %v1739 = vunpack.c.h.b16 %v1668
  %v1740 = vunpack.c.l.b16 %v1669
  %v1741 = vunpack.c.h.b16 %v1669
  %v1742 = vunpack.c.l.b16 %v1670
  %v1743 = vunpack.c.h.b16 %v1670
  %v1744 = vunpack.c.l.b16 %v1671
  %v1745 = vunpack.c.h.b16 %v1671
  %v1746 = vunpack.c.l.b16 %v1672
  %v1747 = vunpack.c.h.b16 %v1672
  %v1748 = vunpack.c.l.b16 %v1673
  %v1749 = vunpack.c.h.b16 %v1673
  %v1750 = vunpack.c.l.b16 %v1674
  %v1751 = vunpack.c.h.b16 %v1674
  %v1752 = vunpack.c.l.b16 %v1675
  %v1753 = vunpack.c.h.b16 %v1675
  %v1754 = vunpack.c.l.b16 %v1676
  %v1755 = vunpack.c.h.b16 %v1676
  %v1756 = vunpack.c.l.b16 %v1677
  %v1757 = vunpack.c.h.b16 %v1677
  %v1758 = vunpack.c.l.b16 %v1678
  %v1759 = vunpack.c.h.b16 %v1678
  %v1760 = vunpack.c.l.b16 %v1679
  %v1761 = vunpack.c.h.b16 %v1679
  %v1762 = vunpack.c.l.b16 %v1680
  %v1763 = vunpack.c.h.b16 %v1680
  %v1764 = vunpack.c.l.b16 %v1681
  %v1765 = vunpack.c.h.b16 %v1681
  %v1766 = vunpack.c.l.b16 %v1682
  %v1767 = vunpack.c.h.b16 %v1682
  %v1768 = vunpack.c.l.b16 %v1683
  %v1769 = vunpack.c.h.b16 %v1683
  %v1770 = vunpack.c.l.b16 %v1684
  %v1771 = vunpack.c.h.b16 %v1684
  %v1772 = vunpack.c.l.b16 %v1685
  %v1773 = vunpack.c.h.b16 %v1685
  %v1774 = vunpack.c.l.b16 %v1686
  %v1775 = vunpack.c.h.b16 %v1686
  %v1776 = vunpack.c.l.b16 %v1687
  %v1777 = vunpack.c.h.b16 %v1687
  %v1778 = vunpack.c.l.b16 %v1688
  %v1779 = vunpack.c.h.b16 %v1688
  %v1780 = vunpack.c.l.b16 %v1689
  %v1781 = vunpack.c.h.b16 %v1689
  %v1782 = vunpack.c.l.b16 %v1690
  %v1783 = vunpack.c.h.b16 %v1690
  %v1784 = vunpack.c.l.b16 %v1691
  %v1785 = vunpack.c.h.b16 %v1691
  %v1786 = vunpack.c.l.b16 %v1692
  %v1787 = vunpack.c.h.b16 %v1692
  %v1788 = vunpack.c.l.b16 %v1693
  %v1789 = vunpack.c.h.b16 %v1693
  %v1790 = vpack.c.b16 %v1730, %v1726
  %v1791 = vpack.c.b16 %v1731, %v1727
  %v1792 = vpack.c.b16 %v1732, %v1728
  %v1793 = vpack.c.b16 %v1733, %v1729
  %v1794 = vpack.c.b16 %v1738, %v1734
  %v1795 = vpack.c.b16 %v1739, %v1735
  %v1796 = vpack.c.b16 %v1740, %v1736
  %v1797 = vpack.c.b16 %v1741, %v1737
  %v1798 = vpack.c.b16 %v1746, %v1742
  %v1799 = vpack.c.b16 %v1747, %v1743
  %v1800 = vpack.c.b16 %v1748, %v1744
  %v1801 = vpack.c.b16 %v1749, %v1745
  %v1802 = vpack.c.b16 %v1754, %v1750
  %v1803 = vpack.c.b16 %v1755, %v1751
  %v1804 = vpack.c.b16 %v1756, %v1752
  %v1805 = vpack.c.b16 %v1757, %v1753
  %v1806 = vpack.c.b16 %v1762, %v1758
  %v1807 = vpack.c.b16 %v1763, %v1759
  %v1808 = vpack.c.b16 %v1764, %v1760
  %v1809 = vpack.c.b16 %v1765, %v1761
  %v1810 = vpack.c.b16 %v1770, %v1766
  %v1811 = vpack.c.b16 %v1771, %v1767
  %v1812 = vpack.c.b16 %v1772, %v1768
  %v1813 = vpack.c.b16 %v1773, %v1769
  %v1814 = vpack.c.b16 %v1778, %v1774
  %v1815 = vpack.c.b16 %v1779, %v1775
  %v1816 = vpack.c.b16 %v1780, %v1776
  %v1817 = vpack.c.b16 %v1781, %v1777
  %v1818 = vpack.c.b16 %v1786, %v1782
  %v1819 = vpack.c.b16 %v1787, %v1783
  %v1820 = vpack.c.b16 %v1788, %v1784
  %v1821 = vpack.c.b16 %v1789, %v1785
  %1854 = vmatpush.bf16.msra.mxu0 %v1818
  %1855 = vmatpush.bf16.msra.mxu0 %v1814
  %1856 = vmatpush.bf16.msra.mxu0 %v1810
  %1857 = vmatpush.bf16.msra.mxu0 %v1806
  %1858 = vmatpush.bf16.msra.mxu0 %v1802
  %1859 = vmatpush.bf16.msra.mxu0 %v1798
  %1860 = vmatpush.bf16.msra.mxu0 %v1794
  %1861 = vmatpush.bf16.msra.mxu0 %v1790
  %1862 = vmatmul.bf16.gmra.mxu0 %v1660
  %v1863 = vpop.f32.mrf.mxu0
  %v1864 = vadd.f32 0.0, %v1863
  %v1865 = vpop.f32.mrf.mxu0
  %1866 = vdwg.mxu0
  %1867 = vmatpush.bf16.msra.mxu0 %v1819
  %1868 = vmatpush.bf16.msra.mxu0 %v1815
  %1869 = vmatpush.bf16.msra.mxu0 %v1811
  %1870 = vmatpush.bf16.msra.mxu0 %v1807
  %1871 = vmatpush.bf16.msra.mxu0 %v1803
  %1872 = vmatpush.bf16.msra.mxu0 %v1799
  %1873 = vmatpush.bf16.msra.mxu0 %v1795
  %1874 = vmatpush.bf16.msra.mxu0 %v1791
  %1875 = vmatmul.bf16.gmra.mxu0 %v1660
  %v1876 = vpop.f32.mrf.mxu0
  %v1877 = vadd.f32 0.0, %v1876
  %v1878 = vpop.f32.mrf.mxu0
  %1879 = vdwg.mxu0
  %1880 = vmatpush.bf16.msra.mxu0 %v1820
  %1881 = vmatpush.bf16.msra.mxu0 %v1816
  %1882 = vmatpush.bf16.msra.mxu0 %v1812
  %1883 = vmatpush.bf16.msra.mxu0 %v1808
  %1884 = vmatpush.bf16.msra.mxu0 %v1804
  %1885 = vmatpush.bf16.msra.mxu0 %v1800
  %1886 = vmatpush.bf16.msra.mxu0 %v1796
  %1887 = vmatpush.bf16.msra.mxu0 %v1792
  %1888 = vmatmul.bf16.gmra.mxu0 %v1660
  %v1889 = vpop.f32.mrf.mxu0
  %v1890 = vadd.f32 0.0, %v1889
  %v1891 = vpop.f32.mrf.mxu0
  %1892 = vdwg.mxu0
  %1893 = vmatpush.bf16.msra.mxu0 %v1821
  %1894 = vmatpush.bf16.msra.mxu0 %v1817
  %1895 = vmatpush.bf16.msra.mxu0 %v1813
  %1896 = vmatpush.bf16.msra.mxu0 %v1809
  %1897 = vmatpush.bf16.msra.mxu0 %v1805
  %1898 = vmatpush.bf16.msra.mxu0 %v1801
  %1899 = vmatpush.bf16.msra.mxu0 %v1797
  %1900 = vmatpush.bf16.msra.mxu0 %v1793
  %1901 = vmatmul.bf16.gmra.mxu0 %v1660
  %v1902 = vpop.f32.mrf.mxu0
  %v1903 = vadd.f32 0.0, %v1902
  %v1904 = vpop.f32.mrf.mxu0
  %1905 = vdwg.mxu0
  %v1906 = vadd.f32 %v1617, %v1864
  %v1907 = vadd.f32 %v1630, %v1877
  %v1908 = vadd.f32 %v1643, %v1890
  %v1909 = vadd.f32 %v1656, %v1903
  %v1910 = vld [vmem:[#allocation2 + $0x6] sm:$0x3]
  %v1911 = vpack.c.bf16 %v1910, %v1910
  %s1912 = scalar_lea.vmem %s4, 768
  %v1913 = vld [vmem:[%s1912] sm:$0xff]
  %v1914 = vld [vmem:[%s1912 + $0x8] sm:$0xff]
  %v1915 = vld [vmem:[%s1912 + $0x10] sm:$0xff]
  %v1916 = vld [vmem:[%s1912 + $0x18] sm:$0xff]
  %v1917 = vld [vmem:[%s1912 + $0x20] sm:$0xff]
  %v1918 = vld [vmem:[%s1912 + $0x28] sm:$0xff]
  %v1919 = vld [vmem:[%s1912 + $0x30] sm:$0xff]
  %v1920 = vld [vmem:[%s1912 + $0x38] sm:$0xff]
  %v1921 = vld [vmem:[%s1912 + $0x40] sm:$0xff]
  %v1922 = vld [vmem:[%s1912 + $0x48] sm:$0xff]
  %v1923 = vld [vmem:[%s1912 + $0x50] sm:$0xff]
  %v1924 = vld [vmem:[%s1912 + $0x58] sm:$0xff]
  %v1925 = vld [vmem:[%s1912 + $0x60] sm:$0xff]
  %v1926 = vld [vmem:[%s1912 + $0x68] sm:$0xff]
  %v1927 = vld [vmem:[%s1912 + $0x70] sm:$0xff]
  %v1928 = vld [vmem:[%s1912 + $0x78] sm:$0xff]
  %v1929 = vld [vmem:[%s1912 + $0x80] sm:$0xff]
  %v1930 = vld [vmem:[%s1912 + $0x88] sm:$0xff]
  %v1931 = vld [vmem:[%s1912 + $0x90] sm:$0xff]
  %v1932 = vld [vmem:[%s1912 + $0x98] sm:$0xff]
  %v1933 = vld [vmem:[%s1912 + $0xa0] sm:$0xff]
  %v1934 = vld [vmem:[%s1912 + $0xa8] sm:$0xff]
  %v1935 = vld [vmem:[%s1912 + $0xb0] sm:$0xff]
  %v1936 = vld [vmem:[%s1912 + $0xb8] sm:$0xff]
  %v1937 = vld [vmem:[%s1912 + $0xc0] sm:$0xff]
  %v1938 = vld [vmem:[%s1912 + $0xc8] sm:$0xff]
  %v1939 = vld [vmem:[%s1912 + $0xd0] sm:$0xff]
  %v1940 = vld [vmem:[%s1912 + $0xd8] sm:$0xff]
  %v1941 = vld [vmem:[%s1912 + $0xe0] sm:$0xff]
  %v1942 = vld [vmem:[%s1912 + $0xe8] sm:$0xff]
  %v1943 = vld [vmem:[%s1912 + $0xf0] sm:$0xff]
  %v1944 = vld [vmem:[%s1912 + $0xf8] sm:$0xff]
  %v1977 = vunpack.c.l.b16 %v1913
  %v1978 = vunpack.c.h.b16 %v1913
  %v1979 = vunpack.c.l.b16 %v1914
  %v1980 = vunpack.c.h.b16 %v1914
  %v1981 = vunpack.c.l.b16 %v1915
  %v1982 = vunpack.c.h.b16 %v1915
  %v1983 = vunpack.c.l.b16 %v1916
  %v1984 = vunpack.c.h.b16 %v1916
  %v1985 = vunpack.c.l.b16 %v1917
  %v1986 = vunpack.c.h.b16 %v1917
  %v1987 = vunpack.c.l.b16 %v1918
  %v1988 = vunpack.c.h.b16 %v1918
  %v1989 = vunpack.c.l.b16 %v1919
  %v1990 = vunpack.c.h.b16 %v1919
  %v1991 = vunpack.c.l.b16 %v1920
  %v1992 = vunpack.c.h.b16 %v1920
  %v1993 = vunpack.c.l.b16 %v1921
  %v1994 = vunpack.c.h.b16 %v1921
  %v1995 = vunpack.c.l.b16 %v1922
  %v1996 = vunpack.c.h.b16 %v1922
  %v1997 = vunpack.c.l.b16 %v1923
  %v1998 = vunpack.c.h.b16 %v1923
  %v1999 = vunpack.c.l.b16 %v1924
  %v2000 = vunpack.c.h.b16 %v1924
  %v2001 = vunpack.c.l.b16 %v1925
  %v2002 = vunpack.c.h.b16 %v1925
  %v2003 = vunpack.c.l.b16 %v1926
  %v2004 = vunpack.c.h.b16 %v1926
  %v2005 = vunpack.c.l.b16 %v1927
  %v2006 = vunpack.c.h.b16 %v1927
  %v2007 = vunpack.c.l.b16 %v1928
  %v2008 = vunpack.c.h.b16 %v1928
  %v2009 = vunpack.c.l.b16 %v1929
  %v2010 = vunpack.c.h.b16 %v1929
  %v2011 = vunpack.c.l.b16 %v1930
  %v2012 = vunpack.c.h.b16 %v1930
  %v2013 = vunpack.c.l.b16 %v1931
  %v2014 = vunpack.c.h.b16 %v1931
  %v2015 = vunpack.c.l.b16 %v1932
  %v2016 = vunpack.c.h.b16 %v1932
  %v2017 = vunpack.c.l.b16 %v1933
  %v2018 = vunpack.c.h.b16 %v1933
  %v2019 = vunpack.c.l.b16 %v1934
  %v2020 = vunpack.c.h.b16 %v1934
  %v2021 = vunpack.c.l.b16 %v1935
  %v2022 = vunpack.c.h.b16 %v1935
  %v2023 = vunpack.c.l.b16 %v1936
  %v2024 = vunpack.c.h.b16 %v1936
  %v2025 = vunpack.c.l.b16 %v1937
  %v2026 = vunpack.c.h.b16 %v1937
  %v2027 = vunpack.c.l.b16 %v1938
  %v2028 = vunpack.c.h.b16 %v1938
  %v2029 = vunpack.c.l.b16 %v1939
  %v2030 = vunpack.c.h.b16 %v1939
  %v2031 = vunpack.c.l.b16 %v1940
  %v2032 = vunpack.c.h.b16 %v1940
  %v2033 = vunpack.c.l.b16 %v1941
  %v2034 = vunpack.c.h.b16 %v1941
  %v2035 = vunpack.c.l.b16 %v1942
  %v2036 = vunpack.c.h.b16 %v1942
  %v2037 = vunpack.c.l.b16 %v1943
  %v2038 = vunpack.c.h.b16 %v1943
  %v2039 = vunpack.c.l.b16 %v1944
  %v2040 = vunpack.c.h.b16 %v1944
  %v2041 = vpack.c.b16 %v1981, %v1977
  %v2042 = vpack.c.b16 %v1982, %v1978
  %v2043 = vpack.c.b16 %v1983, %v1979
  %v2044 = vpack.c.b16 %v1984, %v1980
  %v2045 = vpack.c.b16 %v1989, %v1985
  %v2046 = vpack.c.b16 %v1990, %v1986
  %v2047 = vpack.c.b16 %v1991, %v1987
  %v2048 = vpack.c.b16 %v1992, %v1988
  %v2049 = vpack.c.b16 %v1997, %v1993
  %v2050 = vpack.c.b16 %v1998, %v1994
  %v2051 = vpack.c.b16 %v1999, %v1995
  %v2052 = vpack.c.b16 %v2000, %v1996
  %v2053 = vpack.c.b16 %v2005, %v2001
  %v2054 = vpack.c.b16 %v2006, %v2002
  %v2055 = vpack.c.b16 %v2007, %v2003
  %v2056 = vpack.c.b16 %v2008, %v2004
  %v2057 = vpack.c.b16 %v2013, %v2009
  %v2058 = vpack.c.b16 %v2014, %v2010
  %v2059 = vpack.c.b16 %v2015, %v2011
  %v2060 = vpack.c.b16 %v2016, %v2012
  %v2061 = vpack.c.b16 %v2021, %v2017
  %v2062 = vpack.c.b16 %v2022, %v2018
  %v2063 = vpack.c.b16 %v2023, %v2019
  %v2064 = vpack.c.b16 %v2024, %v2020
  %v2065 = vpack.c.b16 %v2029, %v2025
  %v2066 = vpack.c.b16 %v2030, %v2026
  %v2067 = vpack.c.b16 %v2031, %v2027
  %v2068 = vpack.c.b16 %v2032, %v2028
  %v2069 = vpack.c.b16 %v2037, %v2033
  %v2070 = vpack.c.b16 %v2038, %v2034
  %v2071 = vpack.c.b16 %v2039, %v2035
  %v2072 = vpack.c.b16 %v2040, %v2036
  %2105 = vmatpush.bf16.msra.mxu0 %v2069
  %2106 = vmatpush.bf16.msra.mxu0 %v2065
  %2107 = vmatpush.bf16.msra.mxu0 %v2061
  %2108 = vmatpush.bf16.msra.mxu0 %v2057
  %2109 = vmatpush.bf16.msra.mxu0 %v2053
  %2110 = vmatpush.bf16.msra.mxu0 %v2049
  %2111 = vmatpush.bf16.msra.mxu0 %v2045
  %2112 = vmatpush.bf16.msra.mxu0 %v2041
  %2113 = vmatmul.bf16.gmra.mxu0 %v1911
  %v2114 = vpop.f32.mrf.mxu0
  %v2115 = vadd.f32 0.0, %v2114
  %v2116 = vpop.f32.mrf.mxu0
  %2117 = vdwg.mxu0
  %2118 = vmatpush.bf16.msra.mxu0 %v2070
  %2119 = vmatpush.bf16.msra.mxu0 %v2066
  %2120 = vmatpush.bf16.msra.mxu0 %v2062
  %2121 = vmatpush.bf16.msra.mxu0 %v2058
  %2122 = vmatpush.bf16.msra.mxu0 %v2054
  %2123 = vmatpush.bf16.msra.mxu0 %v2050
  %2124 = vmatpush.bf16.msra.mxu0 %v2046
  %2125 = vmatpush.bf16.msra.mxu0 %v2042
  %2126 = vmatmul.bf16.gmra.mxu0 %v1911
  %v2127 = vpop.f32.mrf.mxu0
  %v2128 = vadd.f32 0.0, %v2127
  %v2129 = vpop.f32.mrf.mxu0
  %2130 = vdwg.mxu0
  %2131 = vmatpush.bf16.msra.mxu0 %v2071
  %2132 = vmatpush.bf16.msra.mxu0 %v2067
  %2133 = vmatpush.bf16.msra.mxu0 %v2063
  %2134 = vmatpush.bf16.msra.mxu0 %v2059
  %2135 = vmatpush.bf16.msra.mxu0 %v2055
  %2136 = vmatpush.bf16.msra.mxu0 %v2051
  %2137 = vmatpush.bf16.msra.mxu0 %v2047
  %2138 = vmatpush.bf16.msra.mxu0 %v2043
  %2139 = vmatmul.bf16.gmra.mxu0 %v1911
  %v2140 = vpop.f32.mrf.mxu0
  %v2141 = vadd.f32 0.0, %v2140
  %v2142 = vpop.f32.mrf.mxu0
  %2143 = vdwg.mxu0
  %2144 = vmatpush.bf16.msra.mxu0 %v2072
  %2145 = vmatpush.bf16.msra.mxu0 %v2068
  %2146 = vmatpush.bf16.msra.mxu0 %v2064
  %2147 = vmatpush.bf16.msra.mxu0 %v2060
  %2148 = vmatpush.bf16.msra.mxu0 %v2056
  %2149 = vmatpush.bf16.msra.mxu0 %v2052
  %2150 = vmatpush.bf16.msra.mxu0 %v2048
  %2151 = vmatpush.bf16.msra.mxu0 %v2044
  %2152 = vmatmul.bf16.gmra.mxu0 %v1911
  %v2153 = vpop.f32.mrf.mxu0
  %v2154 = vadd.f32 0.0, %v2153
  %v2155 = vpop.f32.mrf.mxu0
  %2156 = vdwg.mxu0
  %v2157 = vadd.f32 %v1906, %v2115
  %v2158 = vadd.f32 %v1907, %v2128
  %v2159 = vadd.f32 %v1908, %v2141
  %v2160 = vadd.f32 %v1909, %v2154
  %v2161 = vld [vmem:[#allocation2 + $0x8] sm:$0x3]
  %v2162 = vpack.c.bf16 %v2161, %v2161
  %s2163 = scalar_lea.vmem %s4, 1024
  %v2164 = vld [vmem:[%s2163] sm:$0xff]
  %v2165 = vld [vmem:[%s2163 + $0x8] sm:$0xff]
  %v2166 = vld [vmem:[%s2163 + $0x10] sm:$0xff]
  %v2167 = vld [vmem:[%s2163 + $0x18] sm:$0xff]
  %v2168 = vld [vmem:[%s2163 + $0x20] sm:$0xff]
  %v2169 = vld [vmem:[%s2163 + $0x28] sm:$0xff]
  %v2170 = vld [vmem:[%s2163 + $0x30] sm:$0xff]
  %v2171 = vld [vmem:[%s2163 + $0x38] sm:$0xff]
  %v2172 = vld [vmem:[%s2163 + $0x40] sm:$0xff]
  %v2173 = vld [vmem:[%s2163 + $0x48] sm:$0xff]
  %v2174 = vld [vmem:[%s2163 + $0x50] sm:$0xff]
  %v2175 = vld [vmem:[%s2163 + $0x58] sm:$0xff]
  %v2176 = vld [vmem:[%s2163 + $0x60] sm:$0xff]
  %v2177 = vld [vmem:[%s2163 + $0x68] sm:$0xff]
  %v2178 = vld [vmem:[%s2163 + $0x70] sm:$0xff]
  %v2179 = vld [vmem:[%s2163 + $0x78] sm:$0xff]
  %v2180 = vld [vmem:[%s2163 + $0x80] sm:$0xff]
  %v2181 = vld [vmem:[%s2163 + $0x88] sm:$0xff]
  %v2182 = vld [vmem:[%s2163 + $0x90] sm:$0xff]
  %v2183 = vld [vmem:[%s2163 + $0x98] sm:$0xff]
  %v2184 = vld [vmem:[%s2163 + $0xa0] sm:$0xff]
  %v2185 = vld [vmem:[%s2163 + $0xa8] sm:$0xff]
  %v2186 = vld [vmem:[%s2163 + $0xb0] sm:$0xff]
  %v2187 = vld [vmem:[%s2163 + $0xb8] sm:$0xff]
  %v2188 = vld [vmem:[%s2163 + $0xc0] sm:$0xff]
  %v2189 = vld [vmem:[%s2163 + $0xc8] sm:$0xff]
  %v2190 = vld [vmem:[%s2163 + $0xd0] sm:$0xff]
  %v2191 = vld [vmem:[%s2163 + $0xd8] sm:$0xff]
  %v2192 = vld [vmem:[%s2163 + $0xe0] sm:$0xff]
  %v2193 = vld [vmem:[%s2163 + $0xe8] sm:$0xff]
  %v2194 = vld [vmem:[%s2163 + $0xf0] sm:$0xff]
  %v2195 = vld [vmem:[%s2163 + $0xf8] sm:$0xff]
  %v2228 = vunpack.c.l.b16 %v2164
  %v2229 = vunpack.c.h.b16 %v2164
  %v2230 = vunpack.c.l.b16 %v2165
  %v2231 = vunpack.c.h.b16 %v2165
  %v2232 = vunpack.c.l.b16 %v2166
  %v2233 = vunpack.c.h.b16 %v2166
  %v2234 = vunpack.c.l.b16 %v2167
  %v2235 = vunpack.c.h.b16 %v2167
  %v2236 = vunpack.c.l.b16 %v2168
  %v2237 = vunpack.c.h.b16 %v2168
  %v2238 = vunpack.c.l.b16 %v2169
  %v2239 = vunpack.c.h.b16 %v2169
  %v2240 = vunpack.c.l.b16 %v2170
  %v2241 = vunpack.c.h.b16 %v2170
  %v2242 = vunpack.c.l.b16 %v2171
  %v2243 = vunpack.c.h.b16 %v2171
  %v2244 = vunpack.c.l.b16 %v2172
  %v2245 = vunpack.c.h.b16 %v2172
  %v2246 = vunpack.c.l.b16 %v2173
  %v2247 = vunpack.c.h.b16 %v2173
  %v2248 = vunpack.c.l.b16 %v2174
  %v2249 = vunpack.c.h.b16 %v2174
  %v2250 = vunpack.c.l.b16 %v2175
  %v2251 = vunpack.c.h.b16 %v2175
  %v2252 = vunpack.c.l.b16 %v2176
  %v2253 = vunpack.c.h.b16 %v2176
  %v2254 = vunpack.c.l.b16 %v2177
  %v2255 = vunpack.c.h.b16 %v2177
  %v2256 = vunpack.c.l.b16 %v2178
  %v2257 = vunpack.c.h.b16 %v2178
  %v2258 = vunpack.c.l.b16 %v2179
  %v2259 = vunpack.c.h.b16 %v2179
  %v2260 = vunpack.c.l.b16 %v2180
  %v2261 = vunpack.c.h.b16 %v2180
  %v2262 = vunpack.c.l.b16 %v2181
  %v2263 = vunpack.c.h.b16 %v2181
  %v2264 = vunpack.c.l.b16 %v2182
  %v2265 = vunpack.c.h.b16 %v2182
  %v2266 = vunpack.c.l.b16 %v2183
  %v2267 = vunpack.c.h.b16 %v2183
  %v2268 = vunpack.c.l.b16 %v2184
  %v2269 = vunpack.c.h.b16 %v2184
  %v2270 = vunpack.c.l.b16 %v2185
  %v2271 = vunpack.c.h.b16 %v2185
  %v2272 = vunpack.c.l.b16 %v2186
  %v2273 = vunpack.c.h.b16 %v2186
  %v2274 = vunpack.c.l.b16 %v2187
  %v2275 = vunpack.c.h.b16 %v2187
  %v2276 = vunpack.c.l.b16 %v2188
  %v2277 = vunpack.c.h.b16 %v2188
  %v2278 = vunpack.c.l.b16 %v2189
  %v2279 = vunpack.c.h.b16 %v2189
  %v2280 = vunpack.c.l.b16 %v2190
  %v2281 = vunpack.c.h.b16 %v2190
  %v2282 = vunpack.c.l.b16 %v2191
  %v2283 = vunpack.c.h.b16 %v2191
  %v2284 = vunpack.c.l.b16 %v2192
  %v2285 = vunpack.c.h.b16 %v2192
  %v2286 = vunpack.c.l.b16 %v2193
  %v2287 = vunpack.c.h.b16 %v2193
  %v2288 = vunpack.c.l.b16 %v2194
  %v2289 = vunpack.c.h.b16 %v2194
  %v2290 = vunpack.c.l.b16 %v2195
  %v2291 = vunpack.c.h.b16 %v2195
  %v2292 = vpack.c.b16 %v2232, %v2228
  %v2293 = vpack.c.b16 %v2233, %v2229
  %v2294 = vpack.c.b16 %v2234, %v2230
  %v2295 = vpack.c.b16 %v2235, %v2231
  %v2296 = vpack.c.b16 %v2240, %v2236
  %v2297 = vpack.c.b16 %v2241, %v2237
  %v2298 = vpack.c.b16 %v2242, %v2238
  %v2299 = vpack.c.b16 %v2243, %v2239
  %v2300 = vpack.c.b16 %v2248, %v2244
  %v2301 = vpack.c.b16 %v2249, %v2245
  %v2302 = vpack.c.b16 %v2250, %v2246
  %v2303 = vpack.c.b16 %v2251, %v2247
  %v2304 = vpack.c.b16 %v2256, %v2252
  %v2305 = vpack.c.b16 %v2257, %v2253
  %v2306 = vpack.c.b16 %v2258, %v2254
  %v2307 = vpack.c.b16 %v2259, %v2255
  %v2308 = vpack.c.b16 %v2264, %v2260
  %v2309 = vpack.c.b16 %v2265, %v2261
  %v2310 = vpack.c.b16 %v2266, %v2262
  %v2311 = vpack.c.b16 %v2267, %v2263
  %v2312 = vpack.c.b16 %v2272, %v2268
  %v2313 = vpack.c.b16 %v2273, %v2269
  %v2314 = vpack.c.b16 %v2274, %v2270
  %v2315 = vpack.c.b16 %v2275, %v2271
  %v2316 = vpack.c.b16 %v2280, %v2276
  %v2317 = vpack.c.b16 %v2281, %v2277
  %v2318 = vpack.c.b16 %v2282, %v2278
  %v2319 = vpack.c.b16 %v2283, %v2279
  %v2320 = vpack.c.b16 %v2288, %v2284
  %v2321 = vpack.c.b16 %v2289, %v2285
  %v2322 = vpack.c.b16 %v2290, %v2286
  %v2323 = vpack.c.b16 %v2291, %v2287
  %2356 = vmatpush.bf16.msra.mxu0 %v2320
  %2357 = vmatpush.bf16.msra.mxu0 %v2316
  %2358 = vmatpush.bf16.msra.mxu0 %v2312
  %2359 = vmatpush.bf16.msra.mxu0 %v2308
  %2360 = vmatpush.bf16.msra.mxu0 %v2304
  %2361 = vmatpush.bf16.msra.mxu0 %v2300
  %2362 = vmatpush.bf16.msra.mxu0 %v2296
  %2363 = vmatpush.bf16.msra.mxu0 %v2292
  %2364 = vmatmul.bf16.gmra.mxu0 %v2162
  %v2365 = vpop.f32.mrf.mxu0
  %v2366 = vadd.f32 0.0, %v2365
  %v2367 = vpop.f32.mrf.mxu0
  %2368 = vdwg.mxu0
  %2369 = vmatpush.bf16.msra.mxu0 %v2321
  %2370 = vmatpush.bf16.msra.mxu0 %v2317
  %2371 = vmatpush.bf16.msra.mxu0 %v2313
  %2372 = vmatpush.bf16.msra.mxu0 %v2309
  %2373 = vmatpush.bf16.msra.mxu0 %v2305
  %2374 = vmatpush.bf16.msra.mxu0 %v2301
  %2375 = vmatpush.bf16.msra.mxu0 %v2297
  %2376 = vmatpush.bf16.msra.mxu0 %v2293
  %2377 = vmatmul.bf16.gmra.mxu0 %v2162
  %v2378 = vpop.f32.mrf.mxu0
  %v2379 = vadd.f32 0.0, %v2378
  %v2380 = vpop.f32.mrf.mxu0
  %2381 = vdwg.mxu0
  %2382 = vmatpush.bf16.msra.mxu0 %v2322
  %2383 = vmatpush.bf16.msra.mxu0 %v2318
  %2384 = vmatpush.bf16.msra.mxu0 %v2314
  %2385 = vmatpush.bf16.msra.mxu0 %v2310
  %2386 = vmatpush.bf16.msra.mxu0 %v2306
  %2387 = vmatpush.bf16.msra.mxu0 %v2302
  %2388 = vmatpush.bf16.msra.mxu0 %v2298
  %2389 = vmatpush.bf16.msra.mxu0 %v2294
  %2390 = vmatmul.bf16.gmra.mxu0 %v2162
  %v2391 = vpop.f32.mrf.mxu0
  %v2392 = vadd.f32 0.0, %v2391
  %v2393 = vpop.f32.mrf.mxu0
  %2394 = vdwg.mxu0
  %2395 = vmatpush.bf16.msra.mxu0 %v2323
  %2396 = vmatpush.bf16.msra.mxu0 %v2319
  %2397 = vmatpush.bf16.msra.mxu0 %v2315
  %2398 = vmatpush.bf16.msra.mxu0 %v2311
  %2399 = vmatpush.bf16.msra.mxu0 %v2307
  %2400 = vmatpush.bf16.msra.mxu0 %v2303
  %2401 = vmatpush.bf16.msra.mxu0 %v2299
  %2402 = vmatpush.bf16.msra.mxu0 %v2295
  %2403 = vmatmul.bf16.gmra.mxu0 %v2162
  %v2404 = vpop.f32.mrf.mxu0
  %v2405 = vadd.f32 0.0, %v2404
  %v2406 = vpop.f32.mrf.mxu0
  %2407 = vdwg.mxu0
  %v2408 = vadd.f32 %v2157, %v2366
  %v2409 = vadd.f32 %v2158, %v2379
  %v2410 = vadd.f32 %v2159, %v2392
  %v2411 = vadd.f32 %v2160, %v2405
  %v2412 = vld [vmem:[#allocation2 + $0xa] sm:$0x3]
  %v2413 = vpack.c.bf16 %v2412, %v2412
  %s2414 = scalar_lea.vmem %s4, 1280
  %v2415 = vld [vmem:[%s2414] sm:$0xff]
  %v2416 = vld [vmem:[%s2414 + $0x8] sm:$0xff]
  %v2417 = vld [vmem:[%s2414 + $0x10] sm:$0xff]
  %v2418 = vld [vmem:[%s2414 + $0x18] sm:$0xff]
  %v2419 = vld [vmem:[%s2414 + $0x20] sm:$0xff]
  %v2420 = vld [vmem:[%s2414 + $0x28] sm:$0xff]
  %v2421 = vld [vmem:[%s2414 + $0x30] sm:$0xff]
  %v2422 = vld [vmem:[%s2414 + $0x38] sm:$0xff]
  %v2423 = vld [vmem:[%s2414 + $0x40] sm:$0xff]
  %v2424 = vld [vmem:[%s2414 + $0x48] sm:$0xff]
  %v2425 = vld [vmem:[%s2414 + $0x50] sm:$0xff]
  %v2426 = vld [vmem:[%s2414 + $0x58] sm:$0xff]
  %v2427 = vld [vmem:[%s2414 + $0x60] sm:$0xff]
  %v2428 = vld [vmem:[%s2414 + $0x68] sm:$0xff]
  %v2429 = vld [vmem:[%s2414 + $0x70] sm:$0xff]
  %v2430 = vld [vmem:[%s2414 + $0x78] sm:$0xff]
  %v2431 = vld [vmem:[%s2414 + $0x80] sm:$0xff]
  %v2432 = vld [vmem:[%s2414 + $0x88] sm:$0xff]
  %v2433 = vld [vmem:[%s2414 + $0x90] sm:$0xff]
  %v2434 = vld [vmem:[%s2414 + $0x98] sm:$0xff]
  %v2435 = vld [vmem:[%s2414 + $0xa0] sm:$0xff]
  %v2436 = vld [vmem:[%s2414 + $0xa8] sm:$0xff]
  %v2437 = vld [vmem:[%s2414 + $0xb0] sm:$0xff]
  %v2438 = vld [vmem:[%s2414 + $0xb8] sm:$0xff]
  %v2439 = vld [vmem:[%s2414 + $0xc0] sm:$0xff]
  %v2440 = vld [vmem:[%s2414 + $0xc8] sm:$0xff]
  %v2441 = vld [vmem:[%s2414 + $0xd0] sm:$0xff]
  %v2442 = vld [vmem:[%s2414 + $0xd8] sm:$0xff]
  %v2443 = vld [vmem:[%s2414 + $0xe0] sm:$0xff]
  %v2444 = vld [vmem:[%s2414 + $0xe8] sm:$0xff]
  %v2445 = vld [vmem:[%s2414 + $0xf0] sm:$0xff]
  %v2446 = vld [vmem:[%s2414 + $0xf8] sm:$0xff]
  %v2479 = vunpack.c.l.b16 %v2415
  %v2480 = vunpack.c.h.b16 %v2415
  %v2481 = vunpack.c.l.b16 %v2416
  %v2482 = vunpack.c.h.b16 %v2416
  %v2483 = vunpack.c.l.b16 %v2417
  %v2484 = vunpack.c.h.b16 %v2417
  %v2485 = vunpack.c.l.b16 %v2418
  %v2486 = vunpack.c.h.b16 %v2418
  %v2487 = vunpack.c.l.b16 %v2419
  %v2488 = vunpack.c.h.b16 %v2419
  %v2489 = vunpack.c.l.b16 %v2420
  %v2490 = vunpack.c.h.b16 %v2420
  %v2491 = vunpack.c.l.b16 %v2421
  %v2492 = vunpack.c.h.b16 %v2421
  %v2493 = vunpack.c.l.b16 %v2422
  %v2494 = vunpack.c.h.b16 %v2422
  %v2495 = vunpack.c.l.b16 %v2423
  %v2496 = vunpack.c.h.b16 %v2423
  %v2497 = vunpack.c.l.b16 %v2424
  %v2498 = vunpack.c.h.b16 %v2424
  %v2499 = vunpack.c.l.b16 %v2425
  %v2500 = vunpack.c.h.b16 %v2425
  %v2501 = vunpack.c.l.b16 %v2426
  %v2502 = vunpack.c.h.b16 %v2426
  %v2503 = vunpack.c.l.b16 %v2427
  %v2504 = vunpack.c.h.b16 %v2427
  %v2505 = vunpack.c.l.b16 %v2428
  %v2506 = vunpack.c.h.b16 %v2428
  %v2507 = vunpack.c.l.b16 %v2429
  %v2508 = vunpack.c.h.b16 %v2429
  %v2509 = vunpack.c.l.b16 %v2430
  %v2510 = vunpack.c.h.b16 %v2430
  %v2511 = vunpack.c.l.b16 %v2431
  %v2512 = vunpack.c.h.b16 %v2431
  %v2513 = vunpack.c.l.b16 %v2432
  %v2514 = vunpack.c.h.b16 %v2432
  %v2515 = vunpack.c.l.b16 %v2433
  %v2516 = vunpack.c.h.b16 %v2433
  %v2517 = vunpack.c.l.b16 %v2434
  %v2518 = vunpack.c.h.b16 %v2434
  %v2519 = vunpack.c.l.b16 %v2435
  %v2520 = vunpack.c.h.b16 %v2435
  %v2521 = vunpack.c.l.b16 %v2436
  %v2522 = vunpack.c.h.b16 %v2436
  %v2523 = vunpack.c.l.b16 %v2437
  %v2524 = vunpack.c.h.b16 %v2437
  %v2525 = vunpack.c.l.b16 %v2438
  %v2526 = vunpack.c.h.b16 %v2438
  %v2527 = vunpack.c.l.b16 %v2439
  %v2528 = vunpack.c.h.b16 %v2439
  %v2529 = vunpack.c.l.b16 %v2440
  %v2530 = vunpack.c.h.b16 %v2440
  %v2531 = vunpack.c.l.b16 %v2441
  %v2532 = vunpack.c.h.b16 %v2441
  %v2533 = vunpack.c.l.b16 %v2442
  %v2534 = vunpack.c.h.b16 %v2442
  %v2535 = vunpack.c.l.b16 %v2443
  %v2536 = vunpack.c.h.b16 %v2443
  %v2537 = vunpack.c.l.b16 %v2444
  %v2538 = vunpack.c.h.b16 %v2444
  %v2539 = vunpack.c.l.b16 %v2445
  %v2540 = vunpack.c.h.b16 %v2445
  %v2541 = vunpack.c.l.b16 %v2446
  %v2542 = vunpack.c.h.b16 %v2446
  %v2543 = vpack.c.b16 %v2483, %v2479
  %v2544 = vpack.c.b16 %v2484, %v2480
  %v2545 = vpack.c.b16 %v2485, %v2481
  %v2546 = vpack.c.b16 %v2486, %v2482
  %v2547 = vpack.c.b16 %v2491, %v2487
  %v2548 = vpack.c.b16 %v2492, %v2488
  %v2549 = vpack.c.b16 %v2493, %v2489
  %v2550 = vpack.c.b16 %v2494, %v2490
  %v2551 = vpack.c.b16 %v2499, %v2495
  %v2552 = vpack.c.b16 %v2500, %v2496
  %v2553 = vpack.c.b16 %v2501, %v2497
  %v2554 = vpack.c.b16 %v2502, %v2498
  %v2555 = vpack.c.b16 %v2507, %v2503
  %v2556 = vpack.c.b16 %v2508, %v2504
  %v2557 = vpack.c.b16 %v2509, %v2505
  %v2558 = vpack.c.b16 %v2510, %v2506
  %v2559 = vpack.c.b16 %v2515, %v2511
  %v2560 = vpack.c.b16 %v2516, %v2512
  %v2561 = vpack.c.b16 %v2517, %v2513
  %v2562 = vpack.c.b16 %v2518, %v2514
  %v2563 = vpack.c.b16 %v2523, %v2519
  %v2564 = vpack.c.b16 %v2524, %v2520
  %v2565 = vpack.c.b16 %v2525, %v2521
  %v2566 = vpack.c.b16 %v2526, %v2522
  %v2567 = vpack.c.b16 %v2531, %v2527
  %v2568 = vpack.c.b16 %v2532, %v2528
  %v2569 = vpack.c.b16 %v2533, %v2529
  %v2570 = vpack.c.b16 %v2534, %v2530
  %v2571 = vpack.c.b16 %v2539, %v2535
  %v2572 = vpack.c.b16 %v2540, %v2536
  %v2573 = vpack.c.b16 %v2541, %v2537
  %v2574 = vpack.c.b16 %v2542, %v2538
  %2607 = vmatpush.bf16.msra.mxu0 %v2571
  %2608 = vmatpush.bf16.msra.mxu0 %v2567
  %2609 = vmatpush.bf16.msra.mxu0 %v2563
  %2610 = vmatpush.bf16.msra.mxu0 %v2559
  %2611 = vmatpush.bf16.msra.mxu0 %v2555
  %2612 = vmatpush.bf16.msra.mxu0 %v2551
  %2613 = vmatpush.bf16.msra.mxu0 %v2547
  %2614 = vmatpush.bf16.msra.mxu0 %v2543
  %2615 = vmatmul.bf16.gmra.mxu0 %v2413
  %v2616 = vpop.f32.mrf.mxu0
  %v2617 = vadd.f32 0.0, %v2616
  %v2618 = vpop.f32.mrf.mxu0
  %2619 = vdwg.mxu0
  %2620 = vmatpush.bf16.msra.mxu0 %v2572
  %2621 = vmatpush.bf16.msra.mxu0 %v2568
  %2622 = vmatpush.bf16.msra.mxu0 %v2564
  %2623 = vmatpush.bf16.msra.mxu0 %v2560
  %2624 = vmatpush.bf16.msra.mxu0 %v2556
  %2625 = vmatpush.bf16.msra.mxu0 %v2552
  %2626 = vmatpush.bf16.msra.mxu0 %v2548
  %2627 = vmatpush.bf16.msra.mxu0 %v2544
  %2628 = vmatmul.bf16.gmra.mxu0 %v2413
  %v2629 = vpop.f32.mrf.mxu0
  %v2630 = vadd.f32 0.0, %v2629
  %v2631 = vpop.f32.mrf.mxu0
  %2632 = vdwg.mxu0
  %2633 = vmatpush.bf16.msra.mxu0 %v2573
  %2634 = vmatpush.bf16.msra.mxu0 %v2569
  %2635 = vmatpush.bf16.msra.mxu0 %v2565
  %2636 = vmatpush.bf16.msra.mxu0 %v2561
  %2637 = vmatpush.bf16.msra.mxu0 %v2557
  %2638 = vmatpush.bf16.msra.mxu0 %v2553
  %2639 = vmatpush.bf16.msra.mxu0 %v2549
  %2640 = vmatpush.bf16.msra.mxu0 %v2545
  %2641 = vmatmul.bf16.gmra.mxu0 %v2413
  %v2642 = vpop.f32.mrf.mxu0
  %v2643 = vadd.f32 0.0, %v2642
  %v2644 = vpop.f32.mrf.mxu0
  %2645 = vdwg.mxu0
  %2646 = vmatpush.bf16.msra.mxu0 %v2574
  %2647 = vmatpush.bf16.msra.mxu0 %v2570
  %2648 = vmatpush.bf16.msra.mxu0 %v2566
  %2649 = vmatpush.bf16.msra.mxu0 %v2562
  %2650 = vmatpush.bf16.msra.mxu0 %v2558
  %2651 = vmatpush.bf16.msra.mxu0 %v2554
  %2652 = vmatpush.bf16.msra.mxu0 %v2550
  %2653 = vmatpush.bf16.msra.mxu0 %v2546
  %2654 = vmatmul.bf16.gmra.mxu0 %v2413
  %v2655 = vpop.f32.mrf.mxu0
  %v2656 = vadd.f32 0.0, %v2655
  %v2657 = vpop.f32.mrf.mxu0
  %2658 = vdwg.mxu0
  %v2659 = vadd.f32 %v2408, %v2617
  %v2660 = vadd.f32 %v2409, %v2630
  %v2661 = vadd.f32 %v2410, %v2643
  %v2662 = vadd.f32 %v2411, %v2656
  %v2663 = vld [vmem:[#allocation2 + $0xc] sm:$0x3]
  %v2664 = vpack.c.bf16 %v2663, %v2663
  %s2665 = scalar_lea.vmem %s4, 1536
  %v2666 = vld [vmem:[%s2665] sm:$0xff]
  %v2667 = vld [vmem:[%s2665 + $0x8] sm:$0xff]
  %v2668 = vld [vmem:[%s2665 + $0x10] sm:$0xff]
  %v2669 = vld [vmem:[%s2665 + $0x18] sm:$0xff]
  %v2670 = vld [vmem:[%s2665 + $0x20] sm:$0xff]
  %v2671 = vld [vmem:[%s2665 + $0x28] sm:$0xff]
  %v2672 = vld [vmem:[%s2665 + $0x30] sm:$0xff]
  %v2673 = vld [vmem:[%s2665 + $0x38] sm:$0xff]
  %v2674 = vld [vmem:[%s2665 + $0x40] sm:$0xff]
  %v2675 = vld [vmem:[%s2665 + $0x48] sm:$0xff]
  %v2676 = vld [vmem:[%s2665 + $0x50] sm:$0xff]
  %v2677 = vld [vmem:[%s2665 + $0x58] sm:$0xff]
  %v2678 = vld [vmem:[%s2665 + $0x60] sm:$0xff]
  %v2679 = vld [vmem:[%s2665 + $0x68] sm:$0xff]
  %v2680 = vld [vmem:[%s2665 + $0x70] sm:$0xff]
  %v2681 = vld [vmem:[%s2665 + $0x78] sm:$0xff]
  %v2682 = vld [vmem:[%s2665 + $0x80] sm:$0xff]
  %v2683 = vld [vmem:[%s2665 + $0x88] sm:$0xff]
  %v2684 = vld [vmem:[%s2665 + $0x90] sm:$0xff]
  %v2685 = vld [vmem:[%s2665 + $0x98] sm:$0xff]
  %v2686 = vld [vmem:[%s2665 + $0xa0] sm:$0xff]
  %v2687 = vld [vmem:[%s2665 + $0xa8] sm:$0xff]
  %v2688 = vld [vmem:[%s2665 + $0xb0] sm:$0xff]
  %v2689 = vld [vmem:[%s2665 + $0xb8] sm:$0xff]
  %v2690 = vld [vmem:[%s2665 + $0xc0] sm:$0xff]
  %v2691 = vld [vmem:[%s2665 + $0xc8] sm:$0xff]
  %v2692 = vld [vmem:[%s2665 + $0xd0] sm:$0xff]
  %v2693 = vld [vmem:[%s2665 + $0xd8] sm:$0xff]
  %v2694 = vld [vmem:[%s2665 + $0xe0] sm:$0xff]
  %v2695 = vld [vmem:[%s2665 + $0xe8] sm:$0xff]
  %v2696 = vld [vmem:[%s2665 + $0xf0] sm:$0xff]
  %v2697 = vld [vmem:[%s2665 + $0xf8] sm:$0xff]
  %v2730 = vunpack.c.l.b16 %v2666
  %v2731 = vunpack.c.h.b16 %v2666
  %v2732 = vunpack.c.l.b16 %v2667
  %v2733 = vunpack.c.h.b16 %v2667
  %v2734 = vunpack.c.l.b16 %v2668
  %v2735 = vunpack.c.h.b16 %v2668
  %v2736 = vunpack.c.l.b16 %v2669
  %v2737 = vunpack.c.h.b16 %v2669
  %v2738 = vunpack.c.l.b16 %v2670
  %v2739 = vunpack.c.h.b16 %v2670
  %v2740 = vunpack.c.l.b16 %v2671
  %v2741 = vunpack.c.h.b16 %v2671
  %v2742 = vunpack.c.l.b16 %v2672
  %v2743 = vunpack.c.h.b16 %v2672
  %v2744 = vunpack.c.l.b16 %v2673
  %v2745 = vunpack.c.h.b16 %v2673
  %v2746 = vunpack.c.l.b16 %v2674
  %v2747 = vunpack.c.h.b16 %v2674
  %v2748 = vunpack.c.l.b16 %v2675
  %v2749 = vunpack.c.h.b16 %v2675
  %v2750 = vunpack.c.l.b16 %v2676
  %v2751 = vunpack.c.h.b16 %v2676
  %v2752 = vunpack.c.l.b16 %v2677
  %v2753 = vunpack.c.h.b16 %v2677
  %v2754 = vunpack.c.l.b16 %v2678
  %v2755 = vunpack.c.h.b16 %v2678
  %v2756 = vunpack.c.l.b16 %v2679
  %v2757 = vunpack.c.h.b16 %v2679
  %v2758 = vunpack.c.l.b16 %v2680
  %v2759 = vunpack.c.h.b16 %v2680
  %v2760 = vunpack.c.l.b16 %v2681
  %v2761 = vunpack.c.h.b16 %v2681
  %v2762 = vunpack.c.l.b16 %v2682
  %v2763 = vunpack.c.h.b16 %v2682
  %v2764 = vunpack.c.l.b16 %v2683
  %v2765 = vunpack.c.h.b16 %v2683
  %v2766 = vunpack.c.l.b16 %v2684
  %v2767 = vunpack.c.h.b16 %v2684
  %v2768 = vunpack.c.l.b16 %v2685
  %v2769 = vunpack.c.h.b16 %v2685
  %v2770 = vunpack.c.l.b16 %v2686
  %v2771 = vunpack.c.h.b16 %v2686
  %v2772 = vunpack.c.l.b16 %v2687
  %v2773 = vunpack.c.h.b16 %v2687
  %v2774 = vunpack.c.l.b16 %v2688
  %v2775 = vunpack.c.h.b16 %v2688
  %v2776 = vunpack.c.l.b16 %v2689
  %v2777 = vunpack.c.h.b16 %v2689
  %v2778 = vunpack.c.l.b16 %v2690
  %v2779 = vunpack.c.h.b16 %v2690
  %v2780 = vunpack.c.l.b16 %v2691
  %v2781 = vunpack.c.h.b16 %v2691
  %v2782 = vunpack.c.l.b16 %v2692
  %v2783 = vunpack.c.h.b16 %v2692
  %v2784 = vunpack.c.l.b16 %v2693
  %v2785 = vunpack.c.h.b16 %v2693
  %v2786 = vunpack.c.l.b16 %v2694
  %v2787 = vunpack.c.h.b16 %v2694
  %v2788 = vunpack.c.l.b16 %v2695
  %v2789 = vunpack.c.h.b16 %v2695
  %v2790 = vunpack.c.l.b16 %v2696
  %v2791 = vunpack.c.h.b16 %v2696
  %v2792 = vunpack.c.l.b16 %v2697
  %v2793 = vunpack.c.h.b16 %v2697
  %v2794 = vpack.c.b16 %v2734, %v2730
  %v2795 = vpack.c.b16 %v2735, %v2731
  %v2796 = vpack.c.b16 %v2736, %v2732
  %v2797 = vpack.c.b16 %v2737, %v2733
  %v2798 = vpack.c.b16 %v2742, %v2738
  %v2799 = vpack.c.b16 %v2743, %v2739
  %v2800 = vpack.c.b16 %v2744, %v2740
  %v2801 = vpack.c.b16 %v2745, %v2741
  %v2802 = vpack.c.b16 %v2750, %v2746
  %v2803 = vpack.c.b16 %v2751, %v2747
  %v2804 = vpack.c.b16 %v2752, %v2748
  %v2805 = vpack.c.b16 %v2753, %v2749
  %v2806 = vpack.c.b16 %v2758, %v2754
  %v2807 = vpack.c.b16 %v2759, %v2755
  %v2808 = vpack.c.b16 %v2760, %v2756
  %v2809 = vpack.c.b16 %v2761, %v2757
  %v2810 = vpack.c.b16 %v2766, %v2762
  %v2811 = vpack.c.b16 %v2767, %v2763
  %v2812 = vpack.c.b16 %v2768, %v2764
  %v2813 = vpack.c.b16 %v2769, %v2765
  %v2814 = vpack.c.b16 %v2774, %v2770
  %v2815 = vpack.c.b16 %v2775, %v2771
  %v2816 = vpack.c.b16 %v2776, %v2772
  %v2817 = vpack.c.b16 %v2777, %v2773
  %v2818 = vpack.c.b16 %v2782, %v2778
  %v2819 = vpack.c.b16 %v2783, %v2779
  %v2820 = vpack.c.b16 %v2784, %v2780
  %v2821 = vpack.c.b16 %v2785, %v2781
  %v2822 = vpack.c.b16 %v2790, %v2786
  %v2823 = vpack.c.b16 %v2791, %v2787
  %v2824 = vpack.c.b16 %v2792, %v2788
  %v2825 = vpack.c.b16 %v2793, %v2789
  %2858 = vmatpush.bf16.msra.mxu0 %v2822
  %2859 = vmatpush.bf16.msra.mxu0 %v2818
  %2860 = vmatpush.bf16.msra.mxu0 %v2814
  %2861 = vmatpush.bf16.msra.mxu0 %v2810
  %2862 = vmatpush.bf16.msra.mxu0 %v2806
  %2863 = vmatpush.bf16.msra.mxu0 %v2802
  %2864 = vmatpush.bf16.msra.mxu0 %v2798
  %2865 = vmatpush.bf16.msra.mxu0 %v2794
  %2866 = vmatmul.bf16.gmra.mxu0 %v2664
  %v2867 = vpop.f32.mrf.mxu0
  %v2868 = vadd.f32 0.0, %v2867
  %v2869 = vpop.f32.mrf.mxu0
  %2870 = vdwg.mxu0
  %2871 = vmatpush.bf16.msra.mxu0 %v2823
  %2872 = vmatpush.bf16.msra.mxu0 %v2819
  %2873 = vmatpush.bf16.msra.mxu0 %v2815
  %2874 = vmatpush.bf16.msra.mxu0 %v2811
  %2875 = vmatpush.bf16.msra.mxu0 %v2807
  %2876 = vmatpush.bf16.msra.mxu0 %v2803
  %2877 = vmatpush.bf16.msra.mxu0 %v2799
  %2878 = vmatpush.bf16.msra.mxu0 %v2795
  %2879 = vmatmul.bf16.gmra.mxu0 %v2664
  %v2880 = vpop.f32.mrf.mxu0
  %v2881 = vadd.f32 0.0, %v2880
  %v2882 = vpop.f32.mrf.mxu0
  %2883 = vdwg.mxu0
  %2884 = vmatpush.bf16.msra.mxu0 %v2824
  %2885 = vmatpush.bf16.msra.mxu0 %v2820
  %2886 = vmatpush.bf16.msra.mxu0 %v2816
  %2887 = vmatpush.bf16.msra.mxu0 %v2812
  %2888 = vmatpush.bf16.msra.mxu0 %v2808
  %2889 = vmatpush.bf16.msra.mxu0 %v2804
  %2890 = vmatpush.bf16.msra.mxu0 %v2800
  %2891 = vmatpush.bf16.msra.mxu0 %v2796
  %2892 = vmatmul.bf16.gmra.mxu0 %v2664
  %v2893 = vpop.f32.mrf.mxu0
  %v2894 = vadd.f32 0.0, %v2893
  %v2895 = vpop.f32.mrf.mxu0
  %2896 = vdwg.mxu0
  %2897 = vmatpush.bf16.msra.mxu0 %v2825
  %2898 = vmatpush.bf16.msra.mxu0 %v2821
  %2899 = vmatpush.bf16.msra.mxu0 %v2817
  %2900 = vmatpush.bf16.msra.mxu0 %v2813
  %2901 = vmatpush.bf16.msra.mxu0 %v2809
  %2902 = vmatpush.bf16.msra.mxu0 %v2805
  %2903 = vmatpush.bf16.msra.mxu0 %v2801
  %2904 = vmatpush.bf16.msra.mxu0 %v2797
  %2905 = vmatmul.bf16.gmra.mxu0 %v2664
  %v2906 = vpop.f32.mrf.mxu0
  %v2907 = vadd.f32 0.0, %v2906
  %v2908 = vpop.f32.mrf.mxu0
  %2909 = vdwg.mxu0
  %v2910 = vadd.f32 %v2659, %v2868
  %v2911 = vadd.f32 %v2660, %v2881
  %v2912 = vadd.f32 %v2661, %v2894
  %v2913 = vadd.f32 %v2662, %v2907
  %v2914 = vld [vmem:[#allocation2 + $0xe] sm:$0x3]
  %v2915 = vpack.c.bf16 %v2914, %v2914
  %s2916 = scalar_lea.vmem %s4, 1792
  %v2917 = vld [vmem:[%s2916] sm:$0xff]
  %v2918 = vld [vmem:[%s2916 + $0x8] sm:$0xff]
  %v2919 = vld [vmem:[%s2916 + $0x10] sm:$0xff]
  %v2920 = vld [vmem:[%s2916 + $0x18] sm:$0xff]
  %v2921 = vld [vmem:[%s2916 + $0x20] sm:$0xff]
  %v2922 = vld [vmem:[%s2916 + $0x28] sm:$0xff]
  %v2923 = vld [vmem:[%s2916 + $0x30] sm:$0xff]
  %v2924 = vld [vmem:[%s2916 + $0x38] sm:$0xff]
  %v2925 = vld [vmem:[%s2916 + $0x40] sm:$0xff]
  %v2926 = vld [vmem:[%s2916 + $0x48] sm:$0xff]
  %v2927 = vld [vmem:[%s2916 + $0x50] sm:$0xff]
  %v2928 = vld [vmem:[%s2916 + $0x58] sm:$0xff]
  %v2929 = vld [vmem:[%s2916 + $0x60] sm:$0xff]
  %v2930 = vld [vmem:[%s2916 + $0x68] sm:$0xff]
  %v2931 = vld [vmem:[%s2916 + $0x70] sm:$0xff]
  %v2932 = vld [vmem:[%s2916 + $0x78] sm:$0xff]
  %v2933 = vld [vmem:[%s2916 + $0x80] sm:$0xff]
  %v2934 = vld [vmem:[%s2916 + $0x88] sm:$0xff]
  %v2935 = vld [vmem:[%s2916 + $0x90] sm:$0xff]
  %v2936 = vld [vmem:[%s2916 + $0x98] sm:$0xff]
  %v2937 = vld [vmem:[%s2916 + $0xa0] sm:$0xff]
  %v2938 = vld [vmem:[%s2916 + $0xa8] sm:$0xff]
  %v2939 = vld [vmem:[%s2916 + $0xb0] sm:$0xff]
  %v2940 = vld [vmem:[%s2916 + $0xb8] sm:$0xff]
  %v2941 = vld [vmem:[%s2916 + $0xc0] sm:$0xff]
  %v2942 = vld [vmem:[%s2916 + $0xc8] sm:$0xff]
  %v2943 = vld [vmem:[%s2916 + $0xd0] sm:$0xff]
  %v2944 = vld [vmem:[%s2916 + $0xd8] sm:$0xff]
  %v2945 = vld [vmem:[%s2916 + $0xe0] sm:$0xff]
  %v2946 = vld [vmem:[%s2916 + $0xe8] sm:$0xff]
  %v2947 = vld [vmem:[%s2916 + $0xf0] sm:$0xff]
  %v2948 = vld [vmem:[%s2916 + $0xf8] sm:$0xff]
  %v2981 = vunpack.c.l.b16 %v2917
  %v2982 = vunpack.c.h.b16 %v2917
  %v2983 = vunpack.c.l.b16 %v2918
  %v2984 = vunpack.c.h.b16 %v2918
  %v2985 = vunpack.c.l.b16 %v2919
  %v2986 = vunpack.c.h.b16 %v2919
  %v2987 = vunpack.c.l.b16 %v2920
  %v2988 = vunpack.c.h.b16 %v2920
  %v2989 = vunpack.c.l.b16 %v2921
  %v2990 = vunpack.c.h.b16 %v2921
  %v2991 = vunpack.c.l.b16 %v2922
  %v2992 = vunpack.c.h.b16 %v2922
  %v2993 = vunpack.c.l.b16 %v2923
  %v2994 = vunpack.c.h.b16 %v2923
  %v2995 = vunpack.c.l.b16 %v2924
  %v2996 = vunpack.c.h.b16 %v2924
  %v2997 = vunpack.c.l.b16 %v2925
  %v2998 = vunpack.c.h.b16 %v2925
  %v2999 = vunpack.c.l.b16 %v2926
  %v3000 = vunpack.c.h.b16 %v2926
  %v3001 = vunpack.c.l.b16 %v2927
  %v3002 = vunpack.c.h.b16 %v2927
  %v3003 = vunpack.c.l.b16 %v2928
  %v3004 = vunpack.c.h.b16 %v2928
  %v3005 = vunpack.c.l.b16 %v2929
  %v3006 = vunpack.c.h.b16 %v2929
  %v3007 = vunpack.c.l.b16 %v2930
  %v3008 = vunpack.c.h.b16 %v2930
  %v3009 = vunpack.c.l.b16 %v2931
  %v3010 = vunpack.c.h.b16 %v2931
  %v3011 = vunpack.c.l.b16 %v2932
  %v3012 = vunpack.c.h.b16 %v2932
  %v3013 = vunpack.c.l.b16 %v2933
  %v3014 = vunpack.c.h.b16 %v2933
  %v3015 = vunpack.c.l.b16 %v2934
  %v3016 = vunpack.c.h.b16 %v2934
  %v3017 = vunpack.c.l.b16 %v2935
  %v3018 = vunpack.c.h.b16 %v2935
  %v3019 = vunpack.c.l.b16 %v2936
  %v3020 = vunpack.c.h.b16 %v2936
  %v3021 = vunpack.c.l.b16 %v2937
  %v3022 = vunpack.c.h.b16 %v2937
  %v3023 = vunpack.c.l.b16 %v2938
  %v3024 = vunpack.c.h.b16 %v2938
  %v3025 = vunpack.c.l.b16 %v2939
  %v3026 = vunpack.c.h.b16 %v2939
  %v3027 = vunpack.c.l.b16 %v2940
  %v3028 = vunpack.c.h.b16 %v2940
  %v3029 = vunpack.c.l.b16 %v2941
  %v3030 = vunpack.c.h.b16 %v2941
  %v3031 = vunpack.c.l.b16 %v2942
  %v3032 = vunpack.c.h.b16 %v2942
  %v3033 = vunpack.c.l.b16 %v2943
  %v3034 = vunpack.c.h.b16 %v2943
  %v3035 = vunpack.c.l.b16 %v2944
  %v3036 = vunpack.c.h.b16 %v2944
  %v3037 = vunpack.c.l.b16 %v2945
  %v3038 = vunpack.c.h.b16 %v2945
  %v3039 = vunpack.c.l.b16 %v2946
  %v3040 = vunpack.c.h.b16 %v2946
  %v3041 = vunpack.c.l.b16 %v2947
  %v3042 = vunpack.c.h.b16 %v2947
  %v3043 = vunpack.c.l.b16 %v2948
  %v3044 = vunpack.c.h.b16 %v2948
  %v3045 = vpack.c.b16 %v2985, %v2981
  %v3046 = vpack.c.b16 %v2986, %v2982
  %v3047 = vpack.c.b16 %v2987, %v2983
  %v3048 = vpack.c.b16 %v2988, %v2984
  %v3049 = vpack.c.b16 %v2993, %v2989
  %v3050 = vpack.c.b16 %v2994, %v2990
  %v3051 = vpack.c.b16 %v2995, %v2991
  %v3052 = vpack.c.b16 %v2996, %v2992
  %v3053 = vpack.c.b16 %v3001, %v2997
  %v3054 = vpack.c.b16 %v3002, %v2998
  %v3055 = vpack.c.b16 %v3003, %v2999
  %v3056 = vpack.c.b16 %v3004, %v3000
  %v3057 = vpack.c.b16 %v3009, %v3005
  %v3058 = vpack.c.b16 %v3010, %v3006
  %v3059 = vpack.c.b16 %v3011, %v3007
  %v3060 = vpack.c.b16 %v3012, %v3008
  %v3061 = vpack.c.b16 %v3017, %v3013
  %v3062 = vpack.c.b16 %v3018, %v3014
  %v3063 = vpack.c.b16 %v3019, %v3015
  %v3064 = vpack.c.b16 %v3020, %v3016
  %v3065 = vpack.c.b16 %v3025, %v3021
  %v3066 = vpack.c.b16 %v3026, %v3022
  %v3067 = vpack.c.b16 %v3027, %v3023
  %v3068 = vpack.c.b16 %v3028, %v3024
  %v3069 = vpack.c.b16 %v3033, %v3029
  %v3070 = vpack.c.b16 %v3034, %v3030
  %v3071 = vpack.c.b16 %v3035, %v3031
  %v3072 = vpack.c.b16 %v3036, %v3032
  %v3073 = vpack.c.b16 %v3041, %v3037
  %v3074 = vpack.c.b16 %v3042, %v3038
  %v3075 = vpack.c.b16 %v3043, %v3039
  %v3076 = vpack.c.b16 %v3044, %v3040
  %3109 = vmatpush.bf16.msra.mxu0 %v3073
  %3110 = vmatpush.bf16.msra.mxu0 %v3069
  %3111 = vmatpush.bf16.msra.mxu0 %v3065
  %3112 = vmatpush.bf16.msra.mxu0 %v3061
  %3113 = vmatpush.bf16.msra.mxu0 %v3057
  %3114 = vmatpush.bf16.msra.mxu0 %v3053
  %3115 = vmatpush.bf16.msra.mxu0 %v3049
  %3116 = vmatpush.bf16.msra.mxu0 %v3045
  %3117 = vmatmul.bf16.gmra.mxu0 %v2915
  %v3118 = vpop.f32.mrf.mxu0
  %v3119 = vadd.f32 0.0, %v3118
  %v3120 = vpop.f32.mrf.mxu0
  %3121 = vdwg.mxu0
  %3122 = vmatpush.bf16.msra.mxu0 %v3074
  %3123 = vmatpush.bf16.msra.mxu0 %v3070
  %3124 = vmatpush.bf16.msra.mxu0 %v3066
  %3125 = vmatpush.bf16.msra.mxu0 %v3062
  %3126 = vmatpush.bf16.msra.mxu0 %v3058
  %3127 = vmatpush.bf16.msra.mxu0 %v3054
  %3128 = vmatpush.bf16.msra.mxu0 %v3050
  %3129 = vmatpush.bf16.msra.mxu0 %v3046
  %3130 = vmatmul.bf16.gmra.mxu0 %v2915
  %v3131 = vpop.f32.mrf.mxu0
  %v3132 = vadd.f32 0.0, %v3131
  %v3133 = vpop.f32.mrf.mxu0
  %3134 = vdwg.mxu0
  %3135 = vmatpush.bf16.msra.mxu0 %v3075
  %3136 = vmatpush.bf16.msra.mxu0 %v3071
  %3137 = vmatpush.bf16.msra.mxu0 %v3067
  %3138 = vmatpush.bf16.msra.mxu0 %v3063
  %3139 = vmatpush.bf16.msra.mxu0 %v3059
  %3140 = vmatpush.bf16.msra.mxu0 %v3055
  %3141 = vmatpush.bf16.msra.mxu0 %v3051
  %3142 = vmatpush.bf16.msra.mxu0 %v3047
  %3143 = vmatmul.bf16.gmra.mxu0 %v2915
  %v3144 = vpop.f32.mrf.mxu0
  %v3145 = vadd.f32 0.0, %v3144
  %v3146 = vpop.f32.mrf.mxu0
  %3147 = vdwg.mxu0
  %3148 = vmatpush.bf16.msra.mxu0 %v3076
  %3149 = vmatpush.bf16.msra.mxu0 %v3072
  %3150 = vmatpush.bf16.msra.mxu0 %v3068
  %3151 = vmatpush.bf16.msra.mxu0 %v3064
  %3152 = vmatpush.bf16.msra.mxu0 %v3060
  %3153 = vmatpush.bf16.msra.mxu0 %v3056
  %3154 = vmatpush.bf16.msra.mxu0 %v3052
  %3155 = vmatpush.bf16.msra.mxu0 %v3048
  %3156 = vmatmul.bf16.gmra.mxu0 %v2915
  %v3157 = vpop.f32.mrf.mxu0
  %v3158 = vadd.f32 0.0, %v3157
  %v3159 = vpop.f32.mrf.mxu0
  %3160 = vdwg.mxu0
  %v3161 = vadd.f32 %v2910, %v3119
  %v3162 = vadd.f32 %v2911, %v3132
  %v3163 = vadd.f32 %v2912, %v3145
  %v3164 = vadd.f32 %v2913, %v3158
  %v3165 = vld [vmem:[#allocation2 + $0x10] sm:$0x3]
  %v3166 = vpack.c.bf16 %v3165, %v3165
  %s3167 = scalar_lea.vmem %s4, 2048
  %v3168 = vld [vmem:[%s3167] sm:$0xff]
  %v3169 = vld [vmem:[%s3167 + $0x8] sm:$0xff]
  %v3170 = vld [vmem:[%s3167 + $0x10] sm:$0xff]
  %v3171 = vld [vmem:[%s3167 + $0x18] sm:$0xff]
  %v3172 = vld [vmem:[%s3167 + $0x20] sm:$0xff]
  %v3173 = vld [vmem:[%s3167 + $0x28] sm:$0xff]
  %v3174 = vld [vmem:[%s3167 + $0x30] sm:$0xff]
  %v3175 = vld [vmem:[%s3167 + $0x38] sm:$0xff]
  %v3176 = vld [vmem:[%s3167 + $0x40] sm:$0xff]
  %v3177 = vld [vmem:[%s3167 + $0x48] sm:$0xff]
  %v3178 = vld [vmem:[%s3167 + $0x50] sm:$0xff]
  %v3179 = vld [vmem:[%s3167 + $0x58] sm:$0xff]
  %v3180 = vld [vmem:[%s3167 + $0x60] sm:$0xff]
  %v3181 = vld [vmem:[%s3167 + $0x68] sm:$0xff]
  %v3182 = vld [vmem:[%s3167 + $0x70] sm:$0xff]
  %v3183 = vld [vmem:[%s3167 + $0x78] sm:$0xff]
  %v3184 = vld [vmem:[%s3167 + $0x80] sm:$0xff]
  %v3185 = vld [vmem:[%s3167 + $0x88] sm:$0xff]
  %v3186 = vld [vmem:[%s3167 + $0x90] sm:$0xff]
  %v3187 = vld [vmem:[%s3167 + $0x98] sm:$0xff]
  %v3188 = vld [vmem:[%s3167 + $0xa0] sm:$0xff]
  %v3189 = vld [vmem:[%s3167 + $0xa8] sm:$0xff]
  %v3190 = vld [vmem:[%s3167 + $0xb0] sm:$0xff]
  %v3191 = vld [vmem:[%s3167 + $0xb8] sm:$0xff]
  %v3192 = vld [vmem:[%s3167 + $0xc0] sm:$0xff]
  %v3193 = vld [vmem:[%s3167 + $0xc8] sm:$0xff]
  %v3194 = vld [vmem:[%s3167 + $0xd0] sm:$0xff]
  %v3195 = vld [vmem:[%s3167 + $0xd8] sm:$0xff]
  %v3196 = vld [vmem:[%s3167 + $0xe0] sm:$0xff]
  %v3197 = vld [vmem:[%s3167 + $0xe8] sm:$0xff]
  %v3198 = vld [vmem:[%s3167 + $0xf0] sm:$0xff]
  %v3199 = vld [vmem:[%s3167 + $0xf8] sm:$0xff]
  %v3232 = vunpack.c.l.b16 %v3168
  %v3233 = vunpack.c.h.b16 %v3168
  %v3234 = vunpack.c.l.b16 %v3169
  %v3235 = vunpack.c.h.b16 %v3169
  %v3236 = vunpack.c.l.b16 %v3170
  %v3237 = vunpack.c.h.b16 %v3170
  %v3238 = vunpack.c.l.b16 %v3171
  %v3239 = vunpack.c.h.b16 %v3171
  %v3240 = vunpack.c.l.b16 %v3172
  %v3241 = vunpack.c.h.b16 %v3172
  %v3242 = vunpack.c.l.b16 %v3173
  %v3243 = vunpack.c.h.b16 %v3173
  %v3244 = vunpack.c.l.b16 %v3174
  %v3245 = vunpack.c.h.b16 %v3174
  %v3246 = vunpack.c.l.b16 %v3175
  %v3247 = vunpack.c.h.b16 %v3175
  %v3248 = vunpack.c.l.b16 %v3176
  %v3249 = vunpack.c.h.b16 %v3176
  %v3250 = vunpack.c.l.b16 %v3177
  %v3251 = vunpack.c.h.b16 %v3177
  %v3252 = vunpack.c.l.b16 %v3178
  %v3253 = vunpack.c.h.b16 %v3178
  %v3254 = vunpack.c.l.b16 %v3179
  %v3255 = vunpack.c.h.b16 %v3179
  %v3256 = vunpack.c.l.b16 %v3180
  %v3257 = vunpack.c.h.b16 %v3180
  %v3258 = vunpack.c.l.b16 %v3181
  %v3259 = vunpack.c.h.b16 %v3181
  %v3260 = vunpack.c.l.b16 %v3182
  %v3261 = vunpack.c.h.b16 %v3182
  %v3262 = vunpack.c.l.b16 %v3183
  %v3263 = vunpack.c.h.b16 %v3183
  %v3264 = vunpack.c.l.b16 %v3184
  %v3265 = vunpack.c.h.b16 %v3184
  %v3266 = vunpack.c.l.b16 %v3185
  %v3267 = vunpack.c.h.b16 %v3185
  %v3268 = vunpack.c.l.b16 %v3186
  %v3269 = vunpack.c.h.b16 %v3186
  %v3270 = vunpack.c.l.b16 %v3187
  %v3271 = vunpack.c.h.b16 %v3187
  %v3272 = vunpack.c.l.b16 %v3188
  %v3273 = vunpack.c.h.b16 %v3188
  %v3274 = vunpack.c.l.b16 %v3189
  %v3275 = vunpack.c.h.b16 %v3189
  %v3276 = vunpack.c.l.b16 %v3190
  %v3277 = vunpack.c.h.b16 %v3190
  %v3278 = vunpack.c.l.b16 %v3191
  %v3279 = vunpack.c.h.b16 %v3191
  %v3280 = vunpack.c.l.b16 %v3192
  %v3281 = vunpack.c.h.b16 %v3192
  %v3282 = vunpack.c.l.b16 %v3193
  %v3283 = vunpack.c.h.b16 %v3193
  %v3284 = vunpack.c.l.b16 %v3194
  %v3285 = vunpack.c.h.b16 %v3194
  %v3286 = vunpack.c.l.b16 %v3195
  %v3287 = vunpack.c.h.b16 %v3195
  %v3288 = vunpack.c.l.b16 %v3196
  %v3289 = vunpack.c.h.b16 %v3196
  %v3290 = vunpack.c.l.b16 %v3197
  %v3291 = vunpack.c.h.b16 %v3197
  %v3292 = vunpack.c.l.b16 %v3198
  %v3293 = vunpack.c.h.b16 %v3198
  %v3294 = vunpack.c.l.b16 %v3199
  %v3295 = vunpack.c.h.b16 %v3199
  %v3296 = vpack.c.b16 %v3236, %v3232
  %v3297 = vpack.c.b16 %v3237, %v3233
  %v3298 = vpack.c.b16 %v3238, %v3234
  %v3299 = vpack.c.b16 %v3239, %v3235
  %v3300 = vpack.c.b16 %v3244, %v3240
  %v3301 = vpack.c.b16 %v3245, %v3241
  %v3302 = vpack.c.b16 %v3246, %v3242
  %v3303 = vpack.c.b16 %v3247, %v3243
  %v3304 = vpack.c.b16 %v3252, %v3248
  %v3305 = vpack.c.b16 %v3253, %v3249
  %v3306 = vpack.c.b16 %v3254, %v3250
  %v3307 = vpack.c.b16 %v3255, %v3251
  %v3308 = vpack.c.b16 %v3260, %v3256
  %v3309 = vpack.c.b16 %v3261, %v3257
  %v3310 = vpack.c.b16 %v3262, %v3258
  %v3311 = vpack.c.b16 %v3263, %v3259
  %v3312 = vpack.c.b16 %v3268, %v3264
  %v3313 = vpack.c.b16 %v3269, %v3265
  %v3314 = vpack.c.b16 %v3270, %v3266
  %v3315 = vpack.c.b16 %v3271, %v3267
  %v3316 = vpack.c.b16 %v3276, %v3272
  %v3317 = vpack.c.b16 %v3277, %v3273
  %v3318 = vpack.c.b16 %v3278, %v3274
  %v3319 = vpack.c.b16 %v3279, %v3275
  %v3320 = vpack.c.b16 %v3284, %v3280
  %v3321 = vpack.c.b16 %v3285, %v3281
  %v3322 = vpack.c.b16 %v3286, %v3282
  %v3323 = vpack.c.b16 %v3287, %v3283
  %v3324 = vpack.c.b16 %v3292, %v3288
  %v3325 = vpack.c.b16 %v3293, %v3289
  %v3326 = vpack.c.b16 %v3294, %v3290
  %v3327 = vpack.c.b16 %v3295, %v3291
  %3360 = vmatpush.bf16.msra.mxu0 %v3324
  %3361 = vmatpush.bf16.msra.mxu0 %v3320
  %3362 = vmatpush.bf16.msra.mxu0 %v3316
  %3363 = vmatpush.bf16.msra.mxu0 %v3312
  %3364 = vmatpush.bf16.msra.mxu0 %v3308
  %3365 = vmatpush.bf16.msra.mxu0 %v3304
  %3366 = vmatpush.bf16.msra.mxu0 %v3300
  %3367 = vmatpush.bf16.msra.mxu0 %v3296
  %3368 = vmatmul.bf16.gmra.mxu0 %v3166
  %v3369 = vpop.f32.mrf.mxu0
  %v3370 = vadd.f32 0.0, %v3369
  %v3371 = vpop.f32.mrf.mxu0
  %3372 = vdwg.mxu0
  %3373 = vmatpush.bf16.msra.mxu0 %v3325
  %3374 = vmatpush.bf16.msra.mxu0 %v3321
  %3375 = vmatpush.bf16.msra.mxu0 %v3317
  %3376 = vmatpush.bf16.msra.mxu0 %v3313
  %3377 = vmatpush.bf16.msra.mxu0 %v3309
  %3378 = vmatpush.bf16.msra.mxu0 %v3305
  %3379 = vmatpush.bf16.msra.mxu0 %v3301
  %3380 = vmatpush.bf16.msra.mxu0 %v3297
  %3381 = vmatmul.bf16.gmra.mxu0 %v3166
  %v3382 = vpop.f32.mrf.mxu0
  %v3383 = vadd.f32 0.0, %v3382
  %v3384 = vpop.f32.mrf.mxu0
  %3385 = vdwg.mxu0
  %3386 = vmatpush.bf16.msra.mxu0 %v3326
  %3387 = vmatpush.bf16.msra.mxu0 %v3322
  %3388 = vmatpush.bf16.msra.mxu0 %v3318
  %3389 = vmatpush.bf16.msra.mxu0 %v3314
  %3390 = vmatpush.bf16.msra.mxu0 %v3310
  %3391 = vmatpush.bf16.msra.mxu0 %v3306
  %3392 = vmatpush.bf16.msra.mxu0 %v3302
  %3393 = vmatpush.bf16.msra.mxu0 %v3298
  %3394 = vmatmul.bf16.gmra.mxu0 %v3166
  %v3395 = vpop.f32.mrf.mxu0
  %v3396 = vadd.f32 0.0, %v3395
  %v3397 = vpop.f32.mrf.mxu0
  %3398 = vdwg.mxu0
  %3399 = vmatpush.bf16.msra.mxu0 %v3327
  %3400 = vmatpush.bf16.msra.mxu0 %v3323
  %3401 = vmatpush.bf16.msra.mxu0 %v3319
  %3402 = vmatpush.bf16.msra.mxu0 %v3315
  %3403 = vmatpush.bf16.msra.mxu0 %v3311
  %3404 = vmatpush.bf16.msra.mxu0 %v3307
  %3405 = vmatpush.bf16.msra.mxu0 %v3303
  %3406 = vmatpush.bf16.msra.mxu0 %v3299
  %3407 = vmatmul.bf16.gmra.mxu0 %v3166
  %v3408 = vpop.f32.mrf.mxu0
  %v3409 = vadd.f32 0.0, %v3408
  %v3410 = vpop.f32.mrf.mxu0
  %3411 = vdwg.mxu0
  %v3412 = vadd.f32 %v3161, %v3370
  %v3413 = vadd.f32 %v3162, %v3383
  %v3414 = vadd.f32 %v3163, %v3396
  %v3415 = vadd.f32 %v3164, %v3409
  %v3416 = vld [vmem:[#allocation2 + $0x12] sm:$0x3]
  %v3417 = vpack.c.bf16 %v3416, %v3416
  %s3418 = scalar_lea.vmem %s4, 2304
  %v3419 = vld [vmem:[%s3418] sm:$0xff]
  %v3420 = vld [vmem:[%s3418 + $0x8] sm:$0xff]
  %v3421 = vld [vmem:[%s3418 + $0x10] sm:$0xff]
  %v3422 = vld [vmem:[%s3418 + $0x18] sm:$0xff]
  %v3423 = vld [vmem:[%s3418 + $0x20] sm:$0xff]
  %v3424 = vld [vmem:[%s3418 + $0x28] sm:$0xff]
  %v3425 = vld [vmem:[%s3418 + $0x30] sm:$0xff]
  %v3426 = vld [vmem:[%s3418 + $0x38] sm:$0xff]
  %v3427 = vld [vmem:[%s3418 + $0x40] sm:$0xff]
  %v3428 = vld [vmem:[%s3418 + $0x48] sm:$0xff]
  %v3429 = vld [vmem:[%s3418 + $0x50] sm:$0xff]
  %v3430 = vld [vmem:[%s3418 + $0x58] sm:$0xff]
  %v3431 = vld [vmem:[%s3418 + $0x60] sm:$0xff]
  %v3432 = vld [vmem:[%s3418 + $0x68] sm:$0xff]
  %v3433 = vld [vmem:[%s3418 + $0x70] sm:$0xff]
  %v3434 = vld [vmem:[%s3418 + $0x78] sm:$0xff]
  %v3435 = vld [vmem:[%s3418 + $0x80] sm:$0xff]
  %v3436 = vld [vmem:[%s3418 + $0x88] sm:$0xff]
  %v3437 = vld [vmem:[%s3418 + $0x90] sm:$0xff]
  %v3438 = vld [vmem:[%s3418 + $0x98] sm:$0xff]
  %v3439 = vld [vmem:[%s3418 + $0xa0] sm:$0xff]
  %v3440 = vld [vmem:[%s3418 + $0xa8] sm:$0xff]
  %v3441 = vld [vmem:[%s3418 + $0xb0] sm:$0xff]
  %v3442 = vld [vmem:[%s3418 + $0xb8] sm:$0xff]
  %v3443 = vld [vmem:[%s3418 + $0xc0] sm:$0xff]
  %v3444 = vld [vmem:[%s3418 + $0xc8] sm:$0xff]
  %v3445 = vld [vmem:[%s3418 + $0xd0] sm:$0xff]
  %v3446 = vld [vmem:[%s3418 + $0xd8] sm:$0xff]
  %v3447 = vld [vmem:[%s3418 + $0xe0] sm:$0xff]
  %v3448 = vld [vmem:[%s3418 + $0xe8] sm:$0xff]
  %v3449 = vld [vmem:[%s3418 + $0xf0] sm:$0xff]
  %v3450 = vld [vmem:[%s3418 + $0xf8] sm:$0xff]
  %v3483 = vunpack.c.l.b16 %v3419
  %v3484 = vunpack.c.h.b16 %v3419
  %v3485 = vunpack.c.l.b16 %v3420
  %v3486 = vunpack.c.h.b16 %v3420
  %v3487 = vunpack.c.l.b16 %v3421
  %v3488 = vunpack.c.h.b16 %v3421
  %v3489 = vunpack.c.l.b16 %v3422
  %v3490 = vunpack.c.h.b16 %v3422
  %v3491 = vunpack.c.l.b16 %v3423
  %v3492 = vunpack.c.h.b16 %v3423
  %v3493 = vunpack.c.l.b16 %v3424
  %v3494 = vunpack.c.h.b16 %v3424
  %v3495 = vunpack.c.l.b16 %v3425
  %v3496 = vunpack.c.h.b16 %v3425
  %v3497 = vunpack.c.l.b16 %v3426
  %v3498 = vunpack.c.h.b16 %v3426
  %v3499 = vunpack.c.l.b16 %v3427
  %v3500 = vunpack.c.h.b16 %v3427
  %v3501 = vunpack.c.l.b16 %v3428
  %v3502 = vunpack.c.h.b16 %v3428
  %v3503 = vunpack.c.l.b16 %v3429
  %v3504 = vunpack.c.h.b16 %v3429
  %v3505 = vunpack.c.l.b16 %v3430
  %v3506 = vunpack.c.h.b16 %v3430
  %v3507 = vunpack.c.l.b16 %v3431
  %v3508 = vunpack.c.h.b16 %v3431
  %v3509 = vunpack.c.l.b16 %v3432
  %v3510 = vunpack.c.h.b16 %v3432
  %v3511 = vunpack.c.l.b16 %v3433
  %v3512 = vunpack.c.h.b16 %v3433
  %v3513 = vunpack.c.l.b16 %v3434
  %v3514 = vunpack.c.h.b16 %v3434
  %v3515 = vunpack.c.l.b16 %v3435
  %v3516 = vunpack.c.h.b16 %v3435
  %v3517 = vunpack.c.l.b16 %v3436
  %v3518 = vunpack.c.h.b16 %v3436
  %v3519 = vunpack.c.l.b16 %v3437
  %v3520 = vunpack.c.h.b16 %v3437
  %v3521 = vunpack.c.l.b16 %v3438
  %v3522 = vunpack.c.h.b16 %v3438
  %v3523 = vunpack.c.l.b16 %v3439
  %v3524 = vunpack.c.h.b16 %v3439
  %v3525 = vunpack.c.l.b16 %v3440
  %v3526 = vunpack.c.h.b16 %v3440
  %v3527 = vunpack.c.l.b16 %v3441
  %v3528 = vunpack.c.h.b16 %v3441
  %v3529 = vunpack.c.l.b16 %v3442
  %v3530 = vunpack.c.h.b16 %v3442
  %v3531 = vunpack.c.l.b16 %v3443
  %v3532 = vunpack.c.h.b16 %v3443
  %v3533 = vunpack.c.l.b16 %v3444
  %v3534 = vunpack.c.h.b16 %v3444
  %v3535 = vunpack.c.l.b16 %v3445
  %v3536 = vunpack.c.h.b16 %v3445
  %v3537 = vunpack.c.l.b16 %v3446
  %v3538 = vunpack.c.h.b16 %v3446
  %v3539 = vunpack.c.l.b16 %v3447
  %v3540 = vunpack.c.h.b16 %v3447
  %v3541 = vunpack.c.l.b16 %v3448
  %v3542 = vunpack.c.h.b16 %v3448
  %v3543 = vunpack.c.l.b16 %v3449
  %v3544 = vunpack.c.h.b16 %v3449
  %v3545 = vunpack.c.l.b16 %v3450
  %v3546 = vunpack.c.h.b16 %v3450
  %v3547 = vpack.c.b16 %v3487, %v3483
  %v3548 = vpack.c.b16 %v3488, %v3484
  %v3549 = vpack.c.b16 %v3489, %v3485
  %v3550 = vpack.c.b16 %v3490, %v3486
  %v3551 = vpack.c.b16 %v3495, %v3491
  %v3552 = vpack.c.b16 %v3496, %v3492
  %v3553 = vpack.c.b16 %v3497, %v3493
  %v3554 = vpack.c.b16 %v3498, %v3494
  %v3555 = vpack.c.b16 %v3503, %v3499
  %v3556 = vpack.c.b16 %v3504, %v3500
  %v3557 = vpack.c.b16 %v3505, %v3501
  %v3558 = vpack.c.b16 %v3506, %v3502
  %v3559 = vpack.c.b16 %v3511, %v3507
  %v3560 = vpack.c.b16 %v3512, %v3508
  %v3561 = vpack.c.b16 %v3513, %v3509
  %v3562 = vpack.c.b16 %v3514, %v3510
  %v3563 = vpack.c.b16 %v3519, %v3515
  %v3564 = vpack.c.b16 %v3520, %v3516
  %v3565 = vpack.c.b16 %v3521, %v3517
  %v3566 = vpack.c.b16 %v3522, %v3518
  %v3567 = vpack.c.b16 %v3527, %v3523
  %v3568 = vpack.c.b16 %v3528, %v3524
  %v3569 = vpack.c.b16 %v3529, %v3525
  %v3570 = vpack.c.b16 %v3530, %v3526
  %v3571 = vpack.c.b16 %v3535, %v3531
  %v3572 = vpack.c.b16 %v3536, %v3532
  %v3573 = vpack.c.b16 %v3537, %v3533
  %v3574 = vpack.c.b16 %v3538, %v3534
  %v3575 = vpack.c.b16 %v3543, %v3539
  %v3576 = vpack.c.b16 %v3544, %v3540
  %v3577 = vpack.c.b16 %v3545, %v3541
  %v3578 = vpack.c.b16 %v3546, %v3542
  %3611 = vmatpush.bf16.msra.mxu0 %v3575
  %3612 = vmatpush.bf16.msra.mxu0 %v3571
  %3613 = vmatpush.bf16.msra.mxu0 %v3567
  %3614 = vmatpush.bf16.msra.mxu0 %v3563
  %3615 = vmatpush.bf16.msra.mxu0 %v3559
  %3616 = vmatpush.bf16.msra.mxu0 %v3555
  %3617 = vmatpush.bf16.msra.mxu0 %v3551
  %3618 = vmatpush.bf16.msra.mxu0 %v3547
  %3619 = vmatmul.bf16.gmra.mxu0 %v3417
  %v3620 = vpop.f32.mrf.mxu0
  %v3621 = vadd.f32 0.0, %v3620
  %v3622 = vpop.f32.mrf.mxu0
  %3623 = vdwg.mxu0
  %3624 = vmatpush.bf16.msra.mxu0 %v3576
  %3625 = vmatpush.bf16.msra.mxu0 %v3572
  %3626 = vmatpush.bf16.msra.mxu0 %v3568
  %3627 = vmatpush.bf16.msra.mxu0 %v3564
  %3628 = vmatpush.bf16.msra.mxu0 %v3560
  %3629 = vmatpush.bf16.msra.mxu0 %v3556
  %3630 = vmatpush.bf16.msra.mxu0 %v3552
  %3631 = vmatpush.bf16.msra.mxu0 %v3548
  %3632 = vmatmul.bf16.gmra.mxu0 %v3417
  %v3633 = vpop.f32.mrf.mxu0
  %v3634 = vadd.f32 0.0, %v3633
  %v3635 = vpop.f32.mrf.mxu0
  %3636 = vdwg.mxu0
  %3637 = vmatpush.bf16.msra.mxu0 %v3577
  %3638 = vmatpush.bf16.msra.mxu0 %v3573
  %3639 = vmatpush.bf16.msra.mxu0 %v3569
  %3640 = vmatpush.bf16.msra.mxu0 %v3565
  %3641 = vmatpush.bf16.msra.mxu0 %v3561
  %3642 = vmatpush.bf16.msra.mxu0 %v3557
  %3643 = vmatpush.bf16.msra.mxu0 %v3553
  %3644 = vmatpush.bf16.msra.mxu0 %v3549
  %3645 = vmatmul.bf16.gmra.mxu0 %v3417
  %v3646 = vpop.f32.mrf.mxu0
  %v3647 = vadd.f32 0.0, %v3646
  %v3648 = vpop.f32.mrf.mxu0
  %3649 = vdwg.mxu0
  %3650 = vmatpush.bf16.msra.mxu0 %v3578
  %3651 = vmatpush.bf16.msra.mxu0 %v3574
  %3652 = vmatpush.bf16.msra.mxu0 %v3570
  %3653 = vmatpush.bf16.msra.mxu0 %v3566
  %3654 = vmatpush.bf16.msra.mxu0 %v3562
  %3655 = vmatpush.bf16.msra.mxu0 %v3558
  %3656 = vmatpush.bf16.msra.mxu0 %v3554
  %3657 = vmatpush.bf16.msra.mxu0 %v3550
  %3658 = vmatmul.bf16.gmra.mxu0 %v3417
  %v3659 = vpop.f32.mrf.mxu0
  %v3660 = vadd.f32 0.0, %v3659
  %v3661 = vpop.f32.mrf.mxu0
  %3662 = vdwg.mxu0
  %v3663 = vadd.f32 %v3412, %v3621
  %v3664 = vadd.f32 %v3413, %v3634
  %v3665 = vadd.f32 %v3414, %v3647
  %v3666 = vadd.f32 %v3415, %v3660
  %v3667 = vld [vmem:[#allocation2 + $0x14] sm:$0x3]
  %v3668 = vpack.c.bf16 %v3667, %v3667
  %s3669 = scalar_lea.vmem %s4, 2560
  %v3670 = vld [vmem:[%s3669] sm:$0xff]
  %v3671 = vld [vmem:[%s3669 + $0x8] sm:$0xff]
  %v3672 = vld [vmem:[%s3669 + $0x10] sm:$0xff]
  %v3673 = vld [vmem:[%s3669 + $0x18] sm:$0xff]
  %v3674 = vld [vmem:[%s3669 + $0x20] sm:$0xff]
  %v3675 = vld [vmem:[%s3669 + $0x28] sm:$0xff]
  %v3676 = vld [vmem:[%s3669 + $0x30] sm:$0xff]
  %v3677 = vld [vmem:[%s3669 + $0x38] sm:$0xff]
  %v3678 = vld [vmem:[%s3669 + $0x40] sm:$0xff]
  %v3679 = vld [vmem:[%s3669 + $0x48] sm:$0xff]
  %v3680 = vld [vmem:[%s3669 + $0x50] sm:$0xff]
  %v3681 = vld [vmem:[%s3669 + $0x58] sm:$0xff]
  %v3682 = vld [vmem:[%s3669 + $0x60] sm:$0xff]
  %v3683 = vld [vmem:[%s3669 + $0x68] sm:$0xff]
  %v3684 = vld [vmem:[%s3669 + $0x70] sm:$0xff]
  %v3685 = vld [vmem:[%s3669 + $0x78] sm:$0xff]
  %v3686 = vld [vmem:[%s3669 + $0x80] sm:$0xff]
  %v3687 = vld [vmem:[%s3669 + $0x88] sm:$0xff]
  %v3688 = vld [vmem:[%s3669 + $0x90] sm:$0xff]
  %v3689 = vld [vmem:[%s3669 + $0x98] sm:$0xff]
  %v3690 = vld [vmem:[%s3669 + $0xa0] sm:$0xff]
  %v3691 = vld [vmem:[%s3669 + $0xa8] sm:$0xff]
  %v3692 = vld [vmem:[%s3669 + $0xb0] sm:$0xff]
  %v3693 = vld [vmem:[%s3669 + $0xb8] sm:$0xff]
  %v3694 = vld [vmem:[%s3669 + $0xc0] sm:$0xff]
  %v3695 = vld [vmem:[%s3669 + $0xc8] sm:$0xff]
  %v3696 = vld [vmem:[%s3669 + $0xd0] sm:$0xff]
  %v3697 = vld [vmem:[%s3669 + $0xd8] sm:$0xff]
  %v3698 = vld [vmem:[%s3669 + $0xe0] sm:$0xff]
  %v3699 = vld [vmem:[%s3669 + $0xe8] sm:$0xff]
  %v3700 = vld [vmem:[%s3669 + $0xf0] sm:$0xff]
  %v3701 = vld [vmem:[%s3669 + $0xf8] sm:$0xff]
  %v3734 = vunpack.c.l.b16 %v3670
  %v3735 = vunpack.c.h.b16 %v3670
  %v3736 = vunpack.c.l.b16 %v3671
  %v3737 = vunpack.c.h.b16 %v3671
  %v3738 = vunpack.c.l.b16 %v3672
  %v3739 = vunpack.c.h.b16 %v3672
  %v3740 = vunpack.c.l.b16 %v3673
  %v3741 = vunpack.c.h.b16 %v3673
  %v3742 = vunpack.c.l.b16 %v3674
  %v3743 = vunpack.c.h.b16 %v3674
  %v3744 = vunpack.c.l.b16 %v3675
  %v3745 = vunpack.c.h.b16 %v3675
  %v3746 = vunpack.c.l.b16 %v3676
  %v3747 = vunpack.c.h.b16 %v3676
  %v3748 = vunpack.c.l.b16 %v3677
  %v3749 = vunpack.c.h.b16 %v3677
  %v3750 = vunpack.c.l.b16 %v3678
  %v3751 = vunpack.c.h.b16 %v3678
  %v3752 = vunpack.c.l.b16 %v3679
  %v3753 = vunpack.c.h.b16 %v3679
  %v3754 = vunpack.c.l.b16 %v3680
  %v3755 = vunpack.c.h.b16 %v3680
  %v3756 = vunpack.c.l.b16 %v3681
  %v3757 = vunpack.c.h.b16 %v3681
  %v3758 = vunpack.c.l.b16 %v3682
  %v3759 = vunpack.c.h.b16 %v3682
  %v3760 = vunpack.c.l.b16 %v3683
  %v3761 = vunpack.c.h.b16 %v3683
  %v3762 = vunpack.c.l.b16 %v3684
  %v3763 = vunpack.c.h.b16 %v3684
  %v3764 = vunpack.c.l.b16 %v3685
  %v3765 = vunpack.c.h.b16 %v3685
  %v3766 = vunpack.c.l.b16 %v3686
  %v3767 = vunpack.c.h.b16 %v3686
  %v3768 = vunpack.c.l.b16 %v3687
  %v3769 = vunpack.c.h.b16 %v3687
  %v3770 = vunpack.c.l.b16 %v3688
  %v3771 = vunpack.c.h.b16 %v3688
  %v3772 = vunpack.c.l.b16 %v3689
  %v3773 = vunpack.c.h.b16 %v3689
  %v3774 = vunpack.c.l.b16 %v3690
  %v3775 = vunpack.c.h.b16 %v3690
  %v3776 = vunpack.c.l.b16 %v3691
  %v3777 = vunpack.c.h.b16 %v3691
  %v3778 = vunpack.c.l.b16 %v3692
  %v3779 = vunpack.c.h.b16 %v3692
  %v3780 = vunpack.c.l.b16 %v3693
  %v3781 = vunpack.c.h.b16 %v3693
  %v3782 = vunpack.c.l.b16 %v3694
  %v3783 = vunpack.c.h.b16 %v3694
  %v3784 = vunpack.c.l.b16 %v3695
  %v3785 = vunpack.c.h.b16 %v3695
  %v3786 = vunpack.c.l.b16 %v3696
  %v3787 = vunpack.c.h.b16 %v3696
  %v3788 = vunpack.c.l.b16 %v3697
  %v3789 = vunpack.c.h.b16 %v3697
  %v3790 = vunpack.c.l.b16 %v3698
  %v3791 = vunpack.c.h.b16 %v3698
  %v3792 = vunpack.c.l.b16 %v3699
  %v3793 = vunpack.c.h.b16 %v3699
  %v3794 = vunpack.c.l.b16 %v3700
  %v3795 = vunpack.c.h.b16 %v3700
  %v3796 = vunpack.c.l.b16 %v3701
  %v3797 = vunpack.c.h.b16 %v3701
  %v3798 = vpack.c.b16 %v3738, %v3734
  %v3799 = vpack.c.b16 %v3739, %v3735
  %v3800 = vpack.c.b16 %v3740, %v3736
  %v3801 = vpack.c.b16 %v3741, %v3737
  %v3802 = vpack.c.b16 %v3746, %v3742
  %v3803 = vpack.c.b16 %v3747, %v3743
  %v3804 = vpack.c.b16 %v3748, %v3744
  %v3805 = vpack.c.b16 %v3749, %v3745
  %v3806 = vpack.c.b16 %v3754, %v3750
  %v3807 = vpack.c.b16 %v3755, %v3751
  %v3808 = vpack.c.b16 %v3756, %v3752
  %v3809 = vpack.c.b16 %v3757, %v3753
  %v3810 = vpack.c.b16 %v3762, %v3758
  %v3811 = vpack.c.b16 %v3763, %v3759
  %v3812 = vpack.c.b16 %v3764, %v3760
  %v3813 = vpack.c.b16 %v3765, %v3761
  %v3814 = vpack.c.b16 %v3770, %v3766
  %v3815 = vpack.c.b16 %v3771, %v3767
  %v3816 = vpack.c.b16 %v3772, %v3768
  %v3817 = vpack.c.b16 %v3773, %v3769
  %v3818 = vpack.c.b16 %v3778, %v3774
  %v3819 = vpack.c.b16 %v3779, %v3775
  %v3820 = vpack.c.b16 %v3780, %v3776
  %v3821 = vpack.c.b16 %v3781, %v3777
  %v3822 = vpack.c.b16 %v3786, %v3782
  %v3823 = vpack.c.b16 %v3787, %v3783
  %v3824 = vpack.c.b16 %v3788, %v3784
  %v3825 = vpack.c.b16 %v3789, %v3785
  %v3826 = vpack.c.b16 %v3794, %v3790
  %v3827 = vpack.c.b16 %v3795, %v3791
  %v3828 = vpack.c.b16 %v3796, %v3792
  %v3829 = vpack.c.b16 %v3797, %v3793
  %3862 = vmatpush.bf16.msra.mxu0 %v3826
  %3863 = vmatpush.bf16.msra.mxu0 %v3822
  %3864 = vmatpush.bf16.msra.mxu0 %v3818
  %3865 = vmatpush.bf16.msra.mxu0 %v3814
  %3866 = vmatpush.bf16.msra.mxu0 %v3810
  %3867 = vmatpush.bf16.msra.mxu0 %v3806
  %3868 = vmatpush.bf16.msra.mxu0 %v3802
  %3869 = vmatpush.bf16.msra.mxu0 %v3798
  %3870 = vmatmul.bf16.gmra.mxu0 %v3668
  %v3871 = vpop.f32.mrf.mxu0
  %v3872 = vadd.f32 0.0, %v3871
  %v3873 = vpop.f32.mrf.mxu0
  %3874 = vdwg.mxu0
  %3875 = vmatpush.bf16.msra.mxu0 %v3827
  %3876 = vmatpush.bf16.msra.mxu0 %v3823
  %3877 = vmatpush.bf16.msra.mxu0 %v3819
  %3878 = vmatpush.bf16.msra.mxu0 %v3815
  %3879 = vmatpush.bf16.msra.mxu0 %v3811
  %3880 = vmatpush.bf16.msra.mxu0 %v3807
  %3881 = vmatpush.bf16.msra.mxu0 %v3803
  %3882 = vmatpush.bf16.msra.mxu0 %v3799
  %3883 = vmatmul.bf16.gmra.mxu0 %v3668
  %v3884 = vpop.f32.mrf.mxu0
  %v3885 = vadd.f32 0.0, %v3884
  %v3886 = vpop.f32.mrf.mxu0
  %3887 = vdwg.mxu0
  %3888 = vmatpush.bf16.msra.mxu0 %v3828
  %3889 = vmatpush.bf16.msra.mxu0 %v3824
  %3890 = vmatpush.bf16.msra.mxu0 %v3820
  %3891 = vmatpush.bf16.msra.mxu0 %v3816
  %3892 = vmatpush.bf16.msra.mxu0 %v3812
  %3893 = vmatpush.bf16.msra.mxu0 %v3808
  %3894 = vmatpush.bf16.msra.mxu0 %v3804
  %3895 = vmatpush.bf16.msra.mxu0 %v3800
  %3896 = vmatmul.bf16.gmra.mxu0 %v3668
  %v3897 = vpop.f32.mrf.mxu0
  %v3898 = vadd.f32 0.0, %v3897
  %v3899 = vpop.f32.mrf.mxu0
  %3900 = vdwg.mxu0
  %3901 = vmatpush.bf16.msra.mxu0 %v3829
  %3902 = vmatpush.bf16.msra.mxu0 %v3825
  %3903 = vmatpush.bf16.msra.mxu0 %v3821
  %3904 = vmatpush.bf16.msra.mxu0 %v3817
  %3905 = vmatpush.bf16.msra.mxu0 %v3813
  %3906 = vmatpush.bf16.msra.mxu0 %v3809
  %3907 = vmatpush.bf16.msra.mxu0 %v3805
  %3908 = vmatpush.bf16.msra.mxu0 %v3801
  %3909 = vmatmul.bf16.gmra.mxu0 %v3668
  %v3910 = vpop.f32.mrf.mxu0
  %v3911 = vadd.f32 0.0, %v3910
  %v3912 = vpop.f32.mrf.mxu0
  %3913 = vdwg.mxu0
  %v3914 = vadd.f32 %v3663, %v3872
  %v3915 = vadd.f32 %v3664, %v3885
  %v3916 = vadd.f32 %v3665, %v3898
  %v3917 = vadd.f32 %v3666, %v3911
  %v3918 = vld [vmem:[#allocation2 + $0x16] sm:$0x3]
  %v3919 = vpack.c.bf16 %v3918, %v3918
  %s3920 = scalar_lea.vmem %s4, 2816
  %v3921 = vld [vmem:[%s3920] sm:$0xff]
  %v3922 = vld [vmem:[%s3920 + $0x8] sm:$0xff]
  %v3923 = vld [vmem:[%s3920 + $0x10] sm:$0xff]
  %v3924 = vld [vmem:[%s3920 + $0x18] sm:$0xff]
  %v3925 = vld [vmem:[%s3920 + $0x20] sm:$0xff]
  %v3926 = vld [vmem:[%s3920 + $0x28] sm:$0xff]
  %v3927 = vld [vmem:[%s3920 + $0x30] sm:$0xff]
  %v3928 = vld [vmem:[%s3920 + $0x38] sm:$0xff]
  %v3929 = vld [vmem:[%s3920 + $0x40] sm:$0xff]
  %v3930 = vld [vmem:[%s3920 + $0x48] sm:$0xff]
  %v3931 = vld [vmem:[%s3920 + $0x50] sm:$0xff]
  %v3932 = vld [vmem:[%s3920 + $0x58] sm:$0xff]
  %v3933 = vld [vmem:[%s3920 + $0x60] sm:$0xff]
  %v3934 = vld [vmem:[%s3920 + $0x68] sm:$0xff]
  %v3935 = vld [vmem:[%s3920 + $0x70] sm:$0xff]
  %v3936 = vld [vmem:[%s3920 + $0x78] sm:$0xff]
  %v3937 = vld [vmem:[%s3920 + $0x80] sm:$0xff]
  %v3938 = vld [vmem:[%s3920 + $0x88] sm:$0xff]
  %v3939 = vld [vmem:[%s3920 + $0x90] sm:$0xff]
  %v3940 = vld [vmem:[%s3920 + $0x98] sm:$0xff]
  %v3941 = vld [vmem:[%s3920 + $0xa0] sm:$0xff]
  %v3942 = vld [vmem:[%s3920 + $0xa8] sm:$0xff]
  %v3943 = vld [vmem:[%s3920 + $0xb0] sm:$0xff]
  %v3944 = vld [vmem:[%s3920 + $0xb8] sm:$0xff]
  %v3945 = vld [vmem:[%s3920 + $0xc0] sm:$0xff]
  %v3946 = vld [vmem:[%s3920 + $0xc8] sm:$0xff]
  %v3947 = vld [vmem:[%s3920 + $0xd0] sm:$0xff]
  %v3948 = vld [vmem:[%s3920 + $0xd8] sm:$0xff]
  %v3949 = vld [vmem:[%s3920 + $0xe0] sm:$0xff]
  %v3950 = vld [vmem:[%s3920 + $0xe8] sm:$0xff]
  %v3951 = vld [vmem:[%s3920 + $0xf0] sm:$0xff]
  %v3952 = vld [vmem:[%s3920 + $0xf8] sm:$0xff]
  %v3985 = vunpack.c.l.b16 %v3921
  %v3986 = vunpack.c.h.b16 %v3921
  %v3987 = vunpack.c.l.b16 %v3922
  %v3988 = vunpack.c.h.b16 %v3922
  %v3989 = vunpack.c.l.b16 %v3923
  %v3990 = vunpack.c.h.b16 %v3923
  %v3991 = vunpack.c.l.b16 %v3924
  %v3992 = vunpack.c.h.b16 %v3924
  %v3993 = vunpack.c.l.b16 %v3925
  %v3994 = vunpack.c.h.b16 %v3925
  %v3995 = vunpack.c.l.b16 %v3926
  %v3996 = vunpack.c.h.b16 %v3926
  %v3997 = vunpack.c.l.b16 %v3927
  %v3998 = vunpack.c.h.b16 %v3927
  %v3999 = vunpack.c.l.b16 %v3928
  %v4000 = vunpack.c.h.b16 %v3928
  %v4001 = vunpack.c.l.b16 %v3929
  %v4002 = vunpack.c.h.b16 %v3929
  %v4003 = vunpack.c.l.b16 %v3930
  %v4004 = vunpack.c.h.b16 %v3930
  %v4005 = vunpack.c.l.b16 %v3931
  %v4006 = vunpack.c.h.b16 %v3931
  %v4007 = vunpack.c.l.b16 %v3932
  %v4008 = vunpack.c.h.b16 %v3932
  %v4009 = vunpack.c.l.b16 %v3933
  %v4010 = vunpack.c.h.b16 %v3933
  %v4011 = vunpack.c.l.b16 %v3934
  %v4012 = vunpack.c.h.b16 %v3934
  %v4013 = vunpack.c.l.b16 %v3935
  %v4014 = vunpack.c.h.b16 %v3935
  %v4015 = vunpack.c.l.b16 %v3936
  %v4016 = vunpack.c.h.b16 %v3936
  %v4017 = vunpack.c.l.b16 %v3937
  %v4018 = vunpack.c.h.b16 %v3937
  %v4019 = vunpack.c.l.b16 %v3938
  %v4020 = vunpack.c.h.b16 %v3938
  %v4021 = vunpack.c.l.b16 %v3939
  %v4022 = vunpack.c.h.b16 %v3939
  %v4023 = vunpack.c.l.b16 %v3940
  %v4024 = vunpack.c.h.b16 %v3940
  %v4025 = vunpack.c.l.b16 %v3941
  %v4026 = vunpack.c.h.b16 %v3941
  %v4027 = vunpack.c.l.b16 %v3942
  %v4028 = vunpack.c.h.b16 %v3942
  %v4029 = vunpack.c.l.b16 %v3943
  %v4030 = vunpack.c.h.b16 %v3943
  %v4031 = vunpack.c.l.b16 %v3944
  %v4032 = vunpack.c.h.b16 %v3944
  %v4033 = vunpack.c.l.b16 %v3945
  %v4034 = vunpack.c.h.b16 %v3945
  %v4035 = vunpack.c.l.b16 %v3946
  %v4036 = vunpack.c.h.b16 %v3946
  %v4037 = vunpack.c.l.b16 %v3947
  %v4038 = vunpack.c.h.b16 %v3947
  %v4039 = vunpack.c.l.b16 %v3948
  %v4040 = vunpack.c.h.b16 %v3948
  %v4041 = vunpack.c.l.b16 %v3949
  %v4042 = vunpack.c.h.b16 %v3949
  %v4043 = vunpack.c.l.b16 %v3950
  %v4044 = vunpack.c.h.b16 %v3950
  %v4045 = vunpack.c.l.b16 %v3951
  %v4046 = vunpack.c.h.b16 %v3951
  %v4047 = vunpack.c.l.b16 %v3952
  %v4048 = vunpack.c.h.b16 %v3952
  %v4049 = vpack.c.b16 %v3989, %v3985
  %v4050 = vpack.c.b16 %v3990, %v3986
  %v4051 = vpack.c.b16 %v3991, %v3987
  %v4052 = vpack.c.b16 %v3992, %v3988
  %v4053 = vpack.c.b16 %v3997, %v3993
  %v4054 = vpack.c.b16 %v3998, %v3994
  %v4055 = vpack.c.b16 %v3999, %v3995
  %v4056 = vpack.c.b16 %v4000, %v3996
  %v4057 = vpack.c.b16 %v4005, %v4001
  %v4058 = vpack.c.b16 %v4006, %v4002
  %v4059 = vpack.c.b16 %v4007, %v4003
  %v4060 = vpack.c.b16 %v4008, %v4004
  %v4061 = vpack.c.b16 %v4013, %v4009
  %v4062 = vpack.c.b16 %v4014, %v4010
  %v4063 = vpack.c.b16 %v4015, %v4011
  %v4064 = vpack.c.b16 %v4016, %v4012
  %v4065 = vpack.c.b16 %v4021, %v4017
  %v4066 = vpack.c.b16 %v4022, %v4018
  %v4067 = vpack.c.b16 %v4023, %v4019
  %v4068 = vpack.c.b16 %v4024, %v4020
  %v4069 = vpack.c.b16 %v4029, %v4025
  %v4070 = vpack.c.b16 %v4030, %v4026
  %v4071 = vpack.c.b16 %v4031, %v4027
  %v4072 = vpack.c.b16 %v4032, %v4028
  %v4073 = vpack.c.b16 %v4037, %v4033
  %v4074 = vpack.c.b16 %v4038, %v4034
  %v4075 = vpack.c.b16 %v4039, %v4035
  %v4076 = vpack.c.b16 %v4040, %v4036
  %v4077 = vpack.c.b16 %v4045, %v4041
  %v4078 = vpack.c.b16 %v4046, %v4042
  %v4079 = vpack.c.b16 %v4047, %v4043
  %v4080 = vpack.c.b16 %v4048, %v4044
  %4113 = vmatpush.bf16.msra.mxu0 %v4077
  %4114 = vmatpush.bf16.msra.mxu0 %v4073
  %4115 = vmatpush.bf16.msra.mxu0 %v4069
  %4116 = vmatpush.bf16.msra.mxu0 %v4065
  %4117 = vmatpush.bf16.msra.mxu0 %v4061
  %4118 = vmatpush.bf16.msra.mxu0 %v4057
  %4119 = vmatpush.bf16.msra.mxu0 %v4053
  %4120 = vmatpush.bf16.msra.mxu0 %v4049
  %4121 = vmatmul.bf16.gmra.mxu0 %v3919
  %v4122 = vpop.f32.mrf.mxu0
  %v4123 = vadd.f32 0.0, %v4122
  %v4124 = vpop.f32.mrf.mxu0
  %4125 = vdwg.mxu0
  %4126 = vmatpush.bf16.msra.mxu0 %v4078
  %4127 = vmatpush.bf16.msra.mxu0 %v4074
  %4128 = vmatpush.bf16.msra.mxu0 %v4070
  %4129 = vmatpush.bf16.msra.mxu0 %v4066
  %4130 = vmatpush.bf16.msra.mxu0 %v4062
  %4131 = vmatpush.bf16.msra.mxu0 %v4058
  %4132 = vmatpush.bf16.msra.mxu0 %v4054
  %4133 = vmatpush.bf16.msra.mxu0 %v4050
  %4134 = vmatmul.bf16.gmra.mxu0 %v3919
  %v4135 = vpop.f32.mrf.mxu0
  %v4136 = vadd.f32 0.0, %v4135
  %v4137 = vpop.f32.mrf.mxu0
  %4138 = vdwg.mxu0
  %4139 = vmatpush.bf16.msra.mxu0 %v4079
  %4140 = vmatpush.bf16.msra.mxu0 %v4075
  %4141 = vmatpush.bf16.msra.mxu0 %v4071
  %4142 = vmatpush.bf16.msra.mxu0 %v4067
  %4143 = vmatpush.bf16.msra.mxu0 %v4063
  %4144 = vmatpush.bf16.msra.mxu0 %v4059
  %4145 = vmatpush.bf16.msra.mxu0 %v4055
  %4146 = vmatpush.bf16.msra.mxu0 %v4051
  %4147 = vmatmul.bf16.gmra.mxu0 %v3919
  %v4148 = vpop.f32.mrf.mxu0
  %v4149 = vadd.f32 0.0, %v4148
  %v4150 = vpop.f32.mrf.mxu0
  %4151 = vdwg.mxu0
  %4152 = vmatpush.bf16.msra.mxu0 %v4080
  %4153 = vmatpush.bf16.msra.mxu0 %v4076
  %4154 = vmatpush.bf16.msra.mxu0 %v4072
  %4155 = vmatpush.bf16.msra.mxu0 %v4068
  %4156 = vmatpush.bf16.msra.mxu0 %v4064
  %4157 = vmatpush.bf16.msra.mxu0 %v4060
  %4158 = vmatpush.bf16.msra.mxu0 %v4056
  %4159 = vmatpush.bf16.msra.mxu0 %v4052
  %4160 = vmatmul.bf16.gmra.mxu0 %v3919
  %v4161 = vpop.f32.mrf.mxu0
  %v4162 = vadd.f32 0.0, %v4161
  %v4163 = vpop.f32.mrf.mxu0
  %4164 = vdwg.mxu0
  %v4165 = vadd.f32 %v3914, %v4123
  %v4166 = vadd.f32 %v3915, %v4136
  %v4167 = vadd.f32 %v3916, %v4149
  %v4168 = vadd.f32 %v3917, %v4162
  %v4169 = vld [vmem:[#allocation2 + $0x18] sm:$0x3]
  %v4170 = vpack.c.bf16 %v4169, %v4169
  %s4171 = scalar_lea.vmem %s4, 3072
  %v4172 = vld [vmem:[%s4171] sm:$0xff]
  %v4173 = vld [vmem:[%s4171 + $0x8] sm:$0xff]
  %v4174 = vld [vmem:[%s4171 + $0x10] sm:$0xff]
  %v4175 = vld [vmem:[%s4171 + $0x18] sm:$0xff]
  %v4176 = vld [vmem:[%s4171 + $0x20] sm:$0xff]
  %v4177 = vld [vmem:[%s4171 + $0x28] sm:$0xff]
  %v4178 = vld [vmem:[%s4171 + $0x30] sm:$0xff]
  %v4179 = vld [vmem:[%s4171 + $0x38] sm:$0xff]
  %v4180 = vld [vmem:[%s4171 + $0x40] sm:$0xff]
  %v4181 = vld [vmem:[%s4171 + $0x48] sm:$0xff]
  %v4182 = vld [vmem:[%s4171 + $0x50] sm:$0xff]
  %v4183 = vld [vmem:[%s4171 + $0x58] sm:$0xff]
  %v4184 = vld [vmem:[%s4171 + $0x60] sm:$0xff]
  %v4185 = vld [vmem:[%s4171 + $0x68] sm:$0xff]
  %v4186 = vld [vmem:[%s4171 + $0x70] sm:$0xff]
  %v4187 = vld [vmem:[%s4171 + $0x78] sm:$0xff]
  %v4188 = vld [vmem:[%s4171 + $0x80] sm:$0xff]
  %v4189 = vld [vmem:[%s4171 + $0x88] sm:$0xff]
  %v4190 = vld [vmem:[%s4171 + $0x90] sm:$0xff]
  %v4191 = vld [vmem:[%s4171 + $0x98] sm:$0xff]
  %v4192 = vld [vmem:[%s4171 + $0xa0] sm:$0xff]
  %v4193 = vld [vmem:[%s4171 + $0xa8] sm:$0xff]
  %v4194 = vld [vmem:[%s4171 + $0xb0] sm:$0xff]
  %v4195 = vld [vmem:[%s4171 + $0xb8] sm:$0xff]
  %v4196 = vld [vmem:[%s4171 + $0xc0] sm:$0xff]
  %v4197 = vld [vmem:[%s4171 + $0xc8] sm:$0xff]
  %v4198 = vld [vmem:[%s4171 + $0xd0] sm:$0xff]
  %v4199 = vld [vmem:[%s4171 + $0xd8] sm:$0xff]
  %v4200 = vld [vmem:[%s4171 + $0xe0] sm:$0xff]
  %v4201 = vld [vmem:[%s4171 + $0xe8] sm:$0xff]
  %v4202 = vld [vmem:[%s4171 + $0xf0] sm:$0xff]
  %v4203 = vld [vmem:[%s4171 + $0xf8] sm:$0xff]
  %v4236 = vunpack.c.l.b16 %v4172
  %v4237 = vunpack.c.h.b16 %v4172
  %v4238 = vunpack.c.l.b16 %v4173
  %v4239 = vunpack.c.h.b16 %v4173
  %v4240 = vunpack.c.l.b16 %v4174
  %v4241 = vunpack.c.h.b16 %v4174
  %v4242 = vunpack.c.l.b16 %v4175
  %v4243 = vunpack.c.h.b16 %v4175
  %v4244 = vunpack.c.l.b16 %v4176
  %v4245 = vunpack.c.h.b16 %v4176
  %v4246 = vunpack.c.l.b16 %v4177
  %v4247 = vunpack.c.h.b16 %v4177
  %v4248 = vunpack.c.l.b16 %v4178
  %v4249 = vunpack.c.h.b16 %v4178
  %v4250 = vunpack.c.l.b16 %v4179
  %v4251 = vunpack.c.h.b16 %v4179
  %v4252 = vunpack.c.l.b16 %v4180
  %v4253 = vunpack.c.h.b16 %v4180
  %v4254 = vunpack.c.l.b16 %v4181
  %v4255 = vunpack.c.h.b16 %v4181
  %v4256 = vunpack.c.l.b16 %v4182
  %v4257 = vunpack.c.h.b16 %v4182
  %v4258 = vunpack.c.l.b16 %v4183
  %v4259 = vunpack.c.h.b16 %v4183
  %v4260 = vunpack.c.l.b16 %v4184
  %v4261 = vunpack.c.h.b16 %v4184
  %v4262 = vunpack.c.l.b16 %v4185
  %v4263 = vunpack.c.h.b16 %v4185
  %v4264 = vunpack.c.l.b16 %v4186
  %v4265 = vunpack.c.h.b16 %v4186
  %v4266 = vunpack.c.l.b16 %v4187
  %v4267 = vunpack.c.h.b16 %v4187
  %v4268 = vunpack.c.l.b16 %v4188
  %v4269 = vunpack.c.h.b16 %v4188
  %v4270 = vunpack.c.l.b16 %v4189
  %v4271 = vunpack.c.h.b16 %v4189
  %v4272 = vunpack.c.l.b16 %v4190
  %v4273 = vunpack.c.h.b16 %v4190
  %v4274 = vunpack.c.l.b16 %v4191
  %v4275 = vunpack.c.h.b16 %v4191
  %v4276 = vunpack.c.l.b16 %v4192
  %v4277 = vunpack.c.h.b16 %v4192
  %v4278 = vunpack.c.l.b16 %v4193
  %v4279 = vunpack.c.h.b16 %v4193
  %v4280 = vunpack.c.l.b16 %v4194
  %v4281 = vunpack.c.h.b16 %v4194
  %v4282 = vunpack.c.l.b16 %v4195
  %v4283 = vunpack.c.h.b16 %v4195
  %v4284 = vunpack.c.l.b16 %v4196
  %v4285 = vunpack.c.h.b16 %v4196
  %v4286 = vunpack.c.l.b16 %v4197
  %v4287 = vunpack.c.h.b16 %v4197
  %v4288 = vunpack.c.l.b16 %v4198
  %v4289 = vunpack.c.h.b16 %v4198
  %v4290 = vunpack.c.l.b16 %v4199
  %v4291 = vunpack.c.h.b16 %v4199
  %v4292 = vunpack.c.l.b16 %v4200
  %v4293 = vunpack.c.h.b16 %v4200
  %v4294 = vunpack.c.l.b16 %v4201
  %v4295 = vunpack.c.h.b16 %v4201
  %v4296 = vunpack.c.l.b16 %v4202
  %v4297 = vunpack.c.h.b16 %v4202
  %v4298 = vunpack.c.l.b16 %v4203
  %v4299 = vunpack.c.h.b16 %v4203
  %v4300 = vpack.c.b16 %v4240, %v4236
  %v4301 = vpack.c.b16 %v4241, %v4237
  %v4302 = vpack.c.b16 %v4242, %v4238
  %v4303 = vpack.c.b16 %v4243, %v4239
  %v4304 = vpack.c.b16 %v4248, %v4244
  %v4305 = vpack.c.b16 %v4249, %v4245
  %v4306 = vpack.c.b16 %v4250, %v4246
  %v4307 = vpack.c.b16 %v4251, %v4247
  %v4308 = vpack.c.b16 %v4256, %v4252
  %v4309 = vpack.c.b16 %v4257, %v4253
  %v4310 = vpack.c.b16 %v4258, %v4254
  %v4311 = vpack.c.b16 %v4259, %v4255
  %v4312 = vpack.c.b16 %v4264, %v4260
  %v4313 = vpack.c.b16 %v4265, %v4261
  %v4314 = vpack.c.b16 %v4266, %v4262
  %v4315 = vpack.c.b16 %v4267, %v4263
  %v4316 = vpack.c.b16 %v4272, %v4268
  %v4317 = vpack.c.b16 %v4273, %v4269
  %v4318 = vpack.c.b16 %v4274, %v4270
  %v4319 = vpack.c.b16 %v4275, %v4271
  %v4320 = vpack.c.b16 %v4280, %v4276
  %v4321 = vpack.c.b16 %v4281, %v4277
  %v4322 = vpack.c.b16 %v4282, %v4278
  %v4323 = vpack.c.b16 %v4283, %v4279
  %v4324 = vpack.c.b16 %v4288, %v4284
  %v4325 = vpack.c.b16 %v4289, %v4285
  %v4326 = vpack.c.b16 %v4290, %v4286
  %v4327 = vpack.c.b16 %v4291, %v4287
  %v4328 = vpack.c.b16 %v4296, %v4292
  %v4329 = vpack.c.b16 %v4297, %v4293
  %v4330 = vpack.c.b16 %v4298, %v4294
  %v4331 = vpack.c.b16 %v4299, %v4295
  %4364 = vmatpush.bf16.msra.mxu0 %v4328
  %4365 = vmatpush.bf16.msra.mxu0 %v4324
  %4366 = vmatpush.bf16.msra.mxu0 %v4320
  %4367 = vmatpush.bf16.msra.mxu0 %v4316
  %4368 = vmatpush.bf16.msra.mxu0 %v4312
  %4369 = vmatpush.bf16.msra.mxu0 %v4308
  %4370 = vmatpush.bf16.msra.mxu0 %v4304
  %4371 = vmatpush.bf16.msra.mxu0 %v4300
  %4372 = vmatmul.bf16.gmra.mxu0 %v4170
  %v4373 = vpop.f32.mrf.mxu0
  %v4374 = vadd.f32 0.0, %v4373
  %v4375 = vpop.f32.mrf.mxu0
  %4376 = vdwg.mxu0
  %4377 = vmatpush.bf16.msra.mxu0 %v4329
  %4378 = vmatpush.bf16.msra.mxu0 %v4325
  %4379 = vmatpush.bf16.msra.mxu0 %v4321
  %4380 = vmatpush.bf16.msra.mxu0 %v4317
  %4381 = vmatpush.bf16.msra.mxu0 %v4313
  %4382 = vmatpush.bf16.msra.mxu0 %v4309
  %4383 = vmatpush.bf16.msra.mxu0 %v4305
  %4384 = vmatpush.bf16.msra.mxu0 %v4301
  %4385 = vmatmul.bf16.gmra.mxu0 %v4170
  %v4386 = vpop.f32.mrf.mxu0
  %v4387 = vadd.f32 0.0, %v4386
  %v4388 = vpop.f32.mrf.mxu0
  %4389 = vdwg.mxu0
  %4390 = vmatpush.bf16.msra.mxu0 %v4330
  %4391 = vmatpush.bf16.msra.mxu0 %v4326
  %4392 = vmatpush.bf16.msra.mxu0 %v4322
  %4393 = vmatpush.bf16.msra.mxu0 %v4318
  %4394 = vmatpush.bf16.msra.mxu0 %v4314
  %4395 = vmatpush.bf16.msra.mxu0 %v4310
  %4396 = vmatpush.bf16.msra.mxu0 %v4306
  %4397 = vmatpush.bf16.msra.mxu0 %v4302
  %4398 = vmatmul.bf16.gmra.mxu0 %v4170
  %v4399 = vpop.f32.mrf.mxu0
  %v4400 = vadd.f32 0.0, %v4399
  %v4401 = vpop.f32.mrf.mxu0
  %4402 = vdwg.mxu0
  %4403 = vmatpush.bf16.msra.mxu0 %v4331
  %4404 = vmatpush.bf16.msra.mxu0 %v4327
  %4405 = vmatpush.bf16.msra.mxu0 %v4323
  %4406 = vmatpush.bf16.msra.mxu0 %v4319
  %4407 = vmatpush.bf16.msra.mxu0 %v4315
  %4408 = vmatpush.bf16.msra.mxu0 %v4311
  %4409 = vmatpush.bf16.msra.mxu0 %v4307
  %4410 = vmatpush.bf16.msra.mxu0 %v4303
  %4411 = vmatmul.bf16.gmra.mxu0 %v4170
  %v4412 = vpop.f32.mrf.mxu0
  %v4413 = vadd.f32 0.0, %v4412
  %v4414 = vpop.f32.mrf.mxu0
  %4415 = vdwg.mxu0
  %v4416 = vadd.f32 %v4165, %v4374
  %v4417 = vadd.f32 %v4166, %v4387
  %v4418 = vadd.f32 %v4167, %v4400
  %v4419 = vadd.f32 %v4168, %v4413
  %v4420 = vld [vmem:[#allocation2 + $0x1a] sm:$0x3]
  %v4421 = vpack.c.bf16 %v4420, %v4420
  %s4422 = scalar_lea.vmem %s4, 3328
  %v4423 = vld [vmem:[%s4422] sm:$0xff]
  %v4424 = vld [vmem:[%s4422 + $0x8] sm:$0xff]
  %v4425 = vld [vmem:[%s4422 + $0x10] sm:$0xff]
  %v4426 = vld [vmem:[%s4422 + $0x18] sm:$0xff]
  %v4427 = vld [vmem:[%s4422 + $0x20] sm:$0xff]
  %v4428 = vld [vmem:[%s4422 + $0x28] sm:$0xff]
  %v4429 = vld [vmem:[%s4422 + $0x30] sm:$0xff]
  %v4430 = vld [vmem:[%s4422 + $0x38] sm:$0xff]
  %v4431 = vld [vmem:[%s4422 + $0x40] sm:$0xff]
  %v4432 = vld [vmem:[%s4422 + $0x48] sm:$0xff]
  %v4433 = vld [vmem:[%s4422 + $0x50] sm:$0xff]
  %v4434 = vld [vmem:[%s4422 + $0x58] sm:$0xff]
  %v4435 = vld [vmem:[%s4422 + $0x60] sm:$0xff]
  %v4436 = vld [vmem:[%s4422 + $0x68] sm:$0xff]
  %v4437 = vld [vmem:[%s4422 + $0x70] sm:$0xff]
  %v4438 = vld [vmem:[%s4422 + $0x78] sm:$0xff]
  %v4439 = vld [vmem:[%s4422 + $0x80] sm:$0xff]
  %v4440 = vld [vmem:[%s4422 + $0x88] sm:$0xff]
  %v4441 = vld [vmem:[%s4422 + $0x90] sm:$0xff]
  %v4442 = vld [vmem:[%s4422 + $0x98] sm:$0xff]
  %v4443 = vld [vmem:[%s4422 + $0xa0] sm:$0xff]
  %v4444 = vld [vmem:[%s4422 + $0xa8] sm:$0xff]
  %v4445 = vld [vmem:[%s4422 + $0xb0] sm:$0xff]
  %v4446 = vld [vmem:[%s4422 + $0xb8] sm:$0xff]
  %v4447 = vld [vmem:[%s4422 + $0xc0] sm:$0xff]
  %v4448 = vld [vmem:[%s4422 + $0xc8] sm:$0xff]
  %v4449 = vld [vmem:[%s4422 + $0xd0] sm:$0xff]
  %v4450 = vld [vmem:[%s4422 + $0xd8] sm:$0xff]
  %v4451 = vld [vmem:[%s4422 + $0xe0] sm:$0xff]
  %v4452 = vld [vmem:[%s4422 + $0xe8] sm:$0xff]
  %v4453 = vld [vmem:[%s4422 + $0xf0] sm:$0xff]
  %v4454 = vld [vmem:[%s4422 + $0xf8] sm:$0xff]
  %v4487 = vunpack.c.l.b16 %v4423
  %v4488 = vunpack.c.h.b16 %v4423
  %v4489 = vunpack.c.l.b16 %v4424
  %v4490 = vunpack.c.h.b16 %v4424
  %v4491 = vunpack.c.l.b16 %v4425
  %v4492 = vunpack.c.h.b16 %v4425
  %v4493 = vunpack.c.l.b16 %v4426
  %v4494 = vunpack.c.h.b16 %v4426
  %v4495 = vunpack.c.l.b16 %v4427
  %v4496 = vunpack.c.h.b16 %v4427
  %v4497 = vunpack.c.l.b16 %v4428
  %v4498 = vunpack.c.h.b16 %v4428
  %v4499 = vunpack.c.l.b16 %v4429
  %v4500 = vunpack.c.h.b16 %v4429
  %v4501 = vunpack.c.l.b16 %v4430
  %v4502 = vunpack.c.h.b16 %v4430
  %v4503 = vunpack.c.l.b16 %v4431
  %v4504 = vunpack.c.h.b16 %v4431
  %v4505 = vunpack.c.l.b16 %v4432
  %v4506 = vunpack.c.h.b16 %v4432
  %v4507 = vunpack.c.l.b16 %v4433
  %v4508 = vunpack.c.h.b16 %v4433
  %v4509 = vunpack.c.l.b16 %v4434
  %v4510 = vunpack.c.h.b16 %v4434
  %v4511 = vunpack.c.l.b16 %v4435
  %v4512 = vunpack.c.h.b16 %v4435
  %v4513 = vunpack.c.l.b16 %v4436
  %v4514 = vunpack.c.h.b16 %v4436
  %v4515 = vunpack.c.l.b16 %v4437
  %v4516 = vunpack.c.h.b16 %v4437
  %v4517 = vunpack.c.l.b16 %v4438
  %v4518 = vunpack.c.h.b16 %v4438
  %v4519 = vunpack.c.l.b16 %v4439
  %v4520 = vunpack.c.h.b16 %v4439
  %v4521 = vunpack.c.l.b16 %v4440
  %v4522 = vunpack.c.h.b16 %v4440
  %v4523 = vunpack.c.l.b16 %v4441
  %v4524 = vunpack.c.h.b16 %v4441
  %v4525 = vunpack.c.l.b16 %v4442
  %v4526 = vunpack.c.h.b16 %v4442
  %v4527 = vunpack.c.l.b16 %v4443
  %v4528 = vunpack.c.h.b16 %v4443
  %v4529 = vunpack.c.l.b16 %v4444
  %v4530 = vunpack.c.h.b16 %v4444
  %v4531 = vunpack.c.l.b16 %v4445
  %v4532 = vunpack.c.h.b16 %v4445
  %v4533 = vunpack.c.l.b16 %v4446
  %v4534 = vunpack.c.h.b16 %v4446
  %v4535 = vunpack.c.l.b16 %v4447
  %v4536 = vunpack.c.h.b16 %v4447
  %v4537 = vunpack.c.l.b16 %v4448
  %v4538 = vunpack.c.h.b16 %v4448
  %v4539 = vunpack.c.l.b16 %v4449
  %v4540 = vunpack.c.h.b16 %v4449
  %v4541 = vunpack.c.l.b16 %v4450
  %v4542 = vunpack.c.h.b16 %v4450
  %v4543 = vunpack.c.l.b16 %v4451
  %v4544 = vunpack.c.h.b16 %v4451
  %v4545 = vunpack.c.l.b16 %v4452
  %v4546 = vunpack.c.h.b16 %v4452
  %v4547 = vunpack.c.l.b16 %v4453
  %v4548 = vunpack.c.h.b16 %v4453
  %v4549 = vunpack.c.l.b16 %v4454
  %v4550 = vunpack.c.h.b16 %v4454
  %v4551 = vpack.c.b16 %v4491, %v4487
  %v4552 = vpack.c.b16 %v4492, %v4488
  %v4553 = vpack.c.b16 %v4493, %v4489
  %v4554 = vpack.c.b16 %v4494, %v4490
  %v4555 = vpack.c.b16 %v4499, %v4495
  %v4556 = vpack.c.b16 %v4500, %v4496
  %v4557 = vpack.c.b16 %v4501, %v4497
  %v4558 = vpack.c.b16 %v4502, %v4498
  %v4559 = vpack.c.b16 %v4507, %v4503
  %v4560 = vpack.c.b16 %v4508, %v4504
  %v4561 = vpack.c.b16 %v4509, %v4505
  %v4562 = vpack.c.b16 %v4510, %v4506
  %v4563 = vpack.c.b16 %v4515, %v4511
  %v4564 = vpack.c.b16 %v4516, %v4512
  %v4565 = vpack.c.b16 %v4517, %v4513
  %v4566 = vpack.c.b16 %v4518, %v4514
  %v4567 = vpack.c.b16 %v4523, %v4519
  %v4568 = vpack.c.b16 %v4524, %v4520
  %v4569 = vpack.c.b16 %v4525, %v4521
  %v4570 = vpack.c.b16 %v4526, %v4522
  %v4571 = vpack.c.b16 %v4531, %v4527
  %v4572 = vpack.c.b16 %v4532, %v4528
  %v4573 = vpack.c.b16 %v4533, %v4529
  %v4574 = vpack.c.b16 %v4534, %v4530
  %v4575 = vpack.c.b16 %v4539, %v4535
  %v4576 = vpack.c.b16 %v4540, %v4536
  %v4577 = vpack.c.b16 %v4541, %v4537
  %v4578 = vpack.c.b16 %v4542, %v4538
  %v4579 = vpack.c.b16 %v4547, %v4543
  %v4580 = vpack.c.b16 %v4548, %v4544
  %v4581 = vpack.c.b16 %v4549, %v4545
  %v4582 = vpack.c.b16 %v4550, %v4546
  %4615 = vmatpush.bf16.msra.mxu0 %v4579
  %4616 = vmatpush.bf16.msra.mxu0 %v4575
  %4617 = vmatpush.bf16.msra.mxu0 %v4571
  %4618 = vmatpush.bf16.msra.mxu0 %v4567
  %4619 = vmatpush.bf16.msra.mxu0 %v4563
  %4620 = vmatpush.bf16.msra.mxu0 %v4559
  %4621 = vmatpush.bf16.msra.mxu0 %v4555
  %4622 = vmatpush.bf16.msra.mxu0 %v4551
  %4623 = vmatmul.bf16.gmra.mxu0 %v4421
  %v4624 = vpop.f32.mrf.mxu0
  %v4625 = vadd.f32 0.0, %v4624
  %v4626 = vpop.f32.mrf.mxu0
  %4627 = vdwg.mxu0
  %4628 = vmatpush.bf16.msra.mxu0 %v4580
  %4629 = vmatpush.bf16.msra.mxu0 %v4576
  %4630 = vmatpush.bf16.msra.mxu0 %v4572
  %4631 = vmatpush.bf16.msra.mxu0 %v4568
  %4632 = vmatpush.bf16.msra.mxu0 %v4564
  %4633 = vmatpush.bf16.msra.mxu0 %v4560
  %4634 = vmatpush.bf16.msra.mxu0 %v4556
  %4635 = vmatpush.bf16.msra.mxu0 %v4552
  %4636 = vmatmul.bf16.gmra.mxu0 %v4421
  %v4637 = vpop.f32.mrf.mxu0
  %v4638 = vadd.f32 0.0, %v4637
  %v4639 = vpop.f32.mrf.mxu0
  %4640 = vdwg.mxu0
  %4641 = vmatpush.bf16.msra.mxu0 %v4581
  %4642 = vmatpush.bf16.msra.mxu0 %v4577
  %4643 = vmatpush.bf16.msra.mxu0 %v4573
  %4644 = vmatpush.bf16.msra.mxu0 %v4569
  %4645 = vmatpush.bf16.msra.mxu0 %v4565
  %4646 = vmatpush.bf16.msra.mxu0 %v4561
  %4647 = vmatpush.bf16.msra.mxu0 %v4557
  %4648 = vmatpush.bf16.msra.mxu0 %v4553
  %4649 = vmatmul.bf16.gmra.mxu0 %v4421
  %v4650 = vpop.f32.mrf.mxu0
  %v4651 = vadd.f32 0.0, %v4650
  %v4652 = vpop.f32.mrf.mxu0
  %4653 = vdwg.mxu0
  %4654 = vmatpush.bf16.msra.mxu0 %v4582
  %4655 = vmatpush.bf16.msra.mxu0 %v4578
  %4656 = vmatpush.bf16.msra.mxu0 %v4574
  %4657 = vmatpush.bf16.msra.mxu0 %v4570
  %4658 = vmatpush.bf16.msra.mxu0 %v4566
  %4659 = vmatpush.bf16.msra.mxu0 %v4562
  %4660 = vmatpush.bf16.msra.mxu0 %v4558
  %4661 = vmatpush.bf16.msra.mxu0 %v4554
  %4662 = vmatmul.bf16.gmra.mxu0 %v4421
  %v4663 = vpop.f32.mrf.mxu0
  %v4664 = vadd.f32 0.0, %v4663
  %v4665 = vpop.f32.mrf.mxu0
  %4666 = vdwg.mxu0
  %v4667 = vadd.f32 %v4416, %v4625
  %v4668 = vadd.f32 %v4417, %v4638
  %v4669 = vadd.f32 %v4418, %v4651
  %v4670 = vadd.f32 %v4419, %v4664
  %v4671 = vld [vmem:[#allocation2 + $0x1c] sm:$0x3]
  %v4672 = vpack.c.bf16 %v4671, %v4671
  %s4673 = scalar_lea.vmem %s4, 3584
  %v4674 = vld [vmem:[%s4673] sm:$0xff]
  %v4675 = vld [vmem:[%s4673 + $0x8] sm:$0xff]
  %v4676 = vld [vmem:[%s4673 + $0x10] sm:$0xff]
  %v4677 = vld [vmem:[%s4673 + $0x18] sm:$0xff]
  %v4678 = vld [vmem:[%s4673 + $0x20] sm:$0xff]
  %v4679 = vld [vmem:[%s4673 + $0x28] sm:$0xff]
  %v4680 = vld [vmem:[%s4673 + $0x30] sm:$0xff]
  %v4681 = vld [vmem:[%s4673 + $0x38] sm:$0xff]
  %v4682 = vld [vmem:[%s4673 + $0x40] sm:$0xff]
  %v4683 = vld [vmem:[%s4673 + $0x48] sm:$0xff]
  %v4684 = vld [vmem:[%s4673 + $0x50] sm:$0xff]
  %v4685 = vld [vmem:[%s4673 + $0x58] sm:$0xff]
  %v4686 = vld [vmem:[%s4673 + $0x60] sm:$0xff]
  %v4687 = vld [vmem:[%s4673 + $0x68] sm:$0xff]
  %v4688 = vld [vmem:[%s4673 + $0x70] sm:$0xff]
  %v4689 = vld [vmem:[%s4673 + $0x78] sm:$0xff]
  %v4690 = vld [vmem:[%s4673 + $0x80] sm:$0xff]
  %v4691 = vld [vmem:[%s4673 + $0x88] sm:$0xff]
  %v4692 = vld [vmem:[%s4673 + $0x90] sm:$0xff]
  %v4693 = vld [vmem:[%s4673 + $0x98] sm:$0xff]
  %v4694 = vld [vmem:[%s4673 + $0xa0] sm:$0xff]
  %v4695 = vld [vmem:[%s4673 + $0xa8] sm:$0xff]
  %v4696 = vld [vmem:[%s4673 + $0xb0] sm:$0xff]
  %v4697 = vld [vmem:[%s4673 + $0xb8] sm:$0xff]
  %v4698 = vld [vmem:[%s4673 + $0xc0] sm:$0xff]
  %v4699 = vld [vmem:[%s4673 + $0xc8] sm:$0xff]
  %v4700 = vld [vmem:[%s4673 + $0xd0] sm:$0xff]
  %v4701 = vld [vmem:[%s4673 + $0xd8] sm:$0xff]
  %v4702 = vld [vmem:[%s4673 + $0xe0] sm:$0xff]
  %v4703 = vld [vmem:[%s4673 + $0xe8] sm:$0xff]
  %v4704 = vld [vmem:[%s4673 + $0xf0] sm:$0xff]
  %v4705 = vld [vmem:[%s4673 + $0xf8] sm:$0xff]
  %v4738 = vunpack.c.l.b16 %v4674
  %v4739 = vunpack.c.h.b16 %v4674
  %v4740 = vunpack.c.l.b16 %v4675
  %v4741 = vunpack.c.h.b16 %v4675
  %v4742 = vunpack.c.l.b16 %v4676
  %v4743 = vunpack.c.h.b16 %v4676
  %v4744 = vunpack.c.l.b16 %v4677
  %v4745 = vunpack.c.h.b16 %v4677
  %v4746 = vunpack.c.l.b16 %v4678
  %v4747 = vunpack.c.h.b16 %v4678
  %v4748 = vunpack.c.l.b16 %v4679
  %v4749 = vunpack.c.h.b16 %v4679
  %v4750 = vunpack.c.l.b16 %v4680
  %v4751 = vunpack.c.h.b16 %v4680
  %v4752 = vunpack.c.l.b16 %v4681
  %v4753 = vunpack.c.h.b16 %v4681
  %v4754 = vunpack.c.l.b16 %v4682
  %v4755 = vunpack.c.h.b16 %v4682
  %v4756 = vunpack.c.l.b16 %v4683
  %v4757 = vunpack.c.h.b16 %v4683
  %v4758 = vunpack.c.l.b16 %v4684
  %v4759 = vunpack.c.h.b16 %v4684
  %v4760 = vunpack.c.l.b16 %v4685
  %v4761 = vunpack.c.h.b16 %v4685
  %v4762 = vunpack.c.l.b16 %v4686
  %v4763 = vunpack.c.h.b16 %v4686
  %v4764 = vunpack.c.l.b16 %v4687
  %v4765 = vunpack.c.h.b16 %v4687
  %v4766 = vunpack.c.l.b16 %v4688
  %v4767 = vunpack.c.h.b16 %v4688
  %v4768 = vunpack.c.l.b16 %v4689
  %v4769 = vunpack.c.h.b16 %v4689
  %v4770 = vunpack.c.l.b16 %v4690
  %v4771 = vunpack.c.h.b16 %v4690
  %v4772 = vunpack.c.l.b16 %v4691
  %v4773 = vunpack.c.h.b16 %v4691
  %v4774 = vunpack.c.l.b16 %v4692
  %v4775 = vunpack.c.h.b16 %v4692
  %v4776 = vunpack.c.l.b16 %v4693
  %v4777 = vunpack.c.h.b16 %v4693
  %v4778 = vunpack.c.l.b16 %v4694
  %v4779 = vunpack.c.h.b16 %v4694
  %v4780 = vunpack.c.l.b16 %v4695
  %v4781 = vunpack.c.h.b16 %v4695
  %v4782 = vunpack.c.l.b16 %v4696
  %v4783 = vunpack.c.h.b16 %v4696
  %v4784 = vunpack.c.l.b16 %v4697
  %v4785 = vunpack.c.h.b16 %v4697
  %v4786 = vunpack.c.l.b16 %v4698
  %v4787 = vunpack.c.h.b16 %v4698
  %v4788 = vunpack.c.l.b16 %v4699
  %v4789 = vunpack.c.h.b16 %v4699
  %v4790 = vunpack.c.l.b16 %v4700
  %v4791 = vunpack.c.h.b16 %v4700
  %v4792 = vunpack.c.l.b16 %v4701
  %v4793 = vunpack.c.h.b16 %v4701
  %v4794 = vunpack.c.l.b16 %v4702
  %v4795 = vunpack.c.h.b16 %v4702
  %v4796 = vunpack.c.l.b16 %v4703
  %v4797 = vunpack.c.h.b16 %v4703
  %v4798 = vunpack.c.l.b16 %v4704
  %v4799 = vunpack.c.h.b16 %v4704
  %v4800 = vunpack.c.l.b16 %v4705
  %v4801 = vunpack.c.h.b16 %v4705
  %v4802 = vpack.c.b16 %v4742, %v4738
  %v4803 = vpack.c.b16 %v4743, %v4739
  %v4804 = vpack.c.b16 %v4744, %v4740
  %v4805 = vpack.c.b16 %v4745, %v4741
  %v4806 = vpack.c.b16 %v4750, %v4746
  %v4807 = vpack.c.b16 %v4751, %v4747
  %v4808 = vpack.c.b16 %v4752, %v4748
  %v4809 = vpack.c.b16 %v4753, %v4749
  %v4810 = vpack.c.b16 %v4758, %v4754
  %v4811 = vpack.c.b16 %v4759, %v4755
  %v4812 = vpack.c.b16 %v4760, %v4756
  %v4813 = vpack.c.b16 %v4761, %v4757
  %v4814 = vpack.c.b16 %v4766, %v4762
  %v4815 = vpack.c.b16 %v4767, %v4763
  %v4816 = vpack.c.b16 %v4768, %v4764
  %v4817 = vpack.c.b16 %v4769, %v4765
  %v4818 = vpack.c.b16 %v4774, %v4770
  %v4819 = vpack.c.b16 %v4775, %v4771
  %v4820 = vpack.c.b16 %v4776, %v4772
  %v4821 = vpack.c.b16 %v4777, %v4773
  %v4822 = vpack.c.b16 %v4782, %v4778
  %v4823 = vpack.c.b16 %v4783, %v4779
  %v4824 = vpack.c.b16 %v4784, %v4780
  %v4825 = vpack.c.b16 %v4785, %v4781
  %v4826 = vpack.c.b16 %v4790, %v4786
  %v4827 = vpack.c.b16 %v4791, %v4787
  %v4828 = vpack.c.b16 %v4792, %v4788
  %v4829 = vpack.c.b16 %v4793, %v4789
  %v4830 = vpack.c.b16 %v4798, %v4794
  %v4831 = vpack.c.b16 %v4799, %v4795
  %v4832 = vpack.c.b16 %v4800, %v4796
  %v4833 = vpack.c.b16 %v4801, %v4797
  %4866 = vmatpush.bf16.msra.mxu0 %v4830
  %4867 = vmatpush.bf16.msra.mxu0 %v4826
  %4868 = vmatpush.bf16.msra.mxu0 %v4822
  %4869 = vmatpush.bf16.msra.mxu0 %v4818
  %4870 = vmatpush.bf16.msra.mxu0 %v4814
  %4871 = vmatpush.bf16.msra.mxu0 %v4810
  %4872 = vmatpush.bf16.msra.mxu0 %v4806
  %4873 = vmatpush.bf16.msra.mxu0 %v4802
  %4874 = vmatmul.bf16.gmra.mxu0 %v4672
  %v4875 = vpop.f32.mrf.mxu0
  %v4876 = vadd.f32 0.0, %v4875
  %v4877 = vpop.f32.mrf.mxu0
  %4878 = vdwg.mxu0
  %4879 = vmatpush.bf16.msra.mxu0 %v4831
  %4880 = vmatpush.bf16.msra.mxu0 %v4827
  %4881 = vmatpush.bf16.msra.mxu0 %v4823
  %4882 = vmatpush.bf16.msra.mxu0 %v4819
  %4883 = vmatpush.bf16.msra.mxu0 %v4815
  %4884 = vmatpush.bf16.msra.mxu0 %v4811
  %4885 = vmatpush.bf16.msra.mxu0 %v4807
  %4886 = vmatpush.bf16.msra.mxu0 %v4803
  %4887 = vmatmul.bf16.gmra.mxu0 %v4672
  %v4888 = vpop.f32.mrf.mxu0
  %v4889 = vadd.f32 0.0, %v4888
  %v4890 = vpop.f32.mrf.mxu0
  %4891 = vdwg.mxu0
  %4892 = vmatpush.bf16.msra.mxu0 %v4832
  %4893 = vmatpush.bf16.msra.mxu0 %v4828
  %4894 = vmatpush.bf16.msra.mxu0 %v4824
  %4895 = vmatpush.bf16.msra.mxu0 %v4820
  %4896 = vmatpush.bf16.msra.mxu0 %v4816
  %4897 = vmatpush.bf16.msra.mxu0 %v4812
  %4898 = vmatpush.bf16.msra.mxu0 %v4808
  %4899 = vmatpush.bf16.msra.mxu0 %v4804
  %4900 = vmatmul.bf16.gmra.mxu0 %v4672
  %v4901 = vpop.f32.mrf.mxu0
  %v4902 = vadd.f32 0.0, %v4901
  %v4903 = vpop.f32.mrf.mxu0
  %4904 = vdwg.mxu0
  %4905 = vmatpush.bf16.msra.mxu0 %v4833
  %4906 = vmatpush.bf16.msra.mxu0 %v4829
  %4907 = vmatpush.bf16.msra.mxu0 %v4825
  %4908 = vmatpush.bf16.msra.mxu0 %v4821
  %4909 = vmatpush.bf16.msra.mxu0 %v4817
  %4910 = vmatpush.bf16.msra.mxu0 %v4813
  %4911 = vmatpush.bf16.msra.mxu0 %v4809
  %4912 = vmatpush.bf16.msra.mxu0 %v4805
  %4913 = vmatmul.bf16.gmra.mxu0 %v4672
  %v4914 = vpop.f32.mrf.mxu0
  %v4915 = vadd.f32 0.0, %v4914
  %v4916 = vpop.f32.mrf.mxu0
  %4917 = vdwg.mxu0
  %v4918 = vadd.f32 %v4667, %v4876
  %v4919 = vadd.f32 %v4668, %v4889
  %v4920 = vadd.f32 %v4669, %v4902
  %v4921 = vadd.f32 %v4670, %v4915
  %v4922 = vld [vmem:[#allocation2 + $0x1e] sm:$0x3]
  %v4923 = vpack.c.bf16 %v4922, %v4922
  %s4924 = scalar_lea.vmem %s4, 3840
  %v4925 = vld [vmem:[%s4924] sm:$0xff]
  %v4926 = vld [vmem:[%s4924 + $0x8] sm:$0xff]
  %v4927 = vld [vmem:[%s4924 + $0x10] sm:$0xff]
  %v4928 = vld [vmem:[%s4924 + $0x18] sm:$0xff]
  %v4929 = vld [vmem:[%s4924 + $0x20] sm:$0xff]
  %v4930 = vld [vmem:[%s4924 + $0x28] sm:$0xff]
  %v4931 = vld [vmem:[%s4924 + $0x30] sm:$0xff]
  %v4932 = vld [vmem:[%s4924 + $0x38] sm:$0xff]
  %v4933 = vld [vmem:[%s4924 + $0x40] sm:$0xff]
  %v4934 = vld [vmem:[%s4924 + $0x48] sm:$0xff]
  %v4935 = vld [vmem:[%s4924 + $0x50] sm:$0xff]
  %v4936 = vld [vmem:[%s4924 + $0x58] sm:$0xff]
  %v4937 = vld [vmem:[%s4924 + $0x60] sm:$0xff]
  %v4938 = vld [vmem:[%s4924 + $0x68] sm:$0xff]
  %v4939 = vld [vmem:[%s4924 + $0x70] sm:$0xff]
  %v4940 = vld [vmem:[%s4924 + $0x78] sm:$0xff]
  %v4941 = vld [vmem:[%s4924 + $0x80] sm:$0xff]
  %v4942 = vld [vmem:[%s4924 + $0x88] sm:$0xff]
  %v4943 = vld [vmem:[%s4924 + $0x90] sm:$0xff]
  %v4944 = vld [vmem:[%s4924 + $0x98] sm:$0xff]
  %v4945 = vld [vmem:[%s4924 + $0xa0] sm:$0xff]
  %v4946 = vld [vmem:[%s4924 + $0xa8] sm:$0xff]
  %v4947 = vld [vmem:[%s4924 + $0xb0] sm:$0xff]
  %v4948 = vld [vmem:[%s4924 + $0xb8] sm:$0xff]
  %v4949 = vld [vmem:[%s4924 + $0xc0] sm:$0xff]
  %v4950 = vld [vmem:[%s4924 + $0xc8] sm:$0xff]
  %v4951 = vld [vmem:[%s4924 + $0xd0] sm:$0xff]
  %v4952 = vld [vmem:[%s4924 + $0xd8] sm:$0xff]
  %v4953 = vld [vmem:[%s4924 + $0xe0] sm:$0xff]
  %v4954 = vld [vmem:[%s4924 + $0xe8] sm:$0xff]
  %v4955 = vld [vmem:[%s4924 + $0xf0] sm:$0xff]
  %v4956 = vld [vmem:[%s4924 + $0xf8] sm:$0xff]
  %v4989 = vunpack.c.l.b16 %v4925
  %v4990 = vunpack.c.h.b16 %v4925
  %v4991 = vunpack.c.l.b16 %v4926
  %v4992 = vunpack.c.h.b16 %v4926
  %v4993 = vunpack.c.l.b16 %v4927
  %v4994 = vunpack.c.h.b16 %v4927
  %v4995 = vunpack.c.l.b16 %v4928
  %v4996 = vunpack.c.h.b16 %v4928
  %v4997 = vunpack.c.l.b16 %v4929
  %v4998 = vunpack.c.h.b16 %v4929
  %v4999 = vunpack.c.l.b16 %v4930
  %v5000 = vunpack.c.h.b16 %v4930
  %v5001 = vunpack.c.l.b16 %v4931
  %v5002 = vunpack.c.h.b16 %v4931
  %v5003 = vunpack.c.l.b16 %v4932
  %v5004 = vunpack.c.h.b16 %v4932
  %v5005 = vunpack.c.l.b16 %v4933
  %v5006 = vunpack.c.h.b16 %v4933
  %v5007 = vunpack.c.l.b16 %v4934
  %v5008 = vunpack.c.h.b16 %v4934
  %v5009 = vunpack.c.l.b16 %v4935
  %v5010 = vunpack.c.h.b16 %v4935
  %v5011 = vunpack.c.l.b16 %v4936
  %v5012 = vunpack.c.h.b16 %v4936
  %v5013 = vunpack.c.l.b16 %v4937
  %v5014 = vunpack.c.h.b16 %v4937
  %v5015 = vunpack.c.l.b16 %v4938
  %v5016 = vunpack.c.h.b16 %v4938
  %v5017 = vunpack.c.l.b16 %v4939
  %v5018 = vunpack.c.h.b16 %v4939
  %v5019 = vunpack.c.l.b16 %v4940
  %v5020 = vunpack.c.h.b16 %v4940
  %v5021 = vunpack.c.l.b16 %v4941
  %v5022 = vunpack.c.h.b16 %v4941
  %v5023 = vunpack.c.l.b16 %v4942
  %v5024 = vunpack.c.h.b16 %v4942
  %v5025 = vunpack.c.l.b16 %v4943
  %v5026 = vunpack.c.h.b16 %v4943
  %v5027 = vunpack.c.l.b16 %v4944
  %v5028 = vunpack.c.h.b16 %v4944
  %v5029 = vunpack.c.l.b16 %v4945
  %v5030 = vunpack.c.h.b16 %v4945
  %v5031 = vunpack.c.l.b16 %v4946
  %v5032 = vunpack.c.h.b16 %v4946
  %v5033 = vunpack.c.l.b16 %v4947
  %v5034 = vunpack.c.h.b16 %v4947
  %v5035 = vunpack.c.l.b16 %v4948
  %v5036 = vunpack.c.h.b16 %v4948
  %v5037 = vunpack.c.l.b16 %v4949
  %v5038 = vunpack.c.h.b16 %v4949
  %v5039 = vunpack.c.l.b16 %v4950
  %v5040 = vunpack.c.h.b16 %v4950
  %v5041 = vunpack.c.l.b16 %v4951
  %v5042 = vunpack.c.h.b16 %v4951
  %v5043 = vunpack.c.l.b16 %v4952
  %v5044 = vunpack.c.h.b16 %v4952
  %v5045 = vunpack.c.l.b16 %v4953
  %v5046 = vunpack.c.h.b16 %v4953
  %v5047 = vunpack.c.l.b16 %v4954
  %v5048 = vunpack.c.h.b16 %v4954
  %v5049 = vunpack.c.l.b16 %v4955
  %v5050 = vunpack.c.h.b16 %v4955
  %v5051 = vunpack.c.l.b16 %v4956
  %v5052 = vunpack.c.h.b16 %v4956
  %v5053 = vpack.c.b16 %v4993, %v4989
  %v5054 = vpack.c.b16 %v4994, %v4990
  %v5055 = vpack.c.b16 %v4995, %v4991
  %v5056 = vpack.c.b16 %v4996, %v4992
  %v5057 = vpack.c.b16 %v5001, %v4997
  %v5058 = vpack.c.b16 %v5002, %v4998
  %v5059 = vpack.c.b16 %v5003, %v4999
  %v5060 = vpack.c.b16 %v5004, %v5000
  %v5061 = vpack.c.b16 %v5009, %v5005
  %v5062 = vpack.c.b16 %v5010, %v5006
  %v5063 = vpack.c.b16 %v5011, %v5007
  %v5064 = vpack.c.b16 %v5012, %v5008
  %v5065 = vpack.c.b16 %v5017, %v5013
  %v5066 = vpack.c.b16 %v5018, %v5014
  %v5067 = vpack.c.b16 %v5019, %v5015
  %v5068 = vpack.c.b16 %v5020, %v5016
  %v5069 = vpack.c.b16 %v5025, %v5021
  %v5070 = vpack.c.b16 %v5026, %v5022
  %v5071 = vpack.c.b16 %v5027, %v5023
  %v5072 = vpack.c.b16 %v5028, %v5024
  %v5073 = vpack.c.b16 %v5033, %v5029
  %v5074 = vpack.c.b16 %v5034, %v5030
  %v5075 = vpack.c.b16 %v5035, %v5031
  %v5076 = vpack.c.b16 %v5036, %v5032
  %v5077 = vpack.c.b16 %v5041, %v5037
  %v5078 = vpack.c.b16 %v5042, %v5038
  %v5079 = vpack.c.b16 %v5043, %v5039
  %v5080 = vpack.c.b16 %v5044, %v5040
  %v5081 = vpack.c.b16 %v5049, %v5045
  %v5082 = vpack.c.b16 %v5050, %v5046
  %v5083 = vpack.c.b16 %v5051, %v5047
  %v5084 = vpack.c.b16 %v5052, %v5048
  %5117 = vmatpush.bf16.msra.mxu0 %v5081
  %5118 = vmatpush.bf16.msra.mxu0 %v5077
  %5119 = vmatpush.bf16.msra.mxu0 %v5073
  %5120 = vmatpush.bf16.msra.mxu0 %v5069
  %5121 = vmatpush.bf16.msra.mxu0 %v5065
  %5122 = vmatpush.bf16.msra.mxu0 %v5061
  %5123 = vmatpush.bf16.msra.mxu0 %v5057
  %5124 = vmatpush.bf16.msra.mxu0 %v5053
  %5125 = vmatmul.bf16.gmra.mxu0 %v4923
  %v5126 = vpop.f32.mrf.mxu0
  %v5127 = vadd.f32 0.0, %v5126
  %v5128 = vpop.f32.mrf.mxu0
  %5129 = vdwg.mxu0
  %5130 = vmatpush.bf16.msra.mxu0 %v5082
  %5131 = vmatpush.bf16.msra.mxu0 %v5078
  %5132 = vmatpush.bf16.msra.mxu0 %v5074
  %5133 = vmatpush.bf16.msra.mxu0 %v5070
  %5134 = vmatpush.bf16.msra.mxu0 %v5066
  %5135 = vmatpush.bf16.msra.mxu0 %v5062
  %5136 = vmatpush.bf16.msra.mxu0 %v5058
  %5137 = vmatpush.bf16.msra.mxu0 %v5054
  %5138 = vmatmul.bf16.gmra.mxu0 %v4923
  %v5139 = vpop.f32.mrf.mxu0
  %v5140 = vadd.f32 0.0, %v5139
  %v5141 = vpop.f32.mrf.mxu0
  %5142 = vdwg.mxu0
  %5143 = vmatpush.bf16.msra.mxu0 %v5083
  %5144 = vmatpush.bf16.msra.mxu0 %v5079
  %5145 = vmatpush.bf16.msra.mxu0 %v5075
  %5146 = vmatpush.bf16.msra.mxu0 %v5071
  %5147 = vmatpush.bf16.msra.mxu0 %v5067
  %5148 = vmatpush.bf16.msra.mxu0 %v5063
  %5149 = vmatpush.bf16.msra.mxu0 %v5059
  %5150 = vmatpush.bf16.msra.mxu0 %v5055
  %5151 = vmatmul.bf16.gmra.mxu0 %v4923
  %v5152 = vpop.f32.mrf.mxu0
  %v5153 = vadd.f32 0.0, %v5152
  %v5154 = vpop.f32.mrf.mxu0
  %5155 = vdwg.mxu0
  %5156 = vmatpush.bf16.msra.mxu0 %v5084
  %5157 = vmatpush.bf16.msra.mxu0 %v5080
  %5158 = vmatpush.bf16.msra.mxu0 %v5076
  %5159 = vmatpush.bf16.msra.mxu0 %v5072
  %5160 = vmatpush.bf16.msra.mxu0 %v5068
  %5161 = vmatpush.bf16.msra.mxu0 %v5064
  %5162 = vmatpush.bf16.msra.mxu0 %v5060
  %5163 = vmatpush.bf16.msra.mxu0 %v5056
  %5164 = vmatmul.bf16.gmra.mxu0 %v4923
  %v5165 = vpop.f32.mrf.mxu0
  %v5166 = vadd.f32 0.0, %v5165
  %v5167 = vpop.f32.mrf.mxu0
  %5168 = vdwg.mxu0
  %v5169 = vadd.f32 %v4918, %v5127
  %v5170 = vadd.f32 %v4919, %v5140
  %v5171 = vadd.f32 %v4920, %v5153
  %v5172 = vadd.f32 %v4921, %v5166
  %v5173 = vld [vmem:[%s5] sm:$0xf]
  %v5175 = vperm.slane %v5173, 0
  %v5176 = vperm.slane %v5173, 1
  %v5177 = vperm.slane %v5173, 2
  %v5178 = vperm.slane %v5173, 3
  %v5183 = vadd.f32 %v5169, %v5175
  %v5184 = vadd.f32 %v5170, %v5176
  %v5185 = vadd.f32 %v5171, %v5177
  %v5186 = vadd.f32 %v5172, %v5178
  %vm5187 = vcmask 1041408
  %v5188 = vsel %vm5187, %v5183, 0.0
  %v5189 = vrot.slane %v5188, 4
  %v5190 = vadd.f32 %v5188, %v5189
  %v5191 = vrot.slane %v5190, 2
  %v5192 = vadd.f32 %v5190, %v5191
  %v5193 = vrot.slane %v5192, 1
  %v5194 = vadd.f32 %v5192, %v5193
  %v5195 = vsel %vm5187, %v5184, 0.0
  %v5196 = vrot.slane %v5195, 4
  %v5197 = vadd.f32 %v5195, %v5196
  %v5198 = vrot.slane %v5197, 2
  %v5199 = vadd.f32 %v5197, %v5198
  %v5200 = vrot.slane %v5199, 1
  %v5201 = vadd.f32 %v5199, %v5200
  %v5202 = vsel %vm5187, %v5185, 0.0
  %v5203 = vrot.slane %v5202, 4
  %v5204 = vadd.f32 %v5202, %v5203
  %v5205 = vrot.slane %v5204, 2
  %v5206 = vadd.f32 %v5204, %v5205
  %v5207 = vrot.slane %v5206, 1
  %v5208 = vadd.f32 %v5206, %v5207
  %v5209 = vsel %vm5187, %v5186, 0.0
  %v5210 = vrot.slane %v5209, 4
  %v5211 = vadd.f32 %v5209, %v5210
  %v5212 = vrot.slane %v5211, 2
  %v5213 = vadd.f32 %v5211, %v5212
  %v5214 = vrot.slane %v5213, 1
  %v5215 = vadd.f32 %v5213, %v5214
  %v5216 = vmul.f32 %v5183, %v5183
  %v5217 = vmul.f32 %v5184, %v5184
  %v5218 = vmul.f32 %v5185, %v5185
  %v5219 = vmul.f32 %v5186, %v5186
  %v5220 = vsel %vm5187, %v5216, 0.0
  %v5221 = vrot.slane %v5220, 4
  %v5222 = vadd.f32 %v5220, %v5221
  %v5223 = vrot.slane %v5222, 2
  %v5224 = vadd.f32 %v5222, %v5223
  %v5225 = vrot.slane %v5224, 1
  %v5226 = vadd.f32 %v5224, %v5225
  %v5227 = vsel %vm5187, %v5217, 0.0
  %v5228 = vrot.slane %v5227, 4
  %v5229 = vadd.f32 %v5227, %v5228
  %v5230 = vrot.slane %v5229, 2
  %v5231 = vadd.f32 %v5229, %v5230
  %v5232 = vrot.slane %v5231, 1
  %v5233 = vadd.f32 %v5231, %v5232
  %v5234 = vsel %vm5187, %v5218, 0.0
  %v5235 = vrot.slane %v5234, 4
  %v5236 = vadd.f32 %v5234, %v5235
  %v5237 = vrot.slane %v5236, 2
  %v5238 = vadd.f32 %v5236, %v5237
  %v5239 = vrot.slane %v5238, 1
  %v5240 = vadd.f32 %v5238, %v5239
  %v5241 = vsel %vm5187, %v5219, 0.0
  %v5242 = vrot.slane %v5241, 4
  %v5243 = vadd.f32 %v5241, %v5242
  %v5244 = vrot.slane %v5243, 2
  %v5245 = vadd.f32 %v5243, %v5244
  %v5246 = vrot.slane %v5245, 1
  %v5247 = vadd.f32 %v5245, %v5246
  %v5248 = vmul.f32 %v5194, 0.5
  %v5249 = vmul.f32 %v5201, 0.5
  %v5250 = vmul.f32 %v5208, 0.5
  %v5251 = vmul.f32 %v5215, 0.5
  %v5252 = vmul.f32 %v5226, 0.5
  %v5253 = vmul.f32 %v5233, 0.5
  %v5254 = vmul.f32 %v5240, 0.5
  %v5255 = vmul.f32 %v5247, 0.5
  %v5256 = vmul.f32 %v5248, %v5248
  %v5257 = vmul.f32 %v5249, %v5249
  %v5258 = vmul.f32 %v5250, %v5250
  %v5259 = vmul.f32 %v5251, %v5251
  %v5260 = vsub.f32 %v5252, %v5256
  %v5261 = vsub.f32 %v5253, %v5257
  %v5262 = vsub.f32 %v5254, %v5258
  %v5263 = vsub.f32 %v5255, %v5259
  %v5264 = vsub.f32 %v5183, %v5248
  %v5265 = vsub.f32 %v5184, %v5249
  %v5266 = vsub.f32 %v5185, %v5250
  %v5267 = vsub.f32 %v5186, %v5251
  %v5268 = vadd.f32 %v5260, 1e-05
  %v5269 = vadd.f32 %v5261, 1e-05
  %v5270 = vadd.f32 %v5262, 1e-05
  %v5271 = vadd.f32 %v5263, 1e-05
  %v5272 = vrsqrt.pop %v5268
  %v5273 = vmul.f32 %v5272, %v5268
  %v5274 = vmul.f32 %v5273, %v5272
  %v5275 = vmul.f32 0.5, %v5274
  %v5276 = vsub.f32 1.5, %v5275
  %v5277 = vmul.f32 %v5272, %v5276
  %vm5278 = vweird.f32 %v5268
  %vm5279 = vweird.f32 %v5272
  %vm5280 = vmor %vm5278, %vm5279
  %v5281 = vsel %vm5280, %v5272, %v5277
  %v5282 = vrsqrt.pop %v5269
  %v5283 = vmul.f32 %v5282, %v5269
  %v5284 = vmul.f32 %v5283, %v5282
  %v5285 = vmul.f32 0.5, %v5284
  %v5286 = vsub.f32 1.5, %v5285
  %v5287 = vmul.f32 %v5282, %v5286
  %vm5288 = vweird.f32 %v5269
  %vm5289 = vweird.f32 %v5282
  %vm5290 = vmor %vm5288, %vm5289
  %v5291 = vsel %vm5290, %v5282, %v5287
  %v5292 = vrsqrt.pop %v5270
  %v5293 = vmul.f32 %v5292, %v5270
  %v5294 = vmul.f32 %v5293, %v5292
  %v5295 = vmul.f32 0.5, %v5294
  %v5296 = vsub.f32 1.5, %v5295
  %v5297 = vmul.f32 %v5292, %v5296
  %vm5298 = vweird.f32 %v5270
  %vm5299 = vweird.f32 %v5292
  %vm5300 = vmor %vm5298, %vm5299
  %v5301 = vsel %vm5300, %v5292, %v5297
  %v5302 = vrsqrt.pop %v5271
  %v5303 = vmul.f32 %v5302, %v5271
  %v5304 = vmul.f32 %v5303, %v5302
  %v5305 = vmul.f32 0.5, %v5304
  %v5306 = vsub.f32 1.5, %v5305
  %v5307 = vmul.f32 %v5302, %v5306
  %vm5308 = vweird.f32 %v5271
  %vm5309 = vweird.f32 %v5302
  %vm5310 = vmor %vm5308, %vm5309
  %v5311 = vsel %vm5310, %v5302, %v5307
  %v5312 = vmul.f32 %v5264, %v5281
  %v5313 = vmul.f32 %v5265, %v5291
  %v5314 = vmul.f32 %v5266, %v5301
  %v5315 = vmul.f32 %v5267, %v5311
  %vm5316 = vcmp.ge.f32.partialorder %v5312, 0.0
  %vm5317 = vcmp.ge.f32.partialorder %v5313, 0.0
  %vm5318 = vcmp.ge.f32.partialorder %v5314, 0.0
  %vm5319 = vcmp.ge.f32.partialorder %v5315, 0.0
  %v5320 = vmul.f32 %v5312, 0.3
  %v5321 = vmul.f32 %v5313, 0.3
  %v5322 = vmul.f32 %v5314, 0.3
  %v5323 = vmul.f32 %v5315, 0.3
  %v5324 = vsel %vm5316, %v5312, %v5320
  %v5325 = vsel %vm5317, %v5313, %v5321
  %v5326 = vsel %vm5318, %v5314, %v5322
  %v5327 = vsel %vm5319, %v5315, %v5323
  %v5328 = vld [vmem:[%s6] sm:$0xf]
  %v5330 = vperm.slane %v5328, 0
  %v5331 = vperm.slane %v5328, 1
  %v5332 = vperm.slane %v5328, 2
  %v5333 = vperm.slane %v5328, 3
  %v5338 = vmul.f32 %v5324, %v5330
  %v5339 = vmul.f32 %v5325, %v5331
  %v5340 = vmul.f32 %v5326, %v5332
  %v5341 = vmul.f32 %v5327, %v5333
  %v5342 = vsel %vm5187, %v5338, 0.0
  %v5343 = vsel %vm5187, %v5339, 0.0
  %v5344 = vadd.f32 %v5342, %v5343
  %v5345 = vsel %vm5187, %v5340, 0.0
  %v5346 = vadd.f32 %v5344, %v5345
  %v5347 = vsel %vm5187, %v5341, 0.0
  %v5348 = vadd.f32 %v5346, %v5347
  %5349 = vadd.xlane.f32.xlu0 %v5348
  %v5350 = vpop.xlane.xlu0 %5349
  %v5351 = vld [vmem:[#allocation3] sm:$0x1]
  %v5353 = vperm.slane %v5351, 0
  %v5355 = vadd.f32 %v5350, %v5353
  %v5356 = vmul.f32 %v5355, 0.5
  %v5357 = vtanh.pop %v5356
  %v5358 = vadd.f32 %v5357, 1.0
  %v5359 = vmul.f32 %v5358, 0.5
  %vm5360 = vcmask 1024
  %5361 = vst.msk [vmem:[%s8] sm:$0x3] %vm5360, %v5359
  // Predicated region
  $region34: #{discriminator_forward.1} parent=0 // pred_check
    _
  $region35: #{discriminator_forward.1} parent=0 // pred_check_branch
    %5363 = sbr.rel (0) target = $region37
  $region36: #{discriminator_forward.1} parent=0 // pred_region
    _
  $region37: #{discriminator_forward.1} parent=0 // pred_fallthru
    _
  // Predicated region
  $region38: #{discriminator_forward.1} parent=0 // pred_check
    _
  $region39: #{discriminator_forward.1} parent=0 // pred_check_branch
    %5365 = sbr.rel (0) target = $region41
  $region40: #{discriminator_forward.1} parent=0 // pred_region
    _
  $region41: #{discriminator_forward.1} parent=0 // pred_fallthru
    _

</llo_original>
